<compile_context>
chip_gen: v7x
topology: tpu7x:2x2x1
jax: 0.10.0
libtpu: 0.0.40
codegen_flags: <defaults>
</compile_context>

<pallas_src>
import math
import functools

import jax
import jax.numpy as jnp
from jax import lax
from jax.experimental import pallas as pl
from jax.experimental.pallas import tpu as pltpu

NEG_INF = -1e30
LN_EPS = 1e-5
ACT_DTYPE = jnp.bfloat16               # activation / matmul-input dtype (f32 accumulation)


# ----------------- generation-aware VMEM limit & tile targets -----------------

def _vmem_capacity_bytes():
    try:
        info = pltpu.get_tpu_info()
        cap = getattr(info, "vmem_capacity_bytes", None)
        if cap:
            return int(cap)
    except Exception:
        pass
    try:
        kind = jax.devices()[0].device_kind.lower()
    except Exception:
        kind = ""
    if "v5" in kind or "v6" in kind:
        return 128 * 1024 * 1024
    return 64 * 1024 * 1024            # conservative default (v7x physical VMEM)


_VMEM_CAP = _vmem_capacity_bytes()
if _VMEM_CAP >= 96 * 1024 * 1024:      # v5e / v6e: 128 MiB VMEM -> bigger tiles, higher limit
    VMEM_LIMIT = 100 * 1024 * 1024
    TM_TGT, TN_TGT, TK_TGT = 512, 512, 1024
else:                                   # v7x: 64 MiB physical VMEM
    VMEM_LIMIT = 48 * 1024 * 1024
    TM_TGT, TN_TGT, TK_TGT = 256, 256, 512


def _pick_tile(n, target, mult):
    """Largest divisor of n that is a multiple of `mult` and <= target, else n (full dim)."""
    # TODO(synk): for dims with no nice divisor (e.g. a raw ~50k vocab) pad up front to a
    # multiple of 256 and use pl.cdiv grids instead of falling back to the full dimension.
    if n <= target:
        return n
    t = (target // mult) * mult
    while t >= mult:
        if n % t == 0:
            return t
        t -= mult
    return n


# ----------------------------- Pallas kernels ------------------------------

def _fused_linear_kernel(*refs, n_out, has_bias):
    # refs: x, w_0..w_{n-1}, [b_0..b_{n-1}], o_0..o_{n-1}, acc_0..acc_{n-1}
    x_ref = refs[0]
    w_refs = refs[1:1 + n_out]
    pos = 1 + n_out
    if has_bias:
        b_refs = refs[pos:pos + n_out]
        pos += n_out
    else:
        b_refs = None
    o_refs = refs[pos:pos + n_out]
    acc_refs = refs[pos + n_out:]

    @pl.when(pl.program_id(2) == 0)
    def _():
        for a in acc_refs:
            a[...] = jnp.zeros_like(a)

    x = x_ref[...]
    for w, a in zip(w_refs, acc_refs):
        a[...] += jnp.dot(x, w[...], preferred_element_type=jnp.float32)

    @pl.when(pl.program_id(2) == pl.num_programs(2) - 1)
    def _():
        for idx in range(n_out):
            y = acc_refs[idx][...]
            if has_bias:
                y = y + b_refs[idx][...]
            o_refs[idx][...] = y.astype(o_refs[idx].dtype)


def _flash_attn_kernel(q_ref, k_ref, v_ref, kp_ref, o_ref, m_ref, l_ref, acc_ref,
                       *, nhead, head_dim, scale, causal):
    # grid = (batch, q_block, k_block); online softmax over the k_block (arbitrary) axis.
    ki = pl.program_id(2)
    tq = q_ref.shape[1]
    tk = k_ref.shape[1]

    @pl.when(ki == 0)
    def _():
        m_ref[...] = jnp.full(m_ref.shape, -jnp.inf, m_ref.dtype)
        l_ref[...] = jnp.zeros_like(l_ref)
        acc_ref[...] = jnp.zeros_like(acc_ref)

    q = (q_ref[0].astype(jnp.float32) * scale).astype(ACT_DTYPE)   # (tq, D), scale folded in
    k = k_ref[0]                                                   # (tk, D) bf16
    v = v_ref[0]                                                   # (tk, D) bf16

    # additive mask: key padding (from (1, tk) vector) + optional causal (built in-kernel)
    mask = jnp.broadcast_to(kp_ref[0], (tq, tk))                   # (tq, tk) f32
    if causal:
        q_off = pl.program_id(1) * tq
        k_off = ki * tk
        qi = q_off + lax.broadcasted_iota(jnp.int32, (tq, tk), 0)
        kj = k_off + lax.broadcasted_iota(jnp.int32, (tq, tk), 1)
        mask = jnp.where(kj > qi, NEG_INF, mask)

    # TODO(synk): for small head_dim, a head-batched (H, tq, dh) contraction would fill the
    # MXU better than per-head dh-wide slices; kept per-head here for lowering robustness.
    for h in range(nhead):                                         # static unroll over heads
        sl = slice(h * head_dim, (h + 1) * head_dim)
        s = lax.dot_general(q[:, sl], k[:, sl], (((1,), (1,)), ((), ())),
                            preferred_element_type=jnp.float32)    # (tq, tk)
        s = s + mask
        m_prev = m_ref[h]
        m_new = jnp.maximum(m_prev, jnp.max(s, axis=-1, keepdims=True))
        alpha = jnp.exp(m_prev - m_new)
        p = jnp.exp(s - m_new)
        l_ref[h] = alpha * l_ref[h] + jnp.sum(p, axis=-1, keepdims=True)
        acc_ref[h] = alpha * acc_ref[h] + jnp.dot(
            p.astype(ACT_DTYPE), v[:, sl], preferred_element_type=jnp.float32)
        m_ref[h] = m_new

    @pl.when(ki == pl.num_programs(2) - 1)
    def _():
        for h in range(nhead):
            sl = slice(h * head_dim, (h + 1) * head_dim)
            inv = pl.reciprocal(l_ref[h], approx=True)
            o_ref[0, :, sl] = (acc_ref[h] * inv).astype(o_ref.dtype)   # direct per-head store


def _outproj_resid_ln_kernel(a_ref, w_ref, b_ref, r_ref, g_ref, bb_ref, o_ref):
    # LayerNorm(resid + (a @ Wo + bo))   -- fused attention out-projection epilogue
    y = jnp.dot(a_ref[...], w_ref[...], preferred_element_type=jnp.float32) + b_ref[...]
    z = y + r_ref[...].astype(jnp.float32)
    mean = jnp.mean(z, axis=-1, keepdims=True)
    var = jnp.mean((z - mean) ** 2, axis=-1, keepdims=True)
    inv = lax.rsqrt(var + LN_EPS)
    o_ref[...] = ((z - mean) * inv * g_ref[...] + bb_ref[...]).astype(o_ref.dtype)


def _ffn_resid_ln_kernel(x_ref, w1_ref, b1_ref, w2_ref, b2_ref, g_ref, bb_ref, o_ref, acc_ref):
    # grid = (m_block, f_block); acc += relu(x @ W1_blk + b1_blk) @ W2_blk over f blocks,
    # residual + bias + LayerNorm fused into the last-step finalize.
    @pl.when(pl.program_id(1) == 0)
    def _():
        acc_ref[...] = jnp.zeros_like(acc_ref)

    x = x_ref[...]
    h = jnp.dot(x, w1_ref[...], preferred_element_type=jnp.float32) + b1_ref[...]
    h = jnp.maximum(h, 0.0)
    acc_ref[...] += jnp.dot(h.astype(w2_ref.dtype), w2_ref[...],
                            preferred_element_type=jnp.float32)

    @pl.when(pl.program_id(1) == pl.num_programs(1) - 1)
    def _():
        z = acc_ref[...] + b2_ref[...] + x.astype(jnp.float32)
        mean = jnp.mean(z, axis=-1, keepdims=True)
        var = jnp.mean((z - mean) ** 2, axis=-1, keepdims=True)
        inv = lax.rsqrt(var + LN_EPS)
        o_ref[...] = ((z - mean) * inv * g_ref[...] + bb_ref[...]).astype(o_ref.dtype)


def _layernorm_kernel(x_ref, g_ref, b_ref, o_ref):
    x = x_ref[...].astype(jnp.float32)
    mean = jnp.mean(x, axis=-1, keepdims=True)
    var = jnp.mean((x - mean) ** 2, axis=-1, keepdims=True)
    inv = lax.rsqrt(var + LN_EPS)
    o_ref[...] = ((x - mean) * inv * g_ref[...] + b_ref[...]).astype(o_ref.dtype)


# --------------------------- Pallas call wrappers ---------------------------

def fused_linear(x, weights, biases=None, out_dtype=ACT_DTYPE):
    """x: (M, K) bf16; weights: list of (K, N) bf16 (same N); biases: list of (N,) f32 or None.
    One tiled (M, N, K)-grid matmul emitting len(weights) separate (M, N) outputs."""
    m, k = x.shape
    n = weights[0].shape[1]
    n_out = len(weights)
    has_bias = biases is not None

    tm = _pick_tile(m, TM_TGT, 16)      # bf16 packs 16 rows per sublane group
    tn = _pick_tile(n, TN_TGT, 128)
    tk = _pick_tile(k, TK_TGT, 128)

    in_specs = [pl.BlockSpec((tm, tk), lambda i, j, kk: (i, kk))]
    args = [x]
    in_specs += [pl.BlockSpec((tk, tn), lambda i, j, kk: (kk, j)) for _ in range(n_out)]
    args += list(weights)
    if has_bias:
        in_specs += [pl.BlockSpec((1, tn), lambda i, j, kk: (0, j)) for _ in range(n_out)]
        args += [b.reshape(1, n) for b in biases]

    out_specs = [pl.BlockSpec((tm, tn), lambda i, j, kk: (i, j)) for _ in range(n_out)]
    out_shape = [jax.ShapeDtypeStruct((m, n), out_dtype) for _ in range(n_out)]
    scratch = [pltpu.VMEM((tm, tn), jnp.float32) for _ in range(n_out)]

    outs = pl.pallas_call(
        functools.partial(_fused_linear_kernel, n_out=n_out, has_bias=has_bias),
        grid=(m // tm, n // tn, k // tk),
        in_specs=in_specs,
        out_specs=out_specs,
        out_shape=out_shape,
        scratch_shapes=scratch,
        compiler_params=pltpu.CompilerParams(
            dimension_semantics=("parallel", "parallel", "arbitrary"),
            vmem_limit_bytes=VMEM_LIMIT),
    )(*args)
    if isinstance(outs, (list, tuple)):
        return list(outs)
    return [outs]


def flash_attention(q, k, v, kpad, *, nhead, causal):
    """q: (B, Sq, D); k/v: (B, Sk, D); kpad: (B, 1, Sk) additive f32 key-padding mask."""
    bsz, sq, d = q.shape
    sk = k.shape[1]
    dh = d // nhead
    scale = 1.0 / math.sqrt(dh)
    tq = _pick_tile(sq, 128, 8)
    tk = _pick_tile(sk, 128, 8)
    kern = functools.partial(_flash_attn_kernel, nhead=nhead, head_dim=dh,
                             scale=scale, causal=causal)
    return pl.pallas_call(
        kern,
        grid=(bsz, sq // tq, sk // tk),
        in_specs=[
            pl.BlockSpec((1, tq, d), lambda b, qi, ki: (b, qi, 0)),
            pl.BlockSpec((1, tk, d), lambda b, qi, ki: (b, ki, 0)),
            pl.BlockSpec((1, tk, d), lambda b, qi, ki: (b, ki, 0)),
            pl.BlockSpec((1, 1, tk), lambda b, qi, ki: (b, 0, ki)),
        ],
        out_specs=pl.BlockSpec((1, tq, d), lambda b, qi, ki: (b, qi, 0)),
        out_shape=jax.ShapeDtypeStruct((bsz, sq, d), ACT_DTYPE),
        scratch_shapes=[
            pltpu.VMEM((nhead, tq, 1), jnp.float32),    # running max m
            pltpu.VMEM((nhead, tq, 1), jnp.float32),    # running sum l
            pltpu.VMEM((nhead, tq, dh), jnp.float32),   # output accumulator
        ],
        compiler_params=pltpu.CompilerParams(
            dimension_semantics=("parallel", "parallel", "arbitrary"),
            vmem_limit_bytes=VMEM_LIMIT),
    )(q, k, v, kpad)


def outproj_resid_ln(a, w, b, resid, gamma, beta, out_dtype=ACT_DTYPE):
    m, d = a.shape
    tm = _pick_tile(m, TM_TGT, 16)
    return pl.pallas_call(
        _outproj_resid_ln_kernel,
        grid=(m // tm,),
        in_specs=[
            pl.BlockSpec((tm, d), lambda i: (i, 0)),
            pl.BlockSpec((d, d), lambda i: (0, 0)),
            pl.BlockSpec((1, d), lambda i: (0, 0)),
            pl.BlockSpec((tm, d), lambda i: (i, 0)),
            pl.BlockSpec((1, d), lambda i: (0, 0)),
            pl.BlockSpec((1, d), lambda i: (0, 0)),
        ],
        out_specs=pl.BlockSpec((tm, d), lambda i: (i, 0)),
        out_shape=jax.ShapeDtypeStruct((m, d), out_dtype),
        compiler_params=pltpu.CompilerParams(dimension_semantics=("parallel",),
                                             vmem_limit_bytes=VMEM_LIMIT),
    )(a, w, b.reshape(1, d), resid, gamma.reshape(1, d), beta.reshape(1, d))


def ffn_resid_ln(x, w1, b1, w2, b2, gamma, beta, out_dtype=ACT_DTYPE):
    m, d = x.shape
    f = w1.shape[1]
    tm = _pick_tile(m, TM_TGT, 16)
    tf = _pick_tile(f, TK_TGT, 128)     # tile the d_ff (reduction) axis
    return pl.pallas_call(
        _ffn_resid_ln_kernel,
        grid=(m // tm, f // tf),
        in_specs=[
            pl.BlockSpec((tm, d), lambda i, j: (i, 0)),
            pl.BlockSpec((d, tf), lambda i, j: (0, j)),
            pl.BlockSpec((1, tf), lambda i, j: (0, j)),
            pl.BlockSpec((tf, d), lambda i, j: (j, 0)),
            pl.BlockSpec((1, d), lambda i, j: (0, 0)),
            pl.BlockSpec((1, d), lambda i, j: (0, 0)),
            pl.BlockSpec((1, d), lambda i, j: (0, 0)),
        ],
        out_specs=pl.BlockSpec((tm, d), lambda i, j: (i, 0)),
        out_shape=jax.ShapeDtypeStruct((m, d), out_dtype),
        scratch_shapes=[pltpu.VMEM((tm, d), jnp.float32)],
        compiler_params=pltpu.CompilerParams(
            dimension_semantics=("parallel", "arbitrary"),
            vmem_limit_bytes=VMEM_LIMIT),
    )(x, w1, b1.reshape(1, f), w2, b2.reshape(1, d),
      gamma.reshape(1, d), beta.reshape(1, d))


def layernorm(x2d, gamma, beta, out_dtype=ACT_DTYPE):
    m, d = x2d.shape
    tm = _pick_tile(m, TM_TGT, 16)
    return pl.pallas_call(
        _layernorm_kernel,
        grid=(m // tm,),
        in_specs=[
            pl.BlockSpec((tm, d), lambda i: (i, 0)),
            pl.BlockSpec((1, d), lambda i: (0, 0)),
            pl.BlockSpec((1, d), lambda i: (0, 0)),
        ],
        out_specs=pl.BlockSpec((tm, d), lambda i: (i, 0)),
        out_shape=jax.ShapeDtypeStruct((m, d), out_dtype),
        compiler_params=pltpu.CompilerParams(dimension_semantics=("parallel",)),
    )(x2d, gamma.reshape(1, d), beta.reshape(1, d))


# ---------------------------- layer / model glue ----------------------------

def encoder_layer_fwd(x, lp, nhead, src_kpad):
    bsz, s, d = x.shape
    x2 = x.reshape(bsz * s, d)
    sa = lp['self_attn']
    q, k, v = fused_linear(x2, [sa['w_q'], sa['w_k'], sa['w_v']],
                           [sa['b_q'], sa['b_k'], sa['b_v']])        # one fused QKV call
    a = flash_attention(q.reshape(bsz, s, d), k.reshape(bsz, s, d), v.reshape(bsz, s, d),
                        src_kpad, nhead=nhead, causal=False).reshape(bsz * s, d)
    x2 = outproj_resid_ln(a, sa['w_out'], sa['b_out'], x2, lp['norm1_g'], lp['norm1_b'])
    x2 = ffn_resid_ln(x2, lp['lin1_w'], lp['lin1_b'], lp['lin2_w'], lp['lin2_b'],
                      lp['norm2_g'], lp['norm2_b'])
    return x2.reshape(bsz, s, d)


def decoder_layer_fwd(y, memory, lp, nhead, tgt_kpad, src_kpad):
    bsz, st, d = y.shape
    ssrc = memory.shape[1]
    y2 = y.reshape(bsz * st, d)
    m2 = memory.reshape(bsz * ssrc, d)

    # masked self-attention
    sa = lp['self_attn']
    q, k, v = fused_linear(y2, [sa['w_q'], sa['w_k'], sa['w_v']],
                           [sa['b_q'], sa['b_k'], sa['b_v']])
    a = flash_attention(q.reshape(bsz, st, d), k.reshape(bsz, st, d), v.reshape(bsz, st, d),
                        tgt_kpad, nhead=nhead, causal=True).reshape(bsz * st, d)
    y2 = outproj_resid_ln(a, sa['w_out'], sa['b_out'], y2, lp['norm1_g'], lp['norm1_b'])

    # cross-attention: q from decoder stream, fused KV over memory (weights pre-split in params)
    ca = lp['cross_attn']
    q = fused_linear(y2, [ca['w_q']], [ca['b_q']])[0]
    k, v = fused_linear(m2, [ca['w_k'], ca['w_v']], [ca['b_k'], ca['b_v']])
    a = flash_attention(q.reshape(bsz, st, d), k.reshape(bsz, ssrc, d), v.reshape(bsz, ssrc, d),
                        src_kpad, nhead=nhead, causal=False).reshape(bsz * st, d)
    y2 = outproj_resid_ln(a, ca['w_out'], ca['b_out'], y2, lp['norm2_g'], lp['norm2_b'])

    y2 = ffn_resid_ln(y2, lp['lin1_w'], lp['lin1_b'], lp['lin2_w'], lp['lin2_b'],
                      lp['norm3_g'], lp['norm3_b'])
    return y2.reshape(bsz, st, d)


def transformer_forward(params, inputs, outputs, *, pad_label, nhead):
    bsz, ssrc = inputs.shape
    tgt = outputs[:, :-1]
    st = tgt.shape[1]
    d_model = params['src_emb'].shape[1]
    tgt_vocab = params['tgt_emb'].shape[0]

    # embeddings (gather stays in plain JAX glue)
    src_x = jnp.take(params['src_emb'], inputs, axis=0)     # (B, Ssrc, D) bf16
    tgt_x = jnp.take(params['tgt_emb'], tgt, axis=0)        # (B, St, D) bf16

    # tiny additive key-padding vectors; causal mask is generated inside the attention kernel
    src_kpad = jnp.where(inputs == pad_label, NEG_INF, 0.0).astype(jnp.float32)[:, None, :]
    tgt_kpad = jnp.where(tgt == pad_label, NEG_INF, 0.0).astype(jnp.float32)[:, None, :]

    # encoder
    x = src_x
    for lp in params['encoder']:
        x = encoder_layer_fwd(x, lp, nhead, src_kpad)
    memory = layernorm(x.reshape(bsz * ssrc, d_model),
                       params['enc_norm_g'], params['enc_norm_b']).reshape(bsz, ssrc, d_model)

    # decoder
    y = tgt_x
    for lp in params['decoder']:
        y = decoder_layer_fwd(y, memory, lp, nhead, tgt_kpad, src_kpad)
    y2 = layernorm(y.reshape(bsz * st, d_model), params['dec_norm_g'], params['dec_norm_b'])

    # tied output projection (no bias): standard (K, N) matmul against the cached
    # pre-transposed, 256-padded copy of the embedding table
    logits_full = fused_linear(y2, [params['proj_w_t']], biases=None,
                               out_dtype=jnp.float32)[0]
    logits = logits_full[:, :tgt_vocab]
    return logits.reshape(bsz, st, tgt_vocab)


# ------------------------------- parameters ---------------------------------

def make_params(key, src_vocab, tgt_vocab, pad_label, d_model, nhead, n_enc, n_dec, d_ff):
    keys = iter(jax.random.split(key, 4096))

    def nxt():
        return next(keys)

    def lin(din, dout):
        # weights stored pre-transposed as (Din, Dout) in bf16; biases in f32
        bound = 1.0 / math.sqrt(din)
        w = jax.random.uniform(nxt(), (din, dout), jnp.float32, -bound, bound).astype(ACT_DTYPE)
        b = jax.random.uniform(nxt(), (dout,), jnp.float32, -bound, bound)
        return w, b

    def mha():
        # pre-split q / k / v projection weights (no runtime slicing)
        w_q, b_q = lin(d_model, d_model)
        w_k, b_k = lin(d_model, d_model)
        w_v, b_v = lin(d_model, d_model)
        w_out, b_out = lin(d_model, d_model)
        return dict(w_q=w_q, b_q=b_q, w_k=w_k, b_k=b_k, w_v=w_v, b_v=b_v,
                    w_out=w_out, b_out=b_out)

    def ln_pair():
        return jnp.ones((d_model,), jnp.float32), jnp.zeros((d_model,), jnp.float32)

    def enc_layer():
        w1, b1 = lin(d_model, d_ff)
        w2, b2 = lin(d_ff, d_model)
        g1, bt1 = ln_pair(); g2, bt2 = ln_pair()
        return dict(self_attn=mha(), lin1_w=w1, lin1_b=b1, lin2_w=w2, lin2_b=b2,
                    norm1_g=g1, norm1_b=bt1, norm2_g=g2, norm2_b=bt2)

    def dec_layer():
        w1, b1 = lin(d_model, d_ff)
        w2, b2 = lin(d_ff, d_model)
        g1, bt1 = ln_pair(); g2, bt2 = ln_pair(); g3, bt3 = ln_pair()
        return dict(self_attn=mha(), cross_attn=mha(),
                    lin1_w=w1, lin1_b=b1, lin2_w=w2, lin2_b=b2,
                    norm1_g=g1, norm1_b=bt1, norm2_g=g2, norm2_b=bt2,
                    norm3_g=g3, norm3_b=bt3)

    src_emb = jax.random.normal(nxt(), (src_vocab, d_model), jnp.float32).astype(ACT_DTYPE)
    src_emb = src_emb.at[pad_label].set(0.0)                 # padding_idx row zeroed
    tgt_emb = jax.random.normal(nxt(), (tgt_vocab, d_model), jnp.float32).astype(ACT_DTYPE)
    tgt_emb = tgt_emb.at[pad_label].set(0.0)

    # tied output projection: one-time transposed (d_model, vocab_padded) copy, vocab padded
    # to a multiple of 256 so tn tiles stay lane-dense; extra columns are zero and sliced off.
    vpad = ((tgt_vocab + 255) // 256) * 256
    proj_w_t = jnp.zeros((d_model, vpad), ACT_DTYPE).at[:, :tgt_vocab].set(
        jnp.transpose(tgt_emb))

    enc_g, enc_b = ln_pair()
    dec_g, dec_b = ln_pair()
    return dict(
        src_emb=src_emb, tgt_emb=tgt_emb, proj_w_t=proj_w_t,
        encoder=[enc_layer() for _ in range(n_enc)],
        decoder=[dec_layer() for _ in range(n_dec)],
        enc_norm_g=enc_g, enc_norm_b=enc_b,
        dec_norm_g=dec_g, dec_norm_b=dec_b,
    )


# ----------------------------------- main ------------------------------------

if __name__ == "__main__":
    # small, forward-consistent shapes
    src_vocab, tgt_vocab, pad_label = 40, 48, 0
    d_model, nhead = 32, 4
    n_enc, n_dec, d_ff = 2, 2, 64
    B, Ssrc, Sout = 2, 8, 9          # decoder sees Sout-1 = 8 tokens

    key = jax.random.PRNGKey(0)
    kp, ki, ko = jax.random.split(key, 3)

    params = make_params(kp, src_vocab, tgt_vocab, pad_label,
                         d_model, nhead, n_enc, n_dec, d_ff)

    inputs = jax.random.randint(ki, (B, Ssrc), 1, src_vocab, dtype=jnp.int32)
    inputs = inputs.at[0, -2:].set(pad_label)               # exercise src padding mask
    outputs = jax.random.randint(ko, (B, Sout), 1, tgt_vocab, dtype=jnp.int32)
    outputs = outputs.at[1, -3:].set(pad_label)             # exercise tgt padding mask

    fwd = jax.jit(functools.partial(transformer_forward,
                                    pad_label=pad_label, nhead=nhead))
    logits = fwd(params, inputs, outputs)
    jax.block_until_ready(logits)

    assert logits.shape == (B, Sout - 1, tgt_vocab), logits.shape
    assert logits.dtype == jnp.float32
    assert bool(jnp.all(jnp.isfinite(logits)))
    print("KERNEL_OK")
</pallas_src>

<mosaic_0001>
module attributes {stable_mosaic.version = 11 : i64} {
  func.func @_fused_linear_kernel(%arg0: i32, %arg1: i32, %arg2: i32, %arg3: memref<16x32xbf16, #tpu.memory_space<vmem>>, %arg4: memref<32x32xbf16, #tpu.memory_space<vmem>>, %arg5: memref<32x32xbf16, #tpu.memory_space<vmem>>, %arg6: memref<32x32xbf16, #tpu.memory_space<vmem>>, %arg7: memref<1x32xf32, #tpu.memory_space<vmem>>, %arg8: memref<1x32xf32, #tpu.memory_space<vmem>>, %arg9: memref<1x32xf32, #tpu.memory_space<vmem>>, %arg10: memref<16x32xbf16, #tpu.memory_space<vmem>>, %arg11: memref<16x32xbf16, #tpu.memory_space<vmem>>, %arg12: memref<16x32xbf16, #tpu.memory_space<vmem>>, %arg13: memref<16x32xf32, #tpu.memory_space<vmem>>, %arg14: memref<16x32xf32, #tpu.memory_space<vmem>>, %arg15: memref<16x32xf32, #tpu.memory_space<vmem>>) attributes {dimension_semantics = [#tpu.dimension_semantics<parallel>, #tpu.dimension_semantics<parallel>, #tpu.dimension_semantics<arbitrary>], iteration_bounds = array<i64: 1, 1, 1>, scalar_prefetch = 0 : i64, scratch_operands = 3 : i64, tpu.core_type = #tpu.core_type<tc>, window_params = [{transform_indices = @transform_0, window_bounds = array<i64: 16, 32>}, {transform_indices = @transform_1, window_bounds = array<i64: 32, 32>}, {transform_indices = @transform_2, window_bounds = array<i64: 32, 32>}, {transform_indices = @transform_3, window_bounds = array<i64: 32, 32>}, {transform_indices = @transform_4, window_bounds = array<i64: 1, 32>}, {transform_indices = @transform_5, window_bounds = array<i64: 1, 32>}, {transform_indices = @transform_6, window_bounds = array<i64: 1, 32>}, {transform_indices = @transform_7, window_bounds = array<i64: 16, 32>}, {transform_indices = @transform_8, window_bounds = array<i64: 16, 32>}, {transform_indices = @transform_9, window_bounds = array<i64: 16, 32>}]} {
    %c0_i32 = arith.constant 0 : i32
    %0 = arith.cmpi eq, %arg2, %c0_i32 : i32
    %1 = arith.extui %0 : i1 to i32
    %c0_i32_0 = arith.constant 0 : i32
    %2 = arith.cmpi ne, %1, %c0_i32_0 : i32
    scf.if %2 {
      %cst_24 = arith.constant 0.000000e+00 : f32
      %22 = vector.broadcast %cst_24 : f32 to vector<16x32xf32>
      %c0_25 = arith.constant 0 : index
      %c0_26 = arith.constant 0 : index
      %23 = vector.load %arg13[%c0_25, %c0_26] : memref<16x32xf32, #tpu.memory_space<vmem>>, vector<16x32xf32>
      tpu.vector_store %arg13[%c0_25, %c0_26], %22 {strides = array<i32>} : memref<16x32xf32, #tpu.memory_space<vmem>>, vector<16x32xf32>,
      %cst_27 = arith.constant 0.000000e+00 : f32
      %24 = vector.broadcast %cst_27 : f32 to vector<16x32xf32>
      %c0_28 = arith.constant 0 : index
      %c0_29 = arith.constant 0 : index
      %25 = vector.load %arg14[%c0_28, %c0_29] : memref<16x32xf32, #tpu.memory_space<vmem>>, vector<16x32xf32>
      tpu.vector_store %arg14[%c0_28, %c0_29], %24 {strides = array<i32>} : memref<16x32xf32, #tpu.memory_space<vmem>>, vector<16x32xf32>,
      %cst_30 = arith.constant 0.000000e+00 : f32
      %26 = vector.broadcast %cst_30 : f32 to vector<16x32xf32>
      %c0_31 = arith.constant 0 : index
      %c0_32 = arith.constant 0 : index
      %27 = vector.load %arg15[%c0_31, %c0_32] : memref<16x32xf32, #tpu.memory_space<vmem>>, vector<16x32xf32>
      tpu.vector_store %arg15[%c0_31, %c0_32], %26 {strides = array<i32>} : memref<16x32xf32, #tpu.memory_space<vmem>>, vector<16x32xf32>,
    } else {
    }
    %c0 = arith.constant 0 : index
    %c0_1 = arith.constant 0 : index
    %3 = vector.load %arg3[%c0, %c0_1] : memref<16x32xbf16, #tpu.memory_space<vmem>>, vector<16x32xbf16>
    %c0_2 = arith.constant 0 : index
    %c0_3 = arith.constant 0 : index
    %4 = vector.load %arg13[%c0_2, %c0_3] : memref<16x32xf32, #tpu.memory_space<vmem>>, vector<16x32xf32>
    %c0_4 = arith.constant 0 : index
    %c0_5 = arith.constant 0 : index
    %5 = vector.load %arg4[%c0_4, %c0_5] : memref<32x32xbf16, #tpu.memory_space<vmem>>, vector<32x32xbf16>
    %cst = arith.constant dense<0.000000e+00> : vector<16x32xf32>
    %6 = tpu.matmul %3, %5, %cst {dimension_numbers = #tpu.dot_dimension_numbers<[1], [0], [0], [1], [0, 0, 1, 1], [], []>} : vector<16x32xbf16>, vector<32x32xbf16>, vector<16x32xf32> -> vector<16x32xf32>
    %7 = arith.addf %4, %6 : vector<16x32xf32>
    %c0_6 = arith.constant 0 : index
    %c0_7 = arith.constant 0 : index
    %8 = vector.load %arg13[%c0_6, %c0_7] : memref<16x32xf32, #tpu.memory_space<vmem>>, vector<16x32xf32>
    tpu.vector_store %arg13[%c0_6, %c0_7], %7 {strides = array<i32>} : memref<16x32xf32, #tpu.memory_space<vmem>>, vector<16x32xf32>,
    %c0_8 = arith.constant 0 : index
    %c0_9 = arith.constant 0 : index
    %9 = vector.load %arg14[%c0_8, %c0_9] : memref<16x32xf32, #tpu.memory_space<vmem>>, vector<16x32xf32>
    %c0_10 = arith.constant 0 : index
    %c0_11 = arith.constant 0 : index
    %10 = vector.load %arg5[%c0_10, %c0_11] : memref<32x32xbf16, #tpu.memory_space<vmem>>, vector<32x32xbf16>
    %cst_12 = arith.constant dense<0.000000e+00> : vector<16x32xf32>
    %11 = tpu.matmul %3, %10, %cst_12 {dimension_numbers = #tpu.dot_dimension_numbers<[1], [0], [0], [1], [0, 0, 1, 1], [], []>} : vector<16x32xbf16>, vector<32x32xbf16>, vector<16x32xf32> -> vector<16x32xf32>
    %12 = arith.addf %9, %11 : vector<16x32xf32>
    %c0_13 = arith.constant 0 : index
    %c0_14 = arith.constant 0 : index
    %13 = vector.load %arg14[%c0_13, %c0_14] : memref<16x32xf32, #tpu.memory_space<vmem>>, vector<16x32xf32>
    tpu.vector_store %arg14[%c0_13, %c0_14], %12 {strides = array<i32>} : memref<16x32xf32, #tpu.memory_space<vmem>>, vector<16x32xf32>,
    %c0_15 = arith.constant 0 : index
    %c0_16 = arith.constant 0 : index
    %14 = vector.load %arg15[%c0_15, %c0_16] : memref<16x32xf32, #tpu.memory_space<vmem>>, vector<16x32xf32>
    %c0_17 = arith.constant 0 : index
    %c0_18 = arith.constant 0 : index
    %15 = vector.load %arg6[%c0_17, %c0_18] : memref<32x32xbf16, #tpu.memory_space<vmem>>, vector<32x32xbf16>
    %cst_19 = arith.constant dense<0.000000e+00> : vector<16x32xf32>
    %16 = tpu.matmul %3, %15, %cst_19 {dimension_numbers = #tpu.dot_dimension_numbers<[1], [0], [0], [1], [0, 0, 1, 1], [], []>} : vector<16x32xbf16>, vector<32x32xbf16>, vector<16x32xf32> -> vector<16x32xf32>
    %17 = arith.addf %14, %16 : vector<16x32xf32>
    %c0_20 = arith.constant 0 : index
    %c0_21 = arith.constant 0 : index
    %18 = vector.load %arg15[%c0_20, %c0_21] : memref<16x32xf32, #tpu.memory_space<vmem>>, vector<16x32xf32>
    tpu.vector_store %arg15[%c0_20, %c0_21], %17 {strides = array<i32>} : memref<16x32xf32, #tpu.memory_space<vmem>>, vector<16x32xf32>,
    %c0_i32_22 = arith.constant 0 : i32
    %19 = arith.cmpi eq, %arg2, %c0_i32_22 : i32
    %20 = arith.extui %19 : i1 to i32
    %c0_i32_23 = arith.constant 0 : i32
    %21 = arith.cmpi ne, %20, %c0_i32_23 : i32
    scf.if %21 {
      %c0_24 = arith.constant 0 : index
      %c0_25 = arith.constant 0 : index
      %22 = vector.load %arg13[%c0_24, %c0_25] : memref<16x32xf32, #tpu.memory_space<vmem>>, vector<16x32xf32>
      %c0_26 = arith.constant 0 : index
      %c0_27 = arith.constant 0 : index
      %23 = vector.load %arg7[%c0_26, %c0_27] : memref<1x32xf32, #tpu.memory_space<vmem>>, vector<1x32xf32>
      %24 = vector.broadcast %23 : vector<1x32xf32> to vector<16x32xf32>
      %25 = arith.addf %22, %24 : vector<16x32xf32>
      %26 = arith.truncf %25 : vector<16x32xf32> to vector<16x32xbf16>
      %c0_28 = arith.constant 0 : index
      %c0_29 = arith.constant 0 : index
      %27 = vector.load %arg10[%c0_28, %c0_29] : memref<16x32xbf16, #tpu.memory_space<vmem>>, vector<16x32xbf16>
      tpu.vector_store %arg10[%c0_28, %c0_29], %26 {strides = array<i32>} : memref<16x32xbf16, #tpu.memory_space<vmem>>, vector<16x32xbf16>,
      %c0_30 = arith.constant 0 : index
      %c0_31 = arith.constant 0 : index
      %28 = vector.load %arg14[%c0_30, %c0_31] : memref<16x32xf32, #tpu.memory_space<vmem>>, vector<16x32xf32>
      %c0_32 = arith.constant 0 : index
      %c0_33 = arith.constant 0 : index
      %29 = vector.load %arg8[%c0_32, %c0_33] : memref<1x32xf32, #tpu.memory_space<vmem>>, vector<1x32xf32>
      %30 = vector.broadcast %29 : vector<1x32xf32> to vector<16x32xf32>
      %31 = arith.addf %28, %30 : vector<16x32xf32>
      %32 = arith.truncf %31 : vector<16x32xf32> to vector<16x32xbf16>
      %c0_34 = arith.constant 0 : index
      %c0_35 = arith.constant 0 : index
      %33 = vector.load %arg11[%c0_34, %c0_35] : memref<16x32xbf16, #tpu.memory_space<vmem>>, vector<16x32xbf16>
      tpu.vector_store %arg11[%c0_34, %c0_35], %32 {strides = array<i32>} : memref<16x32xbf16, #tpu.memory_space<vmem>>, vector<16x32xbf16>,
      %c0_36 = arith.constant 0 : index
      %c0_37 = arith.constant 0 : index
      %34 = vector.load %arg15[%c0_36, %c0_37] : memref<16x32xf32, #tpu.memory_space<vmem>>, vector<16x32xf32>
      %c0_38 = arith.constant 0 : index
      %c0_39 = arith.constant 0 : index
      %35 = vector.load %arg9[%c0_38, %c0_39] : memref<1x32xf32, #tpu.memory_space<vmem>>, vector<1x32xf32>
      %36 = vector.broadcast %35 : vector<1x32xf32> to vector<16x32xf32>
      %37 = arith.addf %34, %36 : vector<16x32xf32>
      %38 = arith.truncf %37 : vector<16x32xf32> to vector<16x32xbf16>
      %c0_40 = arith.constant 0 : index
      %c0_41 = arith.constant 0 : index
      %39 = vector.load %arg12[%c0_40, %c0_41] : memref<16x32xbf16, #tpu.memory_space<vmem>>, vector<16x32xbf16>
      tpu.vector_store %arg12[%c0_40, %c0_41], %38 {strides = array<i32>} : memref<16x32xbf16, #tpu.memory_space<vmem>>, vector<16x32xbf16>,
    } else {
    }
    return
  }
  func.func @transform_0(%arg0: i32, %arg1: i32, %arg2: i32) -> (i32, i32) {
    %c0_i32 = arith.constant 0 : i32
    return %arg0, %arg2 : i32, i32
  }
  func.func @transform_1(%arg0: i32, %arg1: i32, %arg2: i32) -> (i32, i32) {
    %c0_i32 = arith.constant 0 : i32
    return %arg2, %arg1 : i32, i32
  }
  func.func @transform_2(%arg0: i32, %arg1: i32, %arg2: i32) -> (i32, i32) {
    %c0_i32 = arith.constant 0 : i32
    return %arg2, %arg1 : i32, i32
  }
  func.func @transform_3(%arg0: i32, %arg1: i32, %arg2: i32) -> (i32, i32) {
    %c0_i32 = arith.constant 0 : i32
    return %arg2, %arg1 : i32, i32
  }
  func.func @transform_4(%arg0: i32, %arg1: i32, %arg2: i32) -> (i32, i32) {
    %c0_i32 = arith.constant 0 : i32
    %c0_i32_0 = arith.constant 0 : i32
    return %c0_i32, %arg1 : i32, i32
  }
  func.func @transform_5(%arg0: i32, %arg1: i32, %arg2: i32) -> (i32, i32) {
    %c0_i32 = arith.constant 0 : i32
    %c0_i32_0 = arith.constant 0 : i32
    return %c0_i32, %arg1 : i32, i32
  }
  func.func @transform_6(%arg0: i32, %arg1: i32, %arg2: i32) -> (i32, i32) {
    %c0_i32 = arith.constant 0 : i32
    %c0_i32_0 = arith.constant 0 : i32
    return %c0_i32, %arg1 : i32, i32
  }
  func.func @transform_7(%arg0: i32, %arg1: i32, %arg2: i32) -> (i32, i32) {
    %c0_i32 = arith.constant 0 : i32
    return %arg0, %arg1 : i32, i32
  }
  func.func @transform_8(%arg0: i32, %arg1: i32, %arg2: i32) -> (i32, i32) {
    %c0_i32 = arith.constant 0 : i32
    return %arg0, %arg1 : i32, i32
  }
  func.func @transform_9(%arg0: i32, %arg1: i32, %arg2: i32) -> (i32, i32) {
    %c0_i32 = arith.constant 0 : i32
    return %arg0, %arg1 : i32, i32
  }
}

module attributes {stable_mosaic.version = 11 : i64} {
  func.func @_outproj_resid_ln_kernel(%arg0: i32, %arg1: memref<16x32xbf16, #tpu.memory_space<vmem>>, %arg2: memref<32x32xbf16, #tpu.memory_space<vmem>>, %arg3: memref<1x32xf32, #tpu.memory_space<vmem>>, %arg4: memref<16x32xbf16, #tpu.memory_space<vmem>>, %arg5: memref<1x32xf32, #tpu.memory_space<vmem>>, %arg6: memref<1x32xf32, #tpu.memory_space<vmem>>, %arg7: memref<16x32xbf16, #tpu.memory_space<vmem>>) attributes {dimension_semantics = [#tpu.dimension_semantics<parallel>], iteration_bounds = array<i64: 1>, scalar_prefetch = 0 : i64, scratch_operands = 0 : i64, tpu.core_type = #tpu.core_type<tc>, window_params = [{transform_indices = @transform_0, window_bounds = array<i64: 16, 32>}, {pipeline_mode = #tpu.pipeline_mode<synchronous>, transform_indices = @transform_1, window_bounds = array<i64: 32, 32>}, {pipeline_mode = #tpu.pipeline_mode<synchronous>, transform_indices = @transform_2, window_bounds = array<i64: 1, 32>}, {transform_indices = @transform_3, window_bounds = array<i64: 16, 32>}, {pipeline_mode = #tpu.pipeline_mode<synchronous>, transform_indices = @transform_4, window_bounds = array<i64: 1, 32>}, {pipeline_mode = #tpu.pipeline_mode<synchronous>, transform_indices = @transform_5, window_bounds = array<i64: 1, 32>}, {transform_indices = @transform_6, window_bounds = array<i64: 16, 32>}]} {
    %c0 = arith.constant 0 : index
    %c0_0 = arith.constant 0 : index
    %0 = vector.load %arg1[%c0, %c0_0] : memref<16x32xbf16, #tpu.memory_space<vmem>>, vector<16x32xbf16>
    %c0_1 = arith.constant 0 : index
    %c0_2 = arith.constant 0 : index
    %1 = vector.load %arg2[%c0_1, %c0_2] : memref<32x32xbf16, #tpu.memory_space<vmem>>, vector<32x32xbf16>
    %cst = arith.constant dense<0.000000e+00> : vector<16x32xf32>
    %2 = tpu.matmul %0, %1, %cst {dimension_numbers = #tpu.dot_dimension_numbers<[1], [0], [0], [1], [0, 0, 1, 1], [], []>} : vector<16x32xbf16>, vector<32x32xbf16>, vector<16x32xf32> -> vector<16x32xf32>
    %c0_3 = arith.constant 0 : index
    %c0_4 = arith.constant 0 : index
    %3 = vector.load %arg3[%c0_3, %c0_4] : memref<1x32xf32, #tpu.memory_space<vmem>>, vector<1x32xf32>
    %4 = vector.broadcast %3 : vector<1x32xf32> to vector<16x32xf32>
    %5 = arith.addf %2, %4 : vector<16x32xf32>
    %c0_5 = arith.constant 0 : index
    %c0_6 = arith.constant 0 : index
    %6 = vector.load %arg4[%c0_5, %c0_6] : memref<16x32xbf16, #tpu.memory_space<vmem>>, vector<16x32xbf16>
    %7 = arith.extf %6 : vector<16x32xbf16> to vector<16x32xf32>
    %8 = arith.addf %5, %7 : vector<16x32xf32>
    %cst_7 = arith.constant dense<0.000000e+00> : vector<16xf32>
    %9 = vector.multi_reduction <add>, %8, %cst_7 [1] : vector<16x32xf32> to vector<16xf32>
    %10 = vector.shape_cast %9 : vector<16xf32> to vector<16x1xf32>
    %cst_8 = arith.constant 3.200000e+01 : f32
    %11 = vector.broadcast %cst_8 : f32 to vector<16x1xf32>
    %12 = arith.divf %10, %11 : vector<16x1xf32>
    %13 = vector.broadcast %12 : vector<16x1xf32> to vector<16x32xf32>
    %14 = arith.subf %8, %13 : vector<16x32xf32>
    %15 = arith.mulf %14, %14 : vector<16x32xf32>
    %cst_9 = arith.constant dense<0.000000e+00> : vector<16xf32>
    %16 = vector.multi_reduction <add>, %15, %cst_9 [1] : vector<16x32xf32> to vector<16xf32>
    %17 = vector.shape_cast %16 : vector<16xf32> to vector<16x1xf32>
    %cst_10 = arith.constant 3.200000e+01 : f32
    %18 = vector.broadcast %cst_10 : f32 to vector<16x1xf32>
    %19 = arith.divf %17, %18 : vector<16x1xf32>
    %cst_11 = arith.constant 9.99999974E-6 : f32
    %20 = vector.broadcast %cst_11 : f32 to vector<16x1xf32>
    %21 = arith.addf %19, %20 : vector<16x1xf32>
    %22 = math.rsqrt %21 : vector<16x1xf32>
    %23 = vector.broadcast %12 : vector<16x1xf32> to vector<16x32xf32>
    %24 = arith.subf %8, %23 : vector<16x32xf32>
    %25 = vector.broadcast %22 : vector<16x1xf32> to vector<16x32xf32>
    %26 = arith.mulf %24, %25 : vector<16x32xf32>
    %c0_12 = arith.constant 0 : index
    %c0_13 = arith.constant 0 : index
    %27 = vector.load %arg5[%c0_12, %c0_13] : memref<1x32xf32, #tpu.memory_space<vmem>>, vector<1x32xf32>
    %28 = vector.broadcast %27 : vector<1x32xf32> to vector<16x32xf32>
    %29 = arith.mulf %26, %28 : vector<16x32xf32>
    %c0_14 = arith.constant 0 : index
    %c0_15 = arith.constant 0 : index
    %30 = vector.load %arg6[%c0_14, %c0_15] : memref<1x32xf32, #tpu.memory_space<vmem>>, vector<1x32xf32>
    %31 = vector.broadcast %30 : vector<1x32xf32> to vector<16x32xf32>
    %32 = arith.addf %29, %31 : vector<16x32xf32>
    %33 = arith.truncf %32 : vector<16x32xf32> to vector<16x32xbf16>
    %c0_16 = arith.constant 0 : index
    %c0_17 = arith.constant 0 : index
    %34 = vector.load %arg7[%c0_16, %c0_17] : memref<16x32xbf16, #tpu.memory_space<vmem>>, vector<16x32xbf16>
    tpu.vector_store %arg7[%c0_16, %c0_17], %33 {strides = array<i32>} : memref<16x32xbf16, #tpu.memory_space<vmem>>, vector<16x32xbf16>,
    return
  }
  func.func @transform_0(%arg0: i32) -> (i32, i32) {
    %c0_i32 = arith.constant 0 : i32
    %c0_i32_0 = arith.constant 0 : i32
    return %arg0, %c0_i32 : i32, i32
  }
  func.func @transform_1(%arg0: i32) -> (i32, i32) {
    %c0_i32 = arith.constant 0 : i32
    %c0_i32_0 = arith.constant 0 : i32
    %c0_i32_1 = arith.constant 0 : i32
    return %c0_i32, %c0_i32_0 : i32, i32
  }
  func.func @transform_2(%arg0: i32) -> (i32, i32) {
    %c0_i32 = arith.constant 0 : i32
    %c0_i32_0 = arith.constant 0 : i32
    %c0_i32_1 = arith.constant 0 : i32
    return %c0_i32, %c0_i32_0 : i32, i32
  }
  func.func @transform_3(%arg0: i32) -> (i32, i32) {
    %c0_i32 = arith.constant 0 : i32
    %c0_i32_0 = arith.constant 0 : i32
    return %arg0, %c0_i32 : i32, i32
  }
  func.func @transform_4(%arg0: i32) -> (i32, i32) {
    %c0_i32 = arith.constant 0 : i32
    %c0_i32_0 = arith.constant 0 : i32
    %c0_i32_1 = arith.constant 0 : i32
    return %c0_i32, %c0_i32_0 : i32, i32
  }
  func.func @transform_5(%arg0: i32) -> (i32, i32) {
    %c0_i32 = arith.constant 0 : i32
    %c0_i32_0 = arith.constant 0 : i32
    %c0_i32_1 = arith.constant 0 : i32
    return %c0_i32, %c0_i32_0 : i32, i32
  }
  func.func @transform_6(%arg0: i32) -> (i32, i32) {
    %c0_i32 = arith.constant 0 : i32
    %c0_i32_0 = arith.constant 0 : i32
    return %arg0, %c0_i32 : i32, i32
  }
}

module attributes {stable_mosaic.version = 11 : i64} {
  func.func @_flash_attn_kernel(%arg0: i32, %arg1: i32, %arg2: i32, %arg3: memref<1x8x32xbf16, #tpu.memory_space<vmem>>, %arg4: memref<1x8x32xbf16, #tpu.memory_space<vmem>>, %arg5: memref<1x8x32xbf16, #tpu.memory_space<vmem>>, %arg6: memref<1x1x8xf32, #tpu.memory_space<vmem>>, %arg7: memref<1x8x32xbf16, #tpu.memory_space<vmem>>, %arg8: memref<4x8x1xf32, #tpu.memory_space<vmem>>, %arg9: memref<4x8x1xf32, #tpu.memory_space<vmem>>, %arg10: memref<4x8x8xf32, #tpu.memory_space<vmem>>) attributes {dimension_semantics = [#tpu.dimension_semantics<parallel>, #tpu.dimension_semantics<parallel>, #tpu.dimension_semantics<arbitrary>], iteration_bounds = array<i64: 2, 1, 1>, scalar_prefetch = 0 : i64, scratch_operands = 3 : i64, tpu.core_type = #tpu.core_type<tc>, window_params = [{transform_indices = @transform_0, window_bounds = array<i64: 1, 8, 32>}, {transform_indices = @transform_1, window_bounds = array<i64: 1, 8, 32>}, {transform_indices = @transform_2, window_bounds = array<i64: 1, 8, 32>}, {transform_indices = @transform_3, window_bounds = array<i64: 1, 1, 8>}, {transform_indices = @transform_4, window_bounds = array<i64: 1, 8, 32>}]} {
    %c0_i32 = arith.constant 0 : i32
    %0 = arith.cmpi eq, %arg2, %c0_i32 : i32
    %1 = arith.extui %0 : i1 to i32
    %c0_i32_0 = arith.constant 0 : i32
    %2 = arith.cmpi ne, %1, %c0_i32_0 : i32
    scf.if %2 {
      %cst_99 = arith.constant 0xFF800000 : f32
      %168 = vector.broadcast %cst_99 : f32 to vector<4x8x1xf32>
      %c0_100 = arith.constant 0 : index
      %c0_101 = arith.constant 0 : index
      %c0_102 = arith.constant 0 : index
      %169 = vector.load %arg8[%c0_100, %c0_101, %c0_102] : memref<4x8x1xf32, #tpu.memory_space<vmem>>, vector<4x8x1xf32>
      tpu.vector_store %arg8[%c0_100, %c0_101, %c0_102], %168 {strides = array<i32>} : memref<4x8x1xf32, #tpu.memory_space<vmem>>, vector<4x8x1xf32>,
      %cst_103 = arith.constant 0.000000e+00 : f32
      %170 = vector.broadcast %cst_103 : f32 to vector<4x8x1xf32>
      %c0_104 = arith.constant 0 : index
      %c0_105 = arith.constant 0 : index
      %c0_106 = arith.constant 0 : index
      %171 = vector.load %arg9[%c0_104, %c0_105, %c0_106] : memref<4x8x1xf32, #tpu.memory_space<vmem>>, vector<4x8x1xf32>
      tpu.vector_store %arg9[%c0_104, %c0_105, %c0_106], %170 {strides = array<i32>} : memref<4x8x1xf32, #tpu.memory_space<vmem>>, vector<4x8x1xf32>,
      %cst_107 = arith.constant 0.000000e+00 : f32
      %172 = vector.broadcast %cst_107 : f32 to vector<4x8x8xf32>
      %c0_108 = arith.constant 0 : index
      %c0_109 = arith.constant 0 : index
      %c0_110 = arith.constant 0 : index
      %173 = vector.load %arg10[%c0_108, %c0_109, %c0_110] : memref<4x8x8xf32, #tpu.memory_space<vmem>>, vector<4x8x8xf32>
      tpu.vector_store %arg10[%c0_108, %c0_109, %c0_110], %172 {strides = array<i32>} : memref<4x8x8xf32, #tpu.memory_space<vmem>>, vector<4x8x8xf32>,
    } else {
    }
    %c0 = arith.constant 0 : index
    %c0_1 = arith.constant 0 : index
    %c0_2 = arith.constant 0 : index
    %3 = vector.load %arg3[%c0, %c0_1, %c0_2] : memref<1x8x32xbf16, #tpu.memory_space<vmem>>, vector<1x8x32xbf16>
    %4 = vector.shape_cast %3 : vector<1x8x32xbf16> to vector<8x32xbf16>
    %5 = arith.extf %4 : vector<8x32xbf16> to vector<8x32xf32>
    %cst = arith.constant 0.353553385 : f32
    %6 = vector.broadcast %cst : f32 to vector<8x32xf32>
    %7 = arith.mulf %5, %6 : vector<8x32xf32>
    %8 = arith.truncf %7 : vector<8x32xf32> to vector<8x32xbf16>
    %c0_3 = arith.constant 0 : index
    %c0_4 = arith.constant 0 : index
    %c0_5 = arith.constant 0 : index
    %9 = vector.load %arg4[%c0_3, %c0_4, %c0_5] : memref<1x8x32xbf16, #tpu.memory_space<vmem>>, vector<1x8x32xbf16>
    %10 = vector.shape_cast %9 : vector<1x8x32xbf16> to vector<8x32xbf16>
    %c0_6 = arith.constant 0 : index
    %c0_7 = arith.constant 0 : index
    %c0_8 = arith.constant 0 : index
    %11 = vector.load %arg5[%c0_6, %c0_7, %c0_8] : memref<1x8x32xbf16, #tpu.memory_space<vmem>>, vector<1x8x32xbf16>
    %12 = vector.shape_cast %11 : vector<1x8x32xbf16> to vector<8x32xbf16>
    %c0_9 = arith.constant 0 : index
    %c0_10 = arith.constant 0 : index
    %c0_11 = arith.constant 0 : index
    %13 = vector.load %arg6[%c0_9, %c0_10, %c0_11] : memref<1x1x8xf32, #tpu.memory_space<vmem>>, vector<1x1x8xf32>
    %14 = vector.shape_cast %13 : vector<1x1x8xf32> to vector<1x8xf32>
    %15 = vector.shape_cast %14 : vector<1x8xf32> to vector<1x8xf32>
    %16 = vector.broadcast %15 : vector<1x8xf32> to vector<8x8xf32>
    %17 = vector.extract_strided_slice %8 {offsets = [0, 0], sizes = [8, 8], strides = [1, 1]} : vector<8x32xbf16> to vector<8x8xbf16>
    %18 = vector.extract_strided_slice %10 {offsets = [0, 0], sizes = [8, 8], strides = [1, 1]} : vector<8x32xbf16> to vector<8x8xbf16>
    %cst_12 = arith.constant dense<0.000000e+00> : vector<8x8xf32>
    %19 = tpu.matmul %17, %18, %cst_12 {dimension_numbers = #tpu.dot_dimension_numbers<[1], [1], [0], [0], [0, 0, 1, 0], [], []>} : vector<8x8xbf16>, vector<8x8xbf16>, vector<8x8xf32> -> vector<8x8xf32>
    %20 = arith.addf %19, %16 : vector<8x8xf32>
    %c0_13 = arith.constant 0 : index
    %c0_14 = arith.constant 0 : index
    %c0_15 = arith.constant 0 : index
    %21 = vector.load %arg8[%c0_13, %c0_14, %c0_15] : memref<4x8x1xf32, #tpu.memory_space<vmem>>, vector<1x8x1xf32>
    %22 = vector.shape_cast %21 : vector<1x8x1xf32> to vector<8x1xf32>
    %cst_16 = arith.constant dense<0xFF800000> : vector<8xf32>
    %23 = vector.multi_reduction <maximumf>, %20, %cst_16 [1] : vector<8x8xf32> to vector<8xf32>
    %24 = vector.shape_cast %23 : vector<8xf32> to vector<8x1xf32>
    %25 = arith.maximumf %22, %24 : vector<8x1xf32>
    %26 = arith.subf %22, %25 : vector<8x1xf32>
    %27 = math.exp %26 : vector<8x1xf32>
    %28 = vector.broadcast %25 : vector<8x1xf32> to vector<8x8xf32>
    %29 = arith.subf %20, %28 : vector<8x8xf32>
    %30 = math.exp %29 : vector<8x8xf32>
    %c0_17 = arith.constant 0 : index
    %c0_18 = arith.constant 0 : index
    %c0_19 = arith.constant 0 : index
    %31 = vector.load %arg9[%c0_17, %c0_18, %c0_19] : memref<4x8x1xf32, #tpu.memory_space<vmem>>, vector<1x8x1xf32>
    %32 = vector.shape_cast %31 : vector<1x8x1xf32> to vector<8x1xf32>
    %33 = arith.mulf %27, %32 : vector<8x1xf32>
    %cst_20 = arith.constant dense<0.000000e+00> : vector<8xf32>
    %34 = vector.multi_reduction <add>, %30, %cst_20 [1] : vector<8x8xf32> to vector<8xf32>
    %35 = vector.shape_cast %34 : vector<8xf32> to vector<8x1xf32>
    %36 = arith.addf %33, %35 : vector<8x1xf32>
    %c0_21 = arith.constant 0 : index
    %c0_22 = arith.constant 0 : index
    %c0_23 = arith.constant 0 : index
    %37 = vector.load %arg9[%c0_21, %c0_22, %c0_23] : memref<4x8x1xf32, #tpu.memory_space<vmem>>, vector<1x8x1xf32>
    %38 = vector.shape_cast %37 : vector<1x8x1xf32> to vector<8x1xf32>
    %39 = vector.shape_cast %36 : vector<8x1xf32> to vector<1x8x1xf32>
    tpu.vector_store %arg9[%c0_21, %c0_22, %c0_23], %39 {strides = array<i32>} : memref<4x8x1xf32, #tpu.memory_space<vmem>>, vector<1x8x1xf32>,
    %c0_24 = arith.constant 0 : index
    %c0_25 = arith.constant 0 : index
    %c0_26 = arith.constant 0 : index
    %40 = vector.load %arg10[%c0_24, %c0_25, %c0_26] : memref<4x8x8xf32, #tpu.memory_space<vmem>>, vector<1x8x8xf32>
    %41 = vector.shape_cast %40 : vector<1x8x8xf32> to vector<8x8xf32>
    %42 = vector.broadcast %27 : vector<8x1xf32> to vector<8x8xf32>
    %43 = arith.mulf %42, %41 : vector<8x8xf32>
    %44 = arith.truncf %30 : vector<8x8xf32> to vector<8x8xbf16>
    %45 = vector.extract_strided_slice %12 {offsets = [0, 0], sizes = [8, 8], strides = [1, 1]} : vector<8x32xbf16> to vector<8x8xbf16>
    %cst_27 = arith.constant dense<0.000000e+00> : vector<8x8xf32>
    %46 = tpu.matmul %44, %45, %cst_27 {dimension_numbers = #tpu.dot_dimension_numbers<[1], [0], [0], [1], [0, 0, 1, 1], [], []>} : vector<8x8xbf16>, vector<8x8xbf16>, vector<8x8xf32> -> vector<8x8xf32>
    %47 = arith.addf %43, %46 : vector<8x8xf32>
    %c0_28 = arith.constant 0 : index
    %c0_29 = arith.constant 0 : index
    %c0_30 = arith.constant 0 : index
    %48 = vector.load %arg10[%c0_28, %c0_29, %c0_30] : memref<4x8x8xf32, #tpu.memory_space<vmem>>, vector<1x8x8xf32>
    %49 = vector.shape_cast %48 : vector<1x8x8xf32> to vector<8x8xf32>
    %50 = vector.shape_cast %47 : vector<8x8xf32> to vector<1x8x8xf32>
    tpu.vector_store %arg10[%c0_28, %c0_29, %c0_30], %50 {strides = array<i32>} : memref<4x8x8xf32, #tpu.memory_space<vmem>>, vector<1x8x8xf32>,
    %c0_31 = arith.constant 0 : index
    %c0_32 = arith.constant 0 : index
    %c0_33 = arith.constant 0 : index
    %51 = vector.load %arg8[%c0_31, %c0_32, %c0_33] : memref<4x8x1xf32, #tpu.memory_space<vmem>>, vector<1x8x1xf32>
    %52 = vector.shape_cast %51 : vector<1x8x1xf32> to vector<8x1xf32>
    %53 = vector.shape_cast %25 : vector<8x1xf32> to vector<1x8x1xf32>
    tpu.vector_store %arg8[%c0_31, %c0_32, %c0_33], %53 {strides = array<i32>} : memref<4x8x1xf32, #tpu.memory_space<vmem>>, vector<1x8x1xf32>,
    %54 = vector.extract_strided_slice %8 {offsets = [0, 8], sizes = [8, 8], strides = [1, 1]} : vector<8x32xbf16> to vector<8x8xbf16>
    %55 = vector.extract_strided_slice %10 {offsets = [0, 8], sizes = [8, 8], strides = [1, 1]} : vector<8x32xbf16> to vector<8x8xbf16>
    %cst_34 = arith.constant dense<0.000000e+00> : vector<8x8xf32>
    %56 = tpu.matmul %54, %55, %cst_34 {dimension_numbers = #tpu.dot_dimension_numbers<[1], [1], [0], [0], [0, 0, 1, 0], [], []>} : vector<8x8xbf16>, vector<8x8xbf16>, vector<8x8xf32> -> vector<8x8xf32>
    %57 = arith.addf %56, %16 : vector<8x8xf32>
    %c1 = arith.constant 1 : index
    %c0_35 = arith.constant 0 : index
    %c0_36 = arith.constant 0 : index
    %58 = vector.load %arg8[%c1, %c0_35, %c0_36] : memref<4x8x1xf32, #tpu.memory_space<vmem>>, vector<1x8x1xf32>
    %59 = vector.shape_cast %58 : vector<1x8x1xf32> to vector<8x1xf32>
    %cst_37 = arith.constant dense<0xFF800000> : vector<8xf32>
    %60 = vector.multi_reduction <maximumf>, %57, %cst_37 [1] : vector<8x8xf32> to vector<8xf32>
    %61 = vector.shape_cast %60 : vector<8xf32> to vector<8x1xf32>
    %62 = arith.maximumf %59, %61 : vector<8x1xf32>
    %63 = arith.subf %59, %62 : vector<8x1xf32>
    %64 = math.exp %63 : vector<8x1xf32>
    %65 = vector.broadcast %62 : vector<8x1xf32> to vector<8x8xf32>
    %66 = arith.subf %57, %65 : vector<8x8xf32>
    %67 = math.exp %66 : vector<8x8xf32>
    %c1_38 = arith.constant 1 : index
    %c0_39 = arith.constant 0 : index
    %c0_40 = arith.constant 0 : index
    %68 = vector.load %arg9[%c1_38, %c0_39, %c0_40] : memref<4x8x1xf32, #tpu.memory_space<vmem>>, vector<1x8x1xf32>
    %69 = vector.shape_cast %68 : vector<1x8x1xf32> to vector<8x1xf32>
    %70 = arith.mulf %64, %69 : vector<8x1xf32>
    %cst_41 = arith.constant dense<0.000000e+00> : vector<8xf32>
    %71 = vector.multi_reduction <add>, %67, %cst_41 [1] : vector<8x8xf32> to vector<8xf32>
    %72 = vector.shape_cast %71 : vector<8xf32> to vector<8x1xf32>
    %73 = arith.addf %70, %72 : vector<8x1xf32>
    %c1_42 = arith.constant 1 : index
    %c0_43 = arith.constant 0 : index
    %c0_44 = arith.constant 0 : index
    %74 = vector.load %arg9[%c1_42, %c0_43, %c0_44] : memref<4x8x1xf32, #tpu.memory_space<vmem>>, vector<1x8x1xf32>
    %75 = vector.shape_cast %74 : vector<1x8x1xf32> to vector<8x1xf32>
    %76 = vector.shape_cast %73 : vector<8x1xf32> to vector<1x8x1xf32>
    tpu.vector_store %arg9[%c1_42, %c0_43, %c0_44], %76 {strides = array<i32>} : memref<4x8x1xf32, #tpu.memory_space<vmem>>, vector<1x8x1xf32>,
    %c1_45 = arith.constant 1 : index
    %c0_46 = arith.constant 0 : index
    %c0_47 = arith.constant 0 : index
    %77 = vector.load %arg10[%c1_45, %c0_46, %c0_47] : memref<4x8x8xf32, #tpu.memory_space<vmem>>, vector<1x8x8xf32>
    %78 = vector.shape_cast %77 : vector<1x8x8xf32> to vector<8x8xf32>
    %79 = vector.broadcast %64 : vector<8x1xf32> to vector<8x8xf32>
    %80 = arith.mulf %79, %78 : vector<8x8xf32>
    %81 = arith.truncf %67 : vector<8x8xf32> to vector<8x8xbf16>
    %82 = vector.extract_strided_slice %12 {offsets = [0, 8], sizes = [8, 8], strides = [1, 1]} : vector<8x32xbf16> to vector<8x8xbf16>
    %cst_48 = arith.constant dense<0.000000e+00> : vector<8x8xf32>
    %83 = tpu.matmul %81, %82, %cst_48 {dimension_numbers = #tpu.dot_dimension_numbers<[1], [0], [0], [1], [0, 0, 1, 1], [], []>} : vector<8x8xbf16>, vector<8x8xbf16>, vector<8x8xf32> -> vector<8x8xf32>
    %84 = arith.addf %80, %83 : vector<8x8xf32>
    %c1_49 = arith.constant 1 : index
    %c0_50 = arith.constant 0 : index
    %c0_51 = arith.constant 0 : index
    %85 = vector.load %arg10[%c1_49, %c0_50, %c0_51] : memref<4x8x8xf32, #tpu.memory_space<vmem>>, vector<1x8x8xf32>
    %86 = vector.shape_cast %85 : vector<1x8x8xf32> to vector<8x8xf32>
    %87 = vector.shape_cast %84 : vector<8x8xf32> to vector<1x8x8xf32>
    tpu.vector_store %arg10[%c1_49, %c0_50, %c0_51], %87 {strides = array<i32>} : memref<4x8x8xf32, #tpu.memory_space<vmem>>, vector<1x8x8xf32>,
    %c1_52 = arith.constant 1 : index
    %c0_53 = arith.constant 0 : index
    %c0_54 = arith.constant 0 : index
    %88 = vector.load %arg8[%c1_52, %c0_53, %c0_54] : memref<4x8x1xf32, #tpu.memory_space<vmem>>, vector<1x8x1xf32>
    %89 = vector.shape_cast %88 : vector<1x8x1xf32> to vector<8x1xf32>
    %90 = vector.shape_cast %62 : vector<8x1xf32> to vector<1x8x1xf32>
    tpu.vector_store %arg8[%c1_52, %c0_53, %c0_54], %90 {strides = array<i32>} : memref<4x8x1xf32, #tpu.memory_space<vmem>>, vector<1x8x1xf32>,
    %91 = vector.extract_strided_slice %8 {offsets = [0, 16], sizes = [8, 8], strides = [1, 1]} : vector<8x32xbf16> to vector<8x8xbf16>
    %92 = vector.extract_strided_slice %10 {offsets = [0, 16], sizes = [8, 8], strides = [1, 1]} : vector<8x32xbf16> to vector<8x8xbf16>
    %cst_55 = arith.constant dense<0.000000e+00> : vector<8x8xf32>
    %93 = tpu.matmul %91, %92, %cst_55 {dimension_numbers = #tpu.dot_dimension_numbers<[1], [1], [0], [0], [0, 0, 1, 0], [], []>} : vector<8x8xbf16>, vector<8x8xbf16>, vector<8x8xf32> -> vector<8x8xf32>
    %94 = arith.addf %93, %16 : vector<8x8xf32>
    %c2 = arith.constant 2 : index
    %c0_56 = arith.constant 0 : index
    %c0_57 = arith.constant 0 : index
    %95 = vector.load %arg8[%c2, %c0_56, %c0_57] : memref<4x8x1xf32, #tpu.memory_space<vmem>>, vector<1x8x1xf32>
    %96 = vector.shape_cast %95 : vector<1x8x1xf32> to vector<8x1xf32>
    %cst_58 = arith.constant dense<0xFF800000> : vector<8xf32>
    %97 = vector.multi_reduction <maximumf>, %94, %cst_58 [1] : vector<8x8xf32> to vector<8xf32>
    %98 = vector.shape_cast %97 : vector<8xf32> to vector<8x1xf32>
    %99 = arith.maximumf %96, %98 : vector<8x1xf32>
    %100 = arith.subf %96, %99 : vector<8x1xf32>
    %101 = math.exp %100 : vector<8x1xf32>
    %102 = vector.broadcast %99 : vector<8x1xf32> to vector<8x8xf32>
    %103 = arith.subf %94, %102 : vector<8x8xf32>
    %104 = math.exp %103 : vector<8x8xf32>
    %c2_59 = arith.constant 2 : index
    %c0_60 = arith.constant 0 : index
    %c0_61 = arith.constant 0 : index
    %105 = vector.load %arg9[%c2_59, %c0_60, %c0_61] : memref<4x8x1xf32, #tpu.memory_space<vmem>>, vector<1x8x1xf32>
    %106 = vector.shape_cast %105 : vector<1x8x1xf32> to vector<8x1xf32>
    %107 = arith.mulf %101, %106 : vector<8x1xf32>
    %cst_62 = arith.constant dense<0.000000e+00> : vector<8xf32>
    %108 = vector.multi_reduction <add>, %104, %cst_62 [1] : vector<8x8xf32> to vector<8xf32>
    %109 = vector.shape_cast %108 : vector<8xf32> to vector<8x1xf32>
    %110 = arith.addf %107, %109 : vector<8x1xf32>
    %c2_63 = arith.constant 2 : index
    %c0_64 = arith.constant 0 : index
    %c0_65 = arith.constant 0 : index
    %111 = vector.load %arg9[%c2_63, %c0_64, %c0_65] : memref<4x8x1xf32, #tpu.memory_space<vmem>>, vector<1x8x1xf32>
    %112 = vector.shape_cast %111 : vector<1x8x1xf32> to vector<8x1xf32>
    %113 = vector.shape_cast %110 : vector<8x1xf32> to vector<1x8x1xf32>
    tpu.vector_store %arg9[%c2_63, %c0_64, %c0_65], %113 {strides = array<i32>} : memref<4x8x1xf32, #tpu.memory_space<vmem>>, vector<1x8x1xf32>,
    %c2_66 = arith.constant 2 : index
    %c0_67 = arith.constant 0 : index
    %c0_68 = arith.constant 0 : index
    %114 = vector.load %arg10[%c2_66, %c0_67, %c0_68] : memref<4x8x8xf32, #tpu.memory_space<vmem>>, vector<1x8x8xf32>
    %115 = vector.shape_cast %114 : vector<1x8x8xf32> to vector<8x8xf32>
    %116 = vector.broadcast %101 : vector<8x1xf32> to vector<8x8xf32>
    %117 = arith.mulf %116, %115 : vector<8x8xf32>
    %118 = arith.truncf %104 : vector<8x8xf32> to vector<8x8xbf16>
    %119 = vector.extract_strided_slice %12 {offsets = [0, 16], sizes = [8, 8], strides = [1, 1]} : vector<8x32xbf16> to vector<8x8xbf16>
    %cst_69 = arith.constant dense<0.000000e+00> : vector<8x8xf32>
    %120 = tpu.matmul %118, %119, %cst_69 {dimension_numbers = #tpu.dot_dimension_numbers<[1], [0], [0], [1], [0, 0, 1, 1], [], []>} : vector<8x8xbf16>, vector<8x8xbf16>, vector<8x8xf32> -> vector<8x8xf32>
    %121 = arith.addf %117, %120 : vector<8x8xf32>
    %c2_70 = arith.constant 2 : index
    %c0_71 = arith.constant 0 : index
    %c0_72 = arith.constant 0 : index
    %122 = vector.load %arg10[%c2_70, %c0_71, %c0_72] : memref<4x8x8xf32, #tpu.memory_space<vmem>>, vector<1x8x8xf32>
    %123 = vector.shape_cast %122 : vector<1x8x8xf32> to vector<8x8xf32>
    %124 = vector.shape_cast %121 : vector<8x8xf32> to vector<1x8x8xf32>
    tpu.vector_store %arg10[%c2_70, %c0_71, %c0_72], %124 {strides = array<i32>} : memref<4x8x8xf32, #tpu.memory_space<vmem>>, vector<1x8x8xf32>,
    %c2_73 = arith.constant 2 : index
    %c0_74 = arith.constant 0 : index
    %c0_75 = arith.constant 0 : index
    %125 = vector.load %arg8[%c2_73, %c0_74, %c0_75] : memref<4x8x1xf32, #tpu.memory_space<vmem>>, vector<1x8x1xf32>
    %126 = vector.shape_cast %125 : vector<1x8x1xf32> to vector<8x1xf32>
    %127 = vector.shape_cast %99 : vector<8x1xf32> to vector<1x8x1xf32>
    tpu.vector_store %arg8[%c2_73, %c0_74, %c0_75], %127 {strides = array<i32>} : memref<4x8x1xf32, #tpu.memory_space<vmem>>, vector<1x8x1xf32>,
    %128 = vector.extract_strided_slice %8 {offsets = [0, 24], sizes = [8, 8], strides = [1, 1]} : vector<8x32xbf16> to vector<8x8xbf16>
    %129 = vector.extract_strided_slice %10 {offsets = [0, 24], sizes = [8, 8], strides = [1, 1]} : vector<8x32xbf16> to vector<8x8xbf16>
    %cst_76 = arith.constant dense<0.000000e+00> : vector<8x8xf32>
    %130 = tpu.matmul %128, %129, %cst_76 {dimension_numbers = #tpu.dot_dimension_numbers<[1], [1], [0], [0], [0, 0, 1, 0], [], []>} : vector<8x8xbf16>, vector<8x8xbf16>, vector<8x8xf32> -> vector<8x8xf32>
    %131 = arith.addf %130, %16 : vector<8x8xf32>
    %c3 = arith.constant 3 : index
    %c0_77 = arith.constant 0 : index
    %c0_78 = arith.constant 0 : index
    %132 = vector.load %arg8[%c3, %c0_77, %c0_78] : memref<4x8x1xf32, #tpu.memory_space<vmem>>, vector<1x8x1xf32>
    %133 = vector.shape_cast %132 : vector<1x8x1xf32> to vector<8x1xf32>
    %cst_79 = arith.constant dense<0xFF800000> : vector<8xf32>
    %134 = vector.multi_reduction <maximumf>, %131, %cst_79 [1] : vector<8x8xf32> to vector<8xf32>
    %135 = vector.shape_cast %134 : vector<8xf32> to vector<8x1xf32>
    %136 = arith.maximumf %133, %135 : vector<8x1xf32>
    %137 = arith.subf %133, %136 : vector<8x1xf32>
    %138 = math.exp %137 : vector<8x1xf32>
    %139 = vector.broadcast %136 : vector<8x1xf32> to vector<8x8xf32>
    %140 = arith.subf %131, %139 : vector<8x8xf32>
    %141 = math.exp %140 : vector<8x8xf32>
    %c3_80 = arith.constant 3 : index
    %c0_81 = arith.constant 0 : index
    %c0_82 = arith.constant 0 : index
    %142 = vector.load %arg9[%c3_80, %c0_81, %c0_82] : memref<4x8x1xf32, #tpu.memory_space<vmem>>, vector<1x8x1xf32>
    %143 = vector.shape_cast %142 : vector<1x8x1xf32> to vector<8x1xf32>
    %144 = arith.mulf %138, %143 : vector<8x1xf32>
    %cst_83 = arith.constant dense<0.000000e+00> : vector<8xf32>
    %145 = vector.multi_reduction <add>, %141, %cst_83 [1] : vector<8x8xf32> to vector<8xf32>
    %146 = vector.shape_cast %145 : vector<8xf32> to vector<8x1xf32>
    %147 = arith.addf %144, %146 : vector<8x1xf32>
    %c3_84 = arith.constant 3 : index
    %c0_85 = arith.constant 0 : index
    %c0_86 = arith.constant 0 : index
    %148 = vector.load %arg9[%c3_84, %c0_85, %c0_86] : memref<4x8x1xf32, #tpu.memory_space<vmem>>, vector<1x8x1xf32>
    %149 = vector.shape_cast %148 : vector<1x8x1xf32> to vector<8x1xf32>
    %150 = vector.shape_cast %147 : vector<8x1xf32> to vector<1x8x1xf32>
    tpu.vector_store %arg9[%c3_84, %c0_85, %c0_86], %150 {strides = array<i32>} : memref<4x8x1xf32, #tpu.memory_space<vmem>>, vector<1x8x1xf32>,
    %c3_87 = arith.constant 3 : index
    %c0_88 = arith.constant 0 : index
    %c0_89 = arith.constant 0 : index
    %151 = vector.load %arg10[%c3_87, %c0_88, %c0_89] : memref<4x8x8xf32, #tpu.memory_space<vmem>>, vector<1x8x8xf32>
    %152 = vector.shape_cast %151 : vector<1x8x8xf32> to vector<8x8xf32>
    %153 = vector.broadcast %138 : vector<8x1xf32> to vector<8x8xf32>
    %154 = arith.mulf %153, %152 : vector<8x8xf32>
    %155 = arith.truncf %141 : vector<8x8xf32> to vector<8x8xbf16>
    %156 = vector.extract_strided_slice %12 {offsets = [0, 24], sizes = [8, 8], strides = [1, 1]} : vector<8x32xbf16> to vector<8x8xbf16>
    %cst_90 = arith.constant dense<0.000000e+00> : vector<8x8xf32>
    %157 = tpu.matmul %155, %156, %cst_90 {dimension_numbers = #tpu.dot_dimension_numbers<[1], [0], [0], [1], [0, 0, 1, 1], [], []>} : vector<8x8xbf16>, vector<8x8xbf16>, vector<8x8xf32> -> vector<8x8xf32>
    %158 = arith.addf %154, %157 : vector<8x8xf32>
    %c3_91 = arith.constant 3 : index
    %c0_92 = arith.constant 0 : index
    %c0_93 = arith.constant 0 : index
    %159 = vector.load %arg10[%c3_91, %c0_92, %c0_93] : memref<4x8x8xf32, #tpu.memory_space<vmem>>, vector<1x8x8xf32>
    %160 = vector.shape_cast %159 : vector<1x8x8xf32> to vector<8x8xf32>
    %161 = vector.shape_cast %158 : vector<8x8xf32> to vector<1x8x8xf32>
    tpu.vector_store %arg10[%c3_91, %c0_92, %c0_93], %161 {strides = array<i32>} : memref<4x8x8xf32, #tpu.memory_space<vmem>>, vector<1x8x8xf32>,
    %c3_94 = arith.constant 3 : index
    %c0_95 = arith.constant 0 : index
    %c0_96 = arith.constant 0 : index
    %162 = vector.load %arg8[%c3_94, %c0_95, %c0_96] : memref<4x8x1xf32, #tpu.memory_space<vmem>>, vector<1x8x1xf32>
    %163 = vector.shape_cast %162 : vector<1x8x1xf32> to vector<8x1xf32>
    %164 = vector.shape_cast %136 : vector<8x1xf32> to vector<1x8x1xf32>
    tpu.vector_store %arg8[%c3_94, %c0_95, %c0_96], %164 {strides = array<i32>} : memref<4x8x1xf32, #tpu.memory_space<vmem>>, vector<1x8x1xf32>,
    %c0_i32_97 = arith.constant 0 : i32
    %165 = arith.cmpi eq, %arg2, %c0_i32_97 : i32
    %166 = arith.extui %165 : i1 to i32
    %c0_i32_98 = arith.constant 0 : i32
    %167 = arith.cmpi ne, %166, %c0_i32_98 : i32
    scf.if %167 {
      %c0_99 = arith.constant 0 : index
      %c0_100 = arith.constant 0 : index
      %c0_101 = arith.constant 0 : index
      %168 = vector.load %arg9[%c0_99, %c0_100, %c0_101] : memref<4x8x1xf32, #tpu.memory_space<vmem>>, vector<1x8x1xf32>
      %169 = vector.shape_cast %168 : vector<1x8x1xf32> to vector<8x1xf32>
      %170 = tpu.reciprocal %169 {approx = true} : vector<8x1xf32> -> vector<8x1xf32>
      %c0_102 = arith.constant 0 : index
      %c0_103 = arith.constant 0 : index
      %c0_104 = arith.constant 0 : index
      %171 = vector.load %arg10[%c0_102, %c0_103, %c0_104] : memref<4x8x8xf32, #tpu.memory_space<vmem>>, vector<1x8x8xf32>
      %172 = vector.shape_cast %171 : vector<1x8x8xf32> to vector<8x8xf32>
      %173 = vector.broadcast %170 : vector<8x1xf32> to vector<8x8xf32>
      %174 = arith.mulf %172, %173 : vector<8x8xf32>
      %175 = arith.truncf %174 : vector<8x8xf32> to vector<8x8xbf16>
      %c0_105 = arith.constant 0 : index
      %c0_106 = arith.constant 0 : index
      %c0_107 = arith.constant 0 : index
      %176 = vector.load %arg7[%c0_105, %c0_106, %c0_107] : memref<1x8x32xbf16, #tpu.memory_space<vmem>>, vector<1x8x8xbf16>
      %177 = vector.shape_cast %176 : vector<1x8x8xbf16> to vector<8x8xbf16>
      %178 = vector.shape_cast %175 : vector<8x8xbf16> to vector<1x8x8xbf16>
      tpu.vector_store %arg7[%c0_105, %c0_106, %c0_107], %178 {strides = array<i32>} : memref<1x8x32xbf16, #tpu.memory_space<vmem>>, vector<1x8x8xbf16>,
      %c1_108 = arith.constant 1 : index
      %c0_109 = arith.constant 0 : index
      %c0_110 = arith.constant 0 : index
      %179 = vector.load %arg9[%c1_108, %c0_109, %c0_110] : memref<4x8x1xf32, #tpu.memory_space<vmem>>, vector<1x8x1xf32>
      %180 = vector.shape_cast %179 : vector<1x8x1xf32> to vector<8x1xf32>
      %181 = tpu.reciprocal %180 {approx = true} : vector<8x1xf32> -> vector<8x1xf32>
      %c1_111 = arith.constant 1 : index
      %c0_112 = arith.constant 0 : index
      %c0_113 = arith.constant 0 : index
      %182 = vector.load %arg10[%c1_111, %c0_112, %c0_113] : memref<4x8x8xf32, #tpu.memory_space<vmem>>, vector<1x8x8xf32>
      %183 = vector.shape_cast %182 : vector<1x8x8xf32> to vector<8x8xf32>
      %184 = vector.broadcast %181 : vector<8x1xf32> to vector<8x8xf32>
      %185 = arith.mulf %183, %184 : vector<8x8xf32>
      %186 = arith.truncf %185 : vector<8x8xf32> to vector<8x8xbf16>
      %c0_114 = arith.constant 0 : index
      %c0_115 = arith.constant 0 : index
      %c8 = arith.constant 8 : index
      %187 = vector.load %arg7[%c0_114, %c0_115, %c8] : memref<1x8x32xbf16, #tpu.memory_space<vmem>>, vector<1x8x8xbf16>
      %188 = vector.shape_cast %187 : vector<1x8x8xbf16> to vector<8x8xbf16>
      %189 = vector.shape_cast %186 : vector<8x8xbf16> to vector<1x8x8xbf16>
      tpu.vector_store %arg7[%c0_114, %c0_115, %c8], %189 {strides = array<i32>} : memref<1x8x32xbf16, #tpu.memory_space<vmem>>, vector<1x8x8xbf16>,
      %c2_116 = arith.constant 2 : index
      %c0_117 = arith.constant 0 : index
      %c0_118 = arith.constant 0 : index
      %190 = vector.load %arg9[%c2_116, %c0_117, %c0_118] : memref<4x8x1xf32, #tpu.memory_space<vmem>>, vector<1x8x1xf32>
      %191 = vector.shape_cast %190 : vector<1x8x1xf32> to vector<8x1xf32>
      %192 = tpu.reciprocal %191 {approx = true} : vector<8x1xf32> -> vector<8x1xf32>
      %c2_119 = arith.constant 2 : index
      %c0_120 = arith.constant 0 : index
      %c0_121 = arith.constant 0 : index
      %193 = vector.load %arg10[%c2_119, %c0_120, %c0_121] : memref<4x8x8xf32, #tpu.memory_space<vmem>>, vector<1x8x8xf32>
      %194 = vector.shape_cast %193 : vector<1x8x8xf32> to vector<8x8xf32>
      %195 = vector.broadcast %192 : vector<8x1xf32> to vector<8x8xf32>
      %196 = arith.mulf %194, %195 : vector<8x8xf32>
      %197 = arith.truncf %196 : vector<8x8xf32> to vector<8x8xbf16>
      %c0_122 = arith.constant 0 : index
      %c0_123 = arith.constant 0 : index
      %c16 = arith.constant 16 : index
      %198 = vector.load %arg7[%c0_122, %c0_123, %c16] : memref<1x8x32xbf16, #tpu.memory_space<vmem>>, vector<1x8x8xbf16>
      %199 = vector.shape_cast %198 : vector<1x8x8xbf16> to vector<8x8xbf16>
      %200 = vector.shape_cast %197 : vector<8x8xbf16> to vector<1x8x8xbf16>
      tpu.vector_store %arg7[%c0_122, %c0_123, %c16], %200 {strides = array<i32>} : memref<1x8x32xbf16, #tpu.memory_space<vmem>>, vector<1x8x8xbf16>,
      %c3_124 = arith.constant 3 : index
      %c0_125 = arith.constant 0 : index
      %c0_126 = arith.constant 0 : index
      %201 = vector.load %arg9[%c3_124, %c0_125, %c0_126] : memref<4x8x1xf32, #tpu.memory_space<vmem>>, vector<1x8x1xf32>
      %202 = vector.shape_cast %201 : vector<1x8x1xf32> to vector<8x1xf32>
      %203 = tpu.reciprocal %202 {approx = true} : vector<8x1xf32> -> vector<8x1xf32>
      %c3_127 = arith.constant 3 : index
      %c0_128 = arith.constant 0 : index
      %c0_129 = arith.constant 0 : index
      %204 = vector.load %arg10[%c3_127, %c0_128, %c0_129] : memref<4x8x8xf32, #tpu.memory_space<vmem>>, vector<1x8x8xf32>
      %205 = vector.shape_cast %204 : vector<1x8x8xf32> to vector<8x8xf32>
      %206 = vector.broadcast %203 : vector<8x1xf32> to vector<8x8xf32>
      %207 = arith.mulf %205, %206 : vector<8x8xf32>
      %208 = arith.truncf %207 : vector<8x8xf32> to vector<8x8xbf16>
      %c0_130 = arith.constant 0 : index
      %c0_131 = arith.constant 0 : index
      %c24 = arith.constant 24 : index
      %209 = vector.load %arg7[%c0_130, %c0_131, %c24] : memref<1x8x32xbf16, #tpu.memory_space<vmem>>, vector<1x8x8xbf16>
      %210 = vector.shape_cast %209 : vector<1x8x8xbf16> to vector<8x8xbf16>
      %211 = vector.shape_cast %208 : vector<8x8xbf16> to vector<1x8x8xbf16>
      tpu.vector_store %arg7[%c0_130, %c0_131, %c24], %211 {strides = array<i32>} : memref<1x8x32xbf16, #tpu.memory_space<vmem>>, vector<1x8x8xbf16>,
    } else {
    }
    return
  }
  func.func @transform_0(%arg0: i32, %arg1: i32, %arg2: i32) -> (i32, i32, i32) {
    %c0_i32 = arith.constant 0 : i32
    %c0_i32_0 = arith.constant 0 : i32
    return %arg0, %arg1, %c0_i32 : i32, i32, i32
  }
  func.func @transform_1(%arg0: i32, %arg1: i32, %arg2: i32) -> (i32, i32, i32) {
    %c0_i32 = arith.constant 0 : i32
    %c0_i32_0 = arith.constant 0 : i32
    return %arg0, %arg2, %c0_i32 : i32, i32, i32
  }
  func.func @transform_2(%arg0: i32, %arg1: i32, %arg2: i32) -> (i32, i32, i32) {
    %c0_i32 = arith.constant 0 : i32
    %c0_i32_0 = arith.constant 0 : i32
    return %arg0, %arg2, %c0_i32 : i32, i32, i32
  }
  func.func @transform_3(%arg0: i32, %arg1: i32, %arg2: i32) -> (i32, i32, i32) {
    %c0_i32 = arith.constant 0 : i32
    %c0_i32_0 = arith.constant 0 : i32
    return %arg0, %c0_i32, %arg2 : i32, i32, i32
  }
  func.func @transform_4(%arg0: i32, %arg1: i32, %arg2: i32) -> (i32, i32, i32) {
    %c0_i32 = arith.constant 0 : i32
    %c0_i32_0 = arith.constant 0 : i32
    return %arg0, %arg1, %c0_i32 : i32, i32, i32
  }
}

module attributes {stable_mosaic.version = 11 : i64} {
  func.func @_ffn_resid_ln_kernel(%arg0: i32, %arg1: i32, %arg2: memref<16x32xbf16, #tpu.memory_space<vmem>>, %arg3: memref<32x64xbf16, #tpu.memory_space<vmem>>, %arg4: memref<1x64xf32, #tpu.memory_space<vmem>>, %arg5: memref<64x32xbf16, #tpu.memory_space<vmem>>, %arg6: memref<1x32xf32, #tpu.memory_space<vmem>>, %arg7: memref<1x32xf32, #tpu.memory_space<vmem>>, %arg8: memref<1x32xf32, #tpu.memory_space<vmem>>, %arg9: memref<16x32xbf16, #tpu.memory_space<vmem>>, %arg10: memref<16x32xf32, #tpu.memory_space<vmem>>) attributes {dimension_semantics = [#tpu.dimension_semantics<parallel>, #tpu.dimension_semantics<arbitrary>], iteration_bounds = array<i64: 1, 1>, scalar_prefetch = 0 : i64, scratch_operands = 1 : i64, tpu.core_type = #tpu.core_type<tc>, window_params = [{transform_indices = @transform_0, window_bounds = array<i64: 16, 32>}, {transform_indices = @transform_1, window_bounds = array<i64: 32, 64>}, {transform_indices = @transform_2, window_bounds = array<i64: 1, 64>}, {transform_indices = @transform_3, window_bounds = array<i64: 64, 32>}, {pipeline_mode = #tpu.pipeline_mode<synchronous>, transform_indices = @transform_4, window_bounds = array<i64: 1, 32>}, {pipeline_mode = #tpu.pipeline_mode<synchronous>, transform_indices = @transform_5, window_bounds = array<i64: 1, 32>}, {pipeline_mode = #tpu.pipeline_mode<synchronous>, transform_indices = @transform_6, window_bounds = array<i64: 1, 32>}, {transform_indices = @transform_7, window_bounds = array<i64: 16, 32>}]} {
    %c0_i32 = arith.constant 0 : i32
    %0 = arith.cmpi eq, %arg1, %c0_i32 : i32
    %1 = arith.extui %0 : i1 to i32
    %c0_i32_0 = arith.constant 0 : i32
    %2 = arith.cmpi ne, %1, %c0_i32_0 : i32
    scf.if %2 {
      %cst_16 = arith.constant 0.000000e+00 : f32
      %20 = vector.broadcast %cst_16 : f32 to vector<16x32xf32>
      %c0_17 = arith.constant 0 : index
      %c0_18 = arith.constant 0 : index
      %21 = vector.load %arg10[%c0_17, %c0_18] : memref<16x32xf32, #tpu.memory_space<vmem>>, vector<16x32xf32>
      tpu.vector_store %arg10[%c0_17, %c0_18], %20 {strides = array<i32>} : memref<16x32xf32, #tpu.memory_space<vmem>>, vector<16x32xf32>,
    } else {
    }
    %c0 = arith.constant 0 : index
    %c0_1 = arith.constant 0 : index
    %3 = vector.load %arg2[%c0, %c0_1] : memref<16x32xbf16, #tpu.memory_space<vmem>>, vector<16x32xbf16>
    %c0_2 = arith.constant 0 : index
    %c0_3 = arith.constant 0 : index
    %4 = vector.load %arg3[%c0_2, %c0_3] : memref<32x64xbf16, #tpu.memory_space<vmem>>, vector<32x64xbf16>
    %cst = arith.constant dense<0.000000e+00> : vector<16x64xf32>
    %5 = tpu.matmul %3, %4, %cst {dimension_numbers = #tpu.dot_dimension_numbers<[1], [0], [0], [1], [0, 0, 1, 1], [], []>} : vector<16x32xbf16>, vector<32x64xbf16>, vector<16x64xf32> -> vector<16x64xf32>
    %c0_4 = arith.constant 0 : index
    %c0_5 = arith.constant 0 : index
    %6 = vector.load %arg4[%c0_4, %c0_5] : memref<1x64xf32, #tpu.memory_space<vmem>>, vector<1x64xf32>
    %7 = vector.broadcast %6 : vector<1x64xf32> to vector<16x64xf32>
    %8 = arith.addf %5, %7 : vector<16x64xf32>
    %cst_6 = arith.constant 0.000000e+00 : f32
    %9 = vector.broadcast %cst_6 : f32 to vector<16x64xf32>
    %10 = arith.maximumf %8, %9 : vector<16x64xf32>
    %c0_7 = arith.constant 0 : index
    %c0_8 = arith.constant 0 : index
    %11 = vector.load %arg10[%c0_7, %c0_8] : memref<16x32xf32, #tpu.memory_space<vmem>>, vector<16x32xf32>
    %12 = arith.truncf %10 : vector<16x64xf32> to vector<16x64xbf16>
    %c0_9 = arith.constant 0 : index
    %c0_10 = arith.constant 0 : index
    %13 = vector.load %arg5[%c0_9, %c0_10] : memref<64x32xbf16, #tpu.memory_space<vmem>>, vector<64x32xbf16>
    %cst_11 = arith.constant dense<0.000000e+00> : vector<16x32xf32>
    %14 = tpu.matmul %12, %13, %cst_11 {dimension_numbers = #tpu.dot_dimension_numbers<[1], [0], [0], [1], [0, 0, 1, 1], [], []>} : vector<16x64xbf16>, vector<64x32xbf16>, vector<16x32xf32> -> vector<16x32xf32>
    %15 = arith.addf %11, %14 : vector<16x32xf32>
    %c0_12 = arith.constant 0 : index
    %c0_13 = arith.constant 0 : index
    %16 = vector.load %arg10[%c0_12, %c0_13] : memref<16x32xf32, #tpu.memory_space<vmem>>, vector<16x32xf32>
    tpu.vector_store %arg10[%c0_12, %c0_13], %15 {strides = array<i32>} : memref<16x32xf32, #tpu.memory_space<vmem>>, vector<16x32xf32>,
    %c0_i32_14 = arith.constant 0 : i32
    %17 = arith.cmpi eq, %arg1, %c0_i32_14 : i32
    %18 = arith.extui %17 : i1 to i32
    %c0_i32_15 = arith.constant 0 : i32
    %19 = arith.cmpi ne, %18, %c0_i32_15 : i32
    scf.if %19 {
      %c0_16 = arith.constant 0 : index
      %c0_17 = arith.constant 0 : index
      %20 = vector.load %arg10[%c0_16, %c0_17] : memref<16x32xf32, #tpu.memory_space<vmem>>, vector<16x32xf32>
      %c0_18 = arith.constant 0 : index
      %c0_19 = arith.constant 0 : index
      %21 = vector.load %arg6[%c0_18, %c0_19] : memref<1x32xf32, #tpu.memory_space<vmem>>, vector<1x32xf32>
      %22 = vector.broadcast %21 : vector<1x32xf32> to vector<16x32xf32>
      %23 = arith.addf %20, %22 : vector<16x32xf32>
      %24 = arith.extf %3 : vector<16x32xbf16> to vector<16x32xf32>
      %25 = arith.addf %23, %24 : vector<16x32xf32>
      %cst_20 = arith.constant dense<0.000000e+00> : vector<16xf32>
      %26 = vector.multi_reduction <add>, %25, %cst_20 [1] : vector<16x32xf32> to vector<16xf32>
      %27 = vector.shape_cast %26 : vector<16xf32> to vector<16x1xf32>
      %cst_21 = arith.constant 3.200000e+01 : f32
      %28 = vector.broadcast %cst_21 : f32 to vector<16x1xf32>
      %29 = arith.divf %27, %28 : vector<16x1xf32>
      %30 = vector.broadcast %29 : vector<16x1xf32> to vector<16x32xf32>
      %31 = arith.subf %25, %30 : vector<16x32xf32>
      %32 = arith.mulf %31, %31 : vector<16x32xf32>
      %cst_22 = arith.constant dense<0.000000e+00> : vector<16xf32>
      %33 = vector.multi_reduction <add>, %32, %cst_22 [1] : vector<16x32xf32> to vector<16xf32>
      %34 = vector.shape_cast %33 : vector<16xf32> to vector<16x1xf32>
      %cst_23 = arith.constant 3.200000e+01 : f32
      %35 = vector.broadcast %cst_23 : f32 to vector<16x1xf32>
      %36 = arith.divf %34, %35 : vector<16x1xf32>
      %cst_24 = arith.constant 9.99999974E-6 : f32
      %37 = vector.broadcast %cst_24 : f32 to vector<16x1xf32>
      %38 = arith.addf %36, %37 : vector<16x1xf32>
      %39 = math.rsqrt %38 : vector<16x1xf32>
      %40 = vector.broadcast %29 : vector<16x1xf32> to vector<16x32xf32>
      %41 = arith.subf %25, %40 : vector<16x32xf32>
      %42 = vector.broadcast %39 : vector<16x1xf32> to vector<16x32xf32>
      %43 = arith.mulf %41, %42 : vector<16x32xf32>
      %c0_25 = arith.constant 0 : index
      %c0_26 = arith.constant 0 : index
      %44 = vector.load %arg7[%c0_25, %c0_26] : memref<1x32xf32, #tpu.memory_space<vmem>>, vector<1x32xf32>
      %45 = vector.broadcast %44 : vector<1x32xf32> to vector<16x32xf32>
      %46 = arith.mulf %43, %45 : vector<16x32xf32>
      %c0_27 = arith.constant 0 : index
      %c0_28 = arith.constant 0 : index
      %47 = vector.load %arg8[%c0_27, %c0_28] : memref<1x32xf32, #tpu.memory_space<vmem>>, vector<1x32xf32>
      %48 = vector.broadcast %47 : vector<1x32xf32> to vector<16x32xf32>
      %49 = arith.addf %46, %48 : vector<16x32xf32>
      %50 = arith.truncf %49 : vector<16x32xf32> to vector<16x32xbf16>
      %c0_29 = arith.constant 0 : index
      %c0_30 = arith.constant 0 : index
      %51 = vector.load %arg9[%c0_29, %c0_30] : memref<16x32xbf16, #tpu.memory_space<vmem>>, vector<16x32xbf16>
      tpu.vector_store %arg9[%c0_29, %c0_30], %50 {strides = array<i32>} : memref<16x32xbf16, #tpu.memory_space<vmem>>, vector<16x32xbf16>,
    } else {
    }
    return
  }
  func.func @transform_0(%arg0: i32, %arg1: i32) -> (i32, i32) {
    %c0_i32 = arith.constant 0 : i32
    %c0_i32_0 = arith.constant 0 : i32
    return %arg0, %c0_i32 : i32, i32
  }
  func.func @transform_1(%arg0: i32, %arg1: i32) -> (i32, i32) {
    %c0_i32 = arith.constant 0 : i32
    %c0_i32_0 = arith.constant 0 : i32
    return %c0_i32, %arg1 : i32, i32
  }
  func.func @transform_2(%arg0: i32, %arg1: i32) -> (i32, i32) {
    %c0_i32 = arith.constant 0 : i32
    %c0_i32_0 = arith.constant 0 : i32
    return %c0_i32, %arg1 : i32, i32
  }
  func.func @transform_3(%arg0: i32, %arg1: i32) -> (i32, i32) {
    %c0_i32 = arith.constant 0 : i32
    %c0_i32_0 = arith.constant 0 : i32
    return %arg1, %c0_i32 : i32, i32
  }
  func.func @transform_4(%arg0: i32, %arg1: i32) -> (i32, i32) {
    %c0_i32 = arith.constant 0 : i32
    %c0_i32_0 = arith.constant 0 : i32
    %c0_i32_1 = arith.constant 0 : i32
    return %c0_i32, %c0_i32_0 : i32, i32
  }
  func.func @transform_5(%arg0: i32, %arg1: i32) -> (i32, i32) {
    %c0_i32 = arith.constant 0 : i32
    %c0_i32_0 = arith.constant 0 : i32
    %c0_i32_1 = arith.constant 0 : i32
    return %c0_i32, %c0_i32_0 : i32, i32
  }
  func.func @transform_6(%arg0: i32, %arg1: i32) -> (i32, i32) {
    %c0_i32 = arith.constant 0 : i32
    %c0_i32_0 = arith.constant 0 : i32
    %c0_i32_1 = arith.constant 0 : i32
    return %c0_i32, %c0_i32_0 : i32, i32
  }
  func.func @transform_7(%arg0: i32, %arg1: i32) -> (i32, i32) {
    %c0_i32 = arith.constant 0 : i32
    %c0_i32_0 = arith.constant 0 : i32
    return %arg0, %c0_i32 : i32, i32
  }
}

module attributes {stable_mosaic.version = 11 : i64} {
  func.func @_layernorm_kernel(%arg0: i32, %arg1: memref<16x32xbf16, #tpu.memory_space<vmem>>, %arg2: memref<1x32xf32, #tpu.memory_space<vmem>>, %arg3: memref<1x32xf32, #tpu.memory_space<vmem>>, %arg4: memref<16x32xbf16, #tpu.memory_space<vmem>>) attributes {dimension_semantics = [#tpu.dimension_semantics<parallel>], iteration_bounds = array<i64: 1>, scalar_prefetch = 0 : i64, scratch_operands = 0 : i64, tpu.core_type = #tpu.core_type<tc>, window_params = [{transform_indices = @transform_0, window_bounds = array<i64: 16, 32>}, {pipeline_mode = #tpu.pipeline_mode<synchronous>, transform_indices = @transform_1, window_bounds = array<i64: 1, 32>}, {pipeline_mode = #tpu.pipeline_mode<synchronous>, transform_indices = @transform_2, window_bounds = array<i64: 1, 32>}, {transform_indices = @transform_3, window_bounds = array<i64: 16, 32>}]} {
    %c0 = arith.constant 0 : index
    %c0_0 = arith.constant 0 : index
    %0 = vector.load %arg1[%c0, %c0_0] : memref<16x32xbf16, #tpu.memory_space<vmem>>, vector<16x32xbf16>
    %1 = arith.extf %0 : vector<16x32xbf16> to vector<16x32xf32>
    %cst = arith.constant dense<0.000000e+00> : vector<16xf32>
    %2 = vector.multi_reduction <add>, %1, %cst [1] : vector<16x32xf32> to vector<16xf32>
    %3 = vector.shape_cast %2 : vector<16xf32> to vector<16x1xf32>
    %cst_1 = arith.constant 3.200000e+01 : f32
    %4 = vector.broadcast %cst_1 : f32 to vector<16x1xf32>
    %5 = arith.divf %3, %4 : vector<16x1xf32>
    %6 = vector.broadcast %5 : vector<16x1xf32> to vector<16x32xf32>
    %7 = arith.subf %1, %6 : vector<16x32xf32>
    %8 = arith.mulf %7, %7 : vector<16x32xf32>
    %cst_2 = arith.constant dense<0.000000e+00> : vector<16xf32>
    %9 = vector.multi_reduction <add>, %8, %cst_2 [1] : vector<16x32xf32> to vector<16xf32>
    %10 = vector.shape_cast %9 : vector<16xf32> to vector<16x1xf32>
    %cst_3 = arith.constant 3.200000e+01 : f32
    %11 = vector.broadcast %cst_3 : f32 to vector<16x1xf32>
    %12 = arith.divf %10, %11 : vector<16x1xf32>
    %cst_4 = arith.constant 9.99999974E-6 : f32
    %13 = vector.broadcast %cst_4 : f32 to vector<16x1xf32>
    %14 = arith.addf %12, %13 : vector<16x1xf32>
    %15 = math.rsqrt %14 : vector<16x1xf32>
    %16 = vector.broadcast %5 : vector<16x1xf32> to vector<16x32xf32>
    %17 = arith.subf %1, %16 : vector<16x32xf32>
    %18 = vector.broadcast %15 : vector<16x1xf32> to vector<16x32xf32>
    %19 = arith.mulf %17, %18 : vector<16x32xf32>
    %c0_5 = arith.constant 0 : index
    %c0_6 = arith.constant 0 : index
    %20 = vector.load %arg2[%c0_5, %c0_6] : memref<1x32xf32, #tpu.memory_space<vmem>>, vector<1x32xf32>
    %21 = vector.broadcast %20 : vector<1x32xf32> to vector<16x32xf32>
    %22 = arith.mulf %19, %21 : vector<16x32xf32>
    %c0_7 = arith.constant 0 : index
    %c0_8 = arith.constant 0 : index
    %23 = vector.load %arg3[%c0_7, %c0_8] : memref<1x32xf32, #tpu.memory_space<vmem>>, vector<1x32xf32>
    %24 = vector.broadcast %23 : vector<1x32xf32> to vector<16x32xf32>
    %25 = arith.addf %22, %24 : vector<16x32xf32>
    %26 = arith.truncf %25 : vector<16x32xf32> to vector<16x32xbf16>
    %c0_9 = arith.constant 0 : index
    %c0_10 = arith.constant 0 : index
    %27 = vector.load %arg4[%c0_9, %c0_10] : memref<16x32xbf16, #tpu.memory_space<vmem>>, vector<16x32xbf16>
    tpu.vector_store %arg4[%c0_9, %c0_10], %26 {strides = array<i32>} : memref<16x32xbf16, #tpu.memory_space<vmem>>, vector<16x32xbf16>,
    return
  }
  func.func @transform_0(%arg0: i32) -> (i32, i32) {
    %c0_i32 = arith.constant 0 : i32
    %c0_i32_0 = arith.constant 0 : i32
    return %arg0, %c0_i32 : i32, i32
  }
  func.func @transform_1(%arg0: i32) -> (i32, i32) {
    %c0_i32 = arith.constant 0 : i32
    %c0_i32_0 = arith.constant 0 : i32
    %c0_i32_1 = arith.constant 0 : i32
    return %c0_i32, %c0_i32_0 : i32, i32
  }
  func.func @transform_2(%arg0: i32) -> (i32, i32) {
    %c0_i32 = arith.constant 0 : i32
    %c0_i32_0 = arith.constant 0 : i32
    %c0_i32_1 = arith.constant 0 : i32
    return %c0_i32, %c0_i32_0 : i32, i32
  }
  func.func @transform_3(%arg0: i32) -> (i32, i32) {
    %c0_i32 = arith.constant 0 : i32
    %c0_i32_0 = arith.constant 0 : i32
    return %arg0, %c0_i32 : i32, i32
  }
}

module attributes {stable_mosaic.version = 11 : i64} {
  func.func @_fused_linear_kernel(%arg0: i32, %arg1: i32, %arg2: i32, %arg3: memref<16x32xbf16, #tpu.memory_space<vmem>>, %arg4: memref<32x32xbf16, #tpu.memory_space<vmem>>, %arg5: memref<32x32xbf16, #tpu.memory_space<vmem>>, %arg6: memref<1x32xf32, #tpu.memory_space<vmem>>, %arg7: memref<1x32xf32, #tpu.memory_space<vmem>>, %arg8: memref<16x32xbf16, #tpu.memory_space<vmem>>, %arg9: memref<16x32xbf16, #tpu.memory_space<vmem>>, %arg10: memref<16x32xf32, #tpu.memory_space<vmem>>, %arg11: memref<16x32xf32, #tpu.memory_space<vmem>>) attributes {dimension_semantics = [#tpu.dimension_semantics<parallel>, #tpu.dimension_semantics<parallel>, #tpu.dimension_semantics<arbitrary>], iteration_bounds = array<i64: 1, 1, 1>, scalar_prefetch = 0 : i64, scratch_operands = 2 : i64, tpu.core_type = #tpu.core_type<tc>, window_params = [{transform_indices = @transform_0, window_bounds = array<i64: 16, 32>}, {transform_indices = @transform_1, window_bounds = array<i64: 32, 32>}, {transform_indices = @transform_2, window_bounds = array<i64: 32, 32>}, {transform_indices = @transform_3, window_bounds = array<i64: 1, 32>}, {transform_indices = @transform_4, window_bounds = array<i64: 1, 32>}, {transform_indices = @transform_5, window_bounds = array<i64: 16, 32>}, {transform_indices = @transform_6, window_bounds = array<i64: 16, 32>}]} {
    %c0_i32 = arith.constant 0 : i32
    %0 = arith.cmpi eq, %arg2, %c0_i32 : i32
    %1 = arith.extui %0 : i1 to i32
    %c0_i32_0 = arith.constant 0 : i32
    %2 = arith.cmpi ne, %1, %c0_i32_0 : i32
    scf.if %2 {
      %cst_17 = arith.constant 0.000000e+00 : f32
      %17 = vector.broadcast %cst_17 : f32 to vector<16x32xf32>
      %c0_18 = arith.constant 0 : index
      %c0_19 = arith.constant 0 : index
      %18 = vector.load %arg10[%c0_18, %c0_19] : memref<16x32xf32, #tpu.memory_space<vmem>>, vector<16x32xf32>
      tpu.vector_store %arg10[%c0_18, %c0_19], %17 {strides = array<i32>} : memref<16x32xf32, #tpu.memory_space<vmem>>, vector<16x32xf32>,
      %cst_20 = arith.constant 0.000000e+00 : f32
      %19 = vector.broadcast %cst_20 : f32 to vector<16x32xf32>
      %c0_21 = arith.constant 0 : index
      %c0_22 = arith.constant 0 : index
      %20 = vector.load %arg11[%c0_21, %c0_22] : memref<16x32xf32, #tpu.memory_space<vmem>>, vector<16x32xf32>
      tpu.vector_store %arg11[%c0_21, %c0_22], %19 {strides = array<i32>} : memref<16x32xf32, #tpu.memory_space<vmem>>, vector<16x32xf32>,
    } else {
    }
    %c0 = arith.constant 0 : index
    %c0_1 = arith.constant 0 : index
    %3 = vector.load %arg3[%c0, %c0_1] : memref<16x32xbf16, #tpu.memory_space<vmem>>, vector<16x32xbf16>
    %c0_2 = arith.constant 0 : index
    %c0_3 = arith.constant 0 : index
    %4 = vector.load %arg10[%c0_2, %c0_3] : memref<16x32xf32, #tpu.memory_space<vmem>>, vector<16x32xf32>
    %c0_4 = arith.constant 0 : index
    %c0_5 = arith.constant 0 : index
    %5 = vector.load %arg4[%c0_4, %c0_5] : memref<32x32xbf16, #tpu.memory_space<vmem>>, vector<32x32xbf16>
    %cst = arith.constant dense<0.000000e+00> : vector<16x32xf32>
    %6 = tpu.matmul %3, %5, %cst {dimension_numbers = #tpu.dot_dimension_numbers<[1], [0], [0], [1], [0, 0, 1, 1], [], []>} : vector<16x32xbf16>, vector<32x32xbf16>, vector<16x32xf32> -> vector<16x32xf32>
    %7 = arith.addf %4, %6 : vector<16x32xf32>
    %c0_6 = arith.constant 0 : index
    %c0_7 = arith.constant 0 : index
    %8 = vector.load %arg10[%c0_6, %c0_7] : memref<16x32xf32, #tpu.memory_space<vmem>>, vector<16x32xf32>
    tpu.vector_store %arg10[%c0_6, %c0_7], %7 {strides = array<i32>} : memref<16x32xf32, #tpu.memory_space<vmem>>, vector<16x32xf32>,
    %c0_8 = arith.constant 0 : index
    %c0_9 = arith.constant 0 : index
    %9 = vector.load %arg11[%c0_8, %c0_9] : memref<16x32xf32, #tpu.memory_space<vmem>>, vector<16x32xf32>
    %c0_10 = arith.constant 0 : index
    %c0_11 = arith.constant 0 : index
    %10 = vector.load %arg5[%c0_10, %c0_11] : memref<32x32xbf16, #tpu.memory_space<vmem>>, vector<32x32xbf16>
    %cst_12 = arith.constant dense<0.000000e+00> : vector<16x32xf32>
    %11 = tpu.matmul %3, %10, %cst_12 {dimension_numbers = #tpu.dot_dimension_numbers<[1], [0], [0], [1], [0, 0, 1, 1], [], []>} : vector<16x32xbf16>, vector<32x32xbf16>, vector<16x32xf32> -> vector<16x32xf32>
    %12 = arith.addf %9, %11 : vector<16x32xf32>
    %c0_13 = arith.constant 0 : index
    %c0_14 = arith.constant 0 : index
    %13 = vector.load %arg11[%c0_13, %c0_14] : memref<16x32xf32, #tpu.memory_space<vmem>>, vector<16x32xf32>
    tpu.vector_store %arg11[%c0_13, %c0_14], %12 {strides = array<i32>} : memref<16x32xf32, #tpu.memory_space<vmem>>, vector<16x32xf32>,
    %c0_i32_15 = arith.constant 0 : i32
    %14 = arith.cmpi eq, %arg2, %c0_i32_15 : i32
    %15 = arith.extui %14 : i1 to i32
    %c0_i32_16 = arith.constant 0 : i32
    %16 = arith.cmpi ne, %15, %c0_i32_16 : i32
    scf.if %16 {
      %c0_17 = arith.constant 0 : index
      %c0_18 = arith.constant 0 : index
      %17 = vector.load %arg10[%c0_17, %c0_18] : memref<16x32xf32, #tpu.memory_space<vmem>>, vector<16x32xf32>
      %c0_19 = arith.constant 0 : index
      %c0_20 = arith.constant 0 : index
      %18 = vector.load %arg6[%c0_19, %c0_20] : memref<1x32xf32, #tpu.memory_space<vmem>>, vector<1x32xf32>
      %19 = vector.broadcast %18 : vector<1x32xf32> to vector<16x32xf32>
      %20 = arith.addf %17, %19 : vector<16x32xf32>
      %21 = arith.truncf %20 : vector<16x32xf32> to vector<16x32xbf16>
      %c0_21 = arith.constant 0 : index
      %c0_22 = arith.constant 0 : index
      %22 = vector.load %arg8[%c0_21, %c0_22] : memref<16x32xbf16, #tpu.memory_space<vmem>>, vector<16x32xbf16>
      tpu.vector_store %arg8[%c0_21, %c0_22], %21 {strides = array<i32>} : memref<16x32xbf16, #tpu.memory_space<vmem>>, vector<16x32xbf16>,
      %c0_23 = arith.constant 0 : index
      %c0_24 = arith.constant 0 : index
      %23 = vector.load %arg11[%c0_23, %c0_24] : memref<16x32xf32, #tpu.memory_space<vmem>>, vector<16x32xf32>
      %c0_25 = arith.constant 0 : index
      %c0_26 = arith.constant 0 : index
      %24 = vector.load %arg7[%c0_25, %c0_26] : memref<1x32xf32, #tpu.memory_space<vmem>>, vector<1x32xf32>
      %25 = vector.broadcast %24 : vector<1x32xf32> to vector<16x32xf32>
      %26 = arith.addf %23, %25 : vector<16x32xf32>
      %27 = arith.truncf %26 : vector<16x32xf32> to vector<16x32xbf16>
      %c0_27 = arith.constant 0 : index
      %c0_28 = arith.constant 0 : index
      %28 = vector.load %arg9[%c0_27, %c0_28] : memref<16x32xbf16, #tpu.memory_space<vmem>>, vector<16x32xbf16>
      tpu.vector_store %arg9[%c0_27, %c0_28], %27 {strides = array<i32>} : memref<16x32xbf16, #tpu.memory_space<vmem>>, vector<16x32xbf16>,
    } else {
    }
    return
  }
  func.func @transform_0(%arg0: i32, %arg1: i32, %arg2: i32) -> (i32, i32) {
    %c0_i32 = arith.constant 0 : i32
    return %arg0, %arg2 : i32, i32
  }
  func.func @transform_1(%arg0: i32, %arg1: i32, %arg2: i32) -> (i32, i32) {
    %c0_i32 = arith.constant 0 : i32
    return %arg2, %arg1 : i32, i32
  }
  func.func @transform_2(%arg0: i32, %arg1: i32, %arg2: i32) -> (i32, i32) {
    %c0_i32 = arith.constant 0 : i32
    return %arg2, %arg1 : i32, i32
  }
  func.func @transform_3(%arg0: i32, %arg1: i32, %arg2: i32) -> (i32, i32) {
    %c0_i32 = arith.constant 0 : i32
    %c0_i32_0 = arith.constant 0 : i32
    return %c0_i32, %arg1 : i32, i32
  }
  func.func @transform_4(%arg0: i32, %arg1: i32, %arg2: i32) -> (i32, i32) {
    %c0_i32 = arith.constant 0 : i32
    %c0_i32_0 = arith.constant 0 : i32
    return %c0_i32, %arg1 : i32, i32
  }
  func.func @transform_5(%arg0: i32, %arg1: i32, %arg2: i32) -> (i32, i32) {
    %c0_i32 = arith.constant 0 : i32
    return %arg0, %arg1 : i32, i32
  }
  func.func @transform_6(%arg0: i32, %arg1: i32, %arg2: i32) -> (i32, i32) {
    %c0_i32 = arith.constant 0 : i32
    return %arg0, %arg1 : i32, i32
  }
}

module attributes {stable_mosaic.version = 11 : i64} {
  func.func @_fused_linear_kernel(%arg0: i32, %arg1: i32, %arg2: i32, %arg3: memref<16x32xbf16, #tpu.memory_space<vmem>>, %arg4: memref<32x32xbf16, #tpu.memory_space<vmem>>, %arg5: memref<1x32xf32, #tpu.memory_space<vmem>>, %arg6: memref<16x32xbf16, #tpu.memory_space<vmem>>, %arg7: memref<16x32xf32, #tpu.memory_space<vmem>>) attributes {dimension_semantics = [#tpu.dimension_semantics<parallel>, #tpu.dimension_semantics<parallel>, #tpu.dimension_semantics<arbitrary>], iteration_bounds = array<i64: 1, 1, 1>, scalar_prefetch = 0 : i64, scratch_operands = 1 : i64, tpu.core_type = #tpu.core_type<tc>, window_params = [{transform_indices = @transform_0, window_bounds = array<i64: 16, 32>}, {transform_indices = @transform_1, window_bounds = array<i64: 32, 32>}, {transform_indices = @transform_2, window_bounds = array<i64: 1, 32>}, {transform_indices = @transform_3, window_bounds = array<i64: 16, 32>}]} {
    %c0_i32 = arith.constant 0 : i32
    %0 = arith.cmpi eq, %arg2, %c0_i32 : i32
    %1 = arith.extui %0 : i1 to i32
    %c0_i32_0 = arith.constant 0 : i32
    %2 = arith.cmpi ne, %1, %c0_i32_0 : i32
    scf.if %2 {
      %cst_10 = arith.constant 0.000000e+00 : f32
      %12 = vector.broadcast %cst_10 : f32 to vector<16x32xf32>
      %c0_11 = arith.constant 0 : index
      %c0_12 = arith.constant 0 : index
      %13 = vector.load %arg7[%c0_11, %c0_12] : memref<16x32xf32, #tpu.memory_space<vmem>>, vector<16x32xf32>
      tpu.vector_store %arg7[%c0_11, %c0_12], %12 {strides = array<i32>} : memref<16x32xf32, #tpu.memory_space<vmem>>, vector<16x32xf32>,
    } else {
    }
    %c0 = arith.constant 0 : index
    %c0_1 = arith.constant 0 : index
    %3 = vector.load %arg3[%c0, %c0_1] : memref<16x32xbf16, #tpu.memory_space<vmem>>, vector<16x32xbf16>
    %c0_2 = arith.constant 0 : index
    %c0_3 = arith.constant 0 : index
    %4 = vector.load %arg7[%c0_2, %c0_3] : memref<16x32xf32, #tpu.memory_space<vmem>>, vector<16x32xf32>
    %c0_4 = arith.constant 0 : index
    %c0_5 = arith.constant 0 : index
    %5 = vector.load %arg4[%c0_4, %c0_5] : memref<32x32xbf16, #tpu.memory_space<vmem>>, vector<32x32xbf16>
    %cst = arith.constant dense<0.000000e+00> : vector<16x32xf32>
    %6 = tpu.matmul %3, %5, %cst {dimension_numbers = #tpu.dot_dimension_numbers<[1], [0], [0], [1], [0, 0, 1, 1], [], []>} : vector<16x32xbf16>, vector<32x32xbf16>, vector<16x32xf32> -> vector<16x32xf32>
    %7 = arith.addf %4, %6 : vector<16x32xf32>
    %c0_6 = arith.constant 0 : index
    %c0_7 = arith.constant 0 : index
    %8 = vector.load %arg7[%c0_6, %c0_7] : memref<16x32xf32, #tpu.memory_space<vmem>>, vector<16x32xf32>
    tpu.vector_store %arg7[%c0_6, %c0_7], %7 {strides = array<i32>} : memref<16x32xf32, #tpu.memory_space<vmem>>, vector<16x32xf32>,
    %c0_i32_8 = arith.constant 0 : i32
    %9 = arith.cmpi eq, %arg2, %c0_i32_8 : i32
    %10 = arith.extui %9 : i1 to i32
    %c0_i32_9 = arith.constant 0 : i32
    %11 = arith.cmpi ne, %10, %c0_i32_9 : i32
    scf.if %11 {
      %c0_10 = arith.constant 0 : index
      %c0_11 = arith.constant 0 : index
      %12 = vector.load %arg7[%c0_10, %c0_11] : memref<16x32xf32, #tpu.memory_space<vmem>>, vector<16x32xf32>
      %c0_12 = arith.constant 0 : index
      %c0_13 = arith.constant 0 : index
      %13 = vector.load %arg5[%c0_12, %c0_13] : memref<1x32xf32, #tpu.memory_space<vmem>>, vector<1x32xf32>
      %14 = vector.broadcast %13 : vector<1x32xf32> to vector<16x32xf32>
      %15 = arith.addf %12, %14 : vector<16x32xf32>
      %16 = arith.truncf %15 : vector<16x32xf32> to vector<16x32xbf16>
      %c0_14 = arith.constant 0 : index
      %c0_15 = arith.constant 0 : index
      %17 = vector.load %arg6[%c0_14, %c0_15] : memref<16x32xbf16, #tpu.memory_space<vmem>>, vector<16x32xbf16>
      tpu.vector_store %arg6[%c0_14, %c0_15], %16 {strides = array<i32>} : memref<16x32xbf16, #tpu.memory_space<vmem>>, vector<16x32xbf16>,
    } else {
    }
    return
  }
  func.func @transform_0(%arg0: i32, %arg1: i32, %arg2: i32) -> (i32, i32) {
    %c0_i32 = arith.constant 0 : i32
    return %arg0, %arg2 : i32, i32
  }
  func.func @transform_1(%arg0: i32, %arg1: i32, %arg2: i32) -> (i32, i32) {
    %c0_i32 = arith.constant 0 : i32
    return %arg2, %arg1 : i32, i32
  }
  func.func @transform_2(%arg0: i32, %arg1: i32, %arg2: i32) -> (i32, i32) {
    %c0_i32 = arith.constant 0 : i32
    %c0_i32_0 = arith.constant 0 : i32
    return %c0_i32, %arg1 : i32, i32
  }
  func.func @transform_3(%arg0: i32, %arg1: i32, %arg2: i32) -> (i32, i32) {
    %c0_i32 = arith.constant 0 : i32
    return %arg0, %arg1 : i32, i32
  }
}

module attributes {stable_mosaic.version = 11 : i64} {
  func.func @_flash_attn_kernel(%arg0: i32, %arg1: i32, %arg2: i32, %arg3: memref<1x8x32xbf16, #tpu.memory_space<vmem>>, %arg4: memref<1x8x32xbf16, #tpu.memory_space<vmem>>, %arg5: memref<1x8x32xbf16, #tpu.memory_space<vmem>>, %arg6: memref<1x1x8xf32, #tpu.memory_space<vmem>>, %arg7: memref<1x8x32xbf16, #tpu.memory_space<vmem>>, %arg8: memref<4x8x1xf32, #tpu.memory_space<vmem>>, %arg9: memref<4x8x1xf32, #tpu.memory_space<vmem>>, %arg10: memref<4x8x8xf32, #tpu.memory_space<vmem>>) attributes {dimension_semantics = [#tpu.dimension_semantics<parallel>, #tpu.dimension_semantics<parallel>, #tpu.dimension_semantics<arbitrary>], iteration_bounds = array<i64: 2, 1, 1>, scalar_prefetch = 0 : i64, scratch_operands = 3 : i64, tpu.core_type = #tpu.core_type<tc>, window_params = [{transform_indices = @transform_0, window_bounds = array<i64: 1, 8, 32>}, {transform_indices = @transform_1, window_bounds = array<i64: 1, 8, 32>}, {transform_indices = @transform_2, window_bounds = array<i64: 1, 8, 32>}, {transform_indices = @transform_3, window_bounds = array<i64: 1, 1, 8>}, {transform_indices = @transform_4, window_bounds = array<i64: 1, 8, 32>}]} {
    %c0_i32 = arith.constant 0 : i32
    %0 = arith.cmpi eq, %arg2, %c0_i32 : i32
    %1 = arith.extui %0 : i1 to i32
    %c0_i32_0 = arith.constant 0 : i32
    %2 = arith.cmpi ne, %1, %c0_i32_0 : i32
    scf.if %2 {
      %cst_101 = arith.constant 0xFF800000 : f32
      %179 = vector.broadcast %cst_101 : f32 to vector<4x8x1xf32>
      %c0_102 = arith.constant 0 : index
      %c0_103 = arith.constant 0 : index
      %c0_104 = arith.constant 0 : index
      %180 = vector.load %arg8[%c0_102, %c0_103, %c0_104] : memref<4x8x1xf32, #tpu.memory_space<vmem>>, vector<4x8x1xf32>
      tpu.vector_store %arg8[%c0_102, %c0_103, %c0_104], %179 {strides = array<i32>} : memref<4x8x1xf32, #tpu.memory_space<vmem>>, vector<4x8x1xf32>,
      %cst_105 = arith.constant 0.000000e+00 : f32
      %181 = vector.broadcast %cst_105 : f32 to vector<4x8x1xf32>
      %c0_106 = arith.constant 0 : index
      %c0_107 = arith.constant 0 : index
      %c0_108 = arith.constant 0 : index
      %182 = vector.load %arg9[%c0_106, %c0_107, %c0_108] : memref<4x8x1xf32, #tpu.memory_space<vmem>>, vector<4x8x1xf32>
      tpu.vector_store %arg9[%c0_106, %c0_107, %c0_108], %181 {strides = array<i32>} : memref<4x8x1xf32, #tpu.memory_space<vmem>>, vector<4x8x1xf32>,
      %cst_109 = arith.constant 0.000000e+00 : f32
      %183 = vector.broadcast %cst_109 : f32 to vector<4x8x8xf32>
      %c0_110 = arith.constant 0 : index
      %c0_111 = arith.constant 0 : index
      %c0_112 = arith.constant 0 : index
      %184 = vector.load %arg10[%c0_110, %c0_111, %c0_112] : memref<4x8x8xf32, #tpu.memory_space<vmem>>, vector<4x8x8xf32>
      tpu.vector_store %arg10[%c0_110, %c0_111, %c0_112], %183 {strides = array<i32>} : memref<4x8x8xf32, #tpu.memory_space<vmem>>, vector<4x8x8xf32>,
    } else {
    }
    %c0 = arith.constant 0 : index
    %c0_1 = arith.constant 0 : index
    %c0_2 = arith.constant 0 : index
    %3 = vector.load %arg3[%c0, %c0_1, %c0_2] : memref<1x8x32xbf16, #tpu.memory_space<vmem>>, vector<1x8x32xbf16>
    %4 = vector.shape_cast %3 : vector<1x8x32xbf16> to vector<8x32xbf16>
    %5 = arith.extf %4 : vector<8x32xbf16> to vector<8x32xf32>
    %cst = arith.constant 0.353553385 : f32
    %6 = vector.broadcast %cst : f32 to vector<8x32xf32>
    %7 = arith.mulf %5, %6 : vector<8x32xf32>
    %8 = arith.truncf %7 : vector<8x32xf32> to vector<8x32xbf16>
    %c0_3 = arith.constant 0 : index
    %c0_4 = arith.constant 0 : index
    %c0_5 = arith.constant 0 : index
    %9 = vector.load %arg4[%c0_3, %c0_4, %c0_5] : memref<1x8x32xbf16, #tpu.memory_space<vmem>>, vector<1x8x32xbf16>
    %10 = vector.shape_cast %9 : vector<1x8x32xbf16> to vector<8x32xbf16>
    %c0_6 = arith.constant 0 : index
    %c0_7 = arith.constant 0 : index
    %c0_8 = arith.constant 0 : index
    %11 = vector.load %arg5[%c0_6, %c0_7, %c0_8] : memref<1x8x32xbf16, #tpu.memory_space<vmem>>, vector<1x8x32xbf16>
    %12 = vector.shape_cast %11 : vector<1x8x32xbf16> to vector<8x32xbf16>
    %c0_9 = arith.constant 0 : index
    %c0_10 = arith.constant 0 : index
    %c0_11 = arith.constant 0 : index
    %13 = vector.load %arg6[%c0_9, %c0_10, %c0_11] : memref<1x1x8xf32, #tpu.memory_space<vmem>>, vector<1x1x8xf32>
    %14 = vector.shape_cast %13 : vector<1x1x8xf32> to vector<1x8xf32>
    %15 = vector.shape_cast %14 : vector<1x8xf32> to vector<1x8xf32>
    %16 = vector.broadcast %15 : vector<1x8xf32> to vector<8x8xf32>
    %c8_i32 = arith.constant 8 : i32
    %17 = arith.muli %arg1, %c8_i32 : i32
    %c8_i32_12 = arith.constant 8 : i32
    %18 = arith.muli %arg2, %c8_i32_12 : i32
    %19 = tpu.iota {dimensions = array<i32: 0>} : vector<8x8xi32>
    %20 = vector.broadcast %17 : i32 to vector<8x8xi32>
    %21 = arith.addi %20, %19 : vector<8x8xi32>
    %22 = tpu.iota {dimensions = array<i32: 1>} : vector<8x8xi32>
    %23 = vector.broadcast %18 : i32 to vector<8x8xi32>
    %24 = arith.addi %23, %22 : vector<8x8xi32>
    %25 = arith.cmpi sgt, %24, %21 : vector<8x8xi32>
    %cst_13 = arith.constant -1.000000e+30 : f32
    %26 = vector.broadcast %cst_13 : f32 to vector<8x8xf32>
    %27 = arith.select %25, %26, %16 : vector<8x8xi1>, vector<8x8xf32>
    %28 = vector.extract_strided_slice %8 {offsets = [0, 0], sizes = [8, 8], strides = [1, 1]} : vector<8x32xbf16> to vector<8x8xbf16>
    %29 = vector.extract_strided_slice %10 {offsets = [0, 0], sizes = [8, 8], strides = [1, 1]} : vector<8x32xbf16> to vector<8x8xbf16>
    %cst_14 = arith.constant dense<0.000000e+00> : vector<8x8xf32>
    %30 = tpu.matmul %28, %29, %cst_14 {dimension_numbers = #tpu.dot_dimension_numbers<[1], [1], [0], [0], [0, 0, 1, 0], [], []>} : vector<8x8xbf16>, vector<8x8xbf16>, vector<8x8xf32> -> vector<8x8xf32>
    %31 = arith.addf %30, %27 : vector<8x8xf32>
    %c0_15 = arith.constant 0 : index
    %c0_16 = arith.constant 0 : index
    %c0_17 = arith.constant 0 : index
    %32 = vector.load %arg8[%c0_15, %c0_16, %c0_17] : memref<4x8x1xf32, #tpu.memory_space<vmem>>, vector<1x8x1xf32>
    %33 = vector.shape_cast %32 : vector<1x8x1xf32> to vector<8x1xf32>
    %cst_18 = arith.constant dense<0xFF800000> : vector<8xf32>
    %34 = vector.multi_reduction <maximumf>, %31, %cst_18 [1] : vector<8x8xf32> to vector<8xf32>
    %35 = vector.shape_cast %34 : vector<8xf32> to vector<8x1xf32>
    %36 = arith.maximumf %33, %35 : vector<8x1xf32>
    %37 = arith.subf %33, %36 : vector<8x1xf32>
    %38 = math.exp %37 : vector<8x1xf32>
    %39 = vector.broadcast %36 : vector<8x1xf32> to vector<8x8xf32>
    %40 = arith.subf %31, %39 : vector<8x8xf32>
    %41 = math.exp %40 : vector<8x8xf32>
    %c0_19 = arith.constant 0 : index
    %c0_20 = arith.constant 0 : index
    %c0_21 = arith.constant 0 : index
    %42 = vector.load %arg9[%c0_19, %c0_20, %c0_21] : memref<4x8x1xf32, #tpu.memory_space<vmem>>, vector<1x8x1xf32>
    %43 = vector.shape_cast %42 : vector<1x8x1xf32> to vector<8x1xf32>
    %44 = arith.mulf %38, %43 : vector<8x1xf32>
    %cst_22 = arith.constant dense<0.000000e+00> : vector<8xf32>
    %45 = vector.multi_reduction <add>, %41, %cst_22 [1] : vector<8x8xf32> to vector<8xf32>
    %46 = vector.shape_cast %45 : vector<8xf32> to vector<8x1xf32>
    %47 = arith.addf %44, %46 : vector<8x1xf32>
    %c0_23 = arith.constant 0 : index
    %c0_24 = arith.constant 0 : index
    %c0_25 = arith.constant 0 : index
    %48 = vector.load %arg9[%c0_23, %c0_24, %c0_25] : memref<4x8x1xf32, #tpu.memory_space<vmem>>, vector<1x8x1xf32>
    %49 = vector.shape_cast %48 : vector<1x8x1xf32> to vector<8x1xf32>
    %50 = vector.shape_cast %47 : vector<8x1xf32> to vector<1x8x1xf32>
    tpu.vector_store %arg9[%c0_23, %c0_24, %c0_25], %50 {strides = array<i32>} : memref<4x8x1xf32, #tpu.memory_space<vmem>>, vector<1x8x1xf32>,
    %c0_26 = arith.constant 0 : index
    %c0_27 = arith.constant 0 : index
    %c0_28 = arith.constant 0 : index
    %51 = vector.load %arg10[%c0_26, %c0_27, %c0_28] : memref<4x8x8xf32, #tpu.memory_space<vmem>>, vector<1x8x8xf32>
    %52 = vector.shape_cast %51 : vector<1x8x8xf32> to vector<8x8xf32>
    %53 = vector.broadcast %38 : vector<8x1xf32> to vector<8x8xf32>
    %54 = arith.mulf %53, %52 : vector<8x8xf32>
    %55 = arith.truncf %41 : vector<8x8xf32> to vector<8x8xbf16>
    %56 = vector.extract_strided_slice %12 {offsets = [0, 0], sizes = [8, 8], strides = [1, 1]} : vector<8x32xbf16> to vector<8x8xbf16>
    %cst_29 = arith.constant dense<0.000000e+00> : vector<8x8xf32>
    %57 = tpu.matmul %55, %56, %cst_29 {dimension_numbers = #tpu.dot_dimension_numbers<[1], [0], [0], [1], [0, 0, 1, 1], [], []>} : vector<8x8xbf16>, vector<8x8xbf16>, vector<8x8xf32> -> vector<8x8xf32>
    %58 = arith.addf %54, %57 : vector<8x8xf32>
    %c0_30 = arith.constant 0 : index
    %c0_31 = arith.constant 0 : index
    %c0_32 = arith.constant 0 : index
    %59 = vector.load %arg10[%c0_30, %c0_31, %c0_32] : memref<4x8x8xf32, #tpu.memory_space<vmem>>, vector<1x8x8xf32>
    %60 = vector.shape_cast %59 : vector<1x8x8xf32> to vector<8x8xf32>
    %61 = vector.shape_cast %58 : vector<8x8xf32> to vector<1x8x8xf32>
    tpu.vector_store %arg10[%c0_30, %c0_31, %c0_32], %61 {strides = array<i32>} : memref<4x8x8xf32, #tpu.memory_space<vmem>>, vector<1x8x8xf32>,
    %c0_33 = arith.constant 0 : index
    %c0_34 = arith.constant 0 : index
    %c0_35 = arith.constant 0 : index
    %62 = vector.load %arg8[%c0_33, %c0_34, %c0_35] : memref<4x8x1xf32, #tpu.memory_space<vmem>>, vector<1x8x1xf32>
    %63 = vector.shape_cast %62 : vector<1x8x1xf32> to vector<8x1xf32>
    %64 = vector.shape_cast %36 : vector<8x1xf32> to vector<1x8x1xf32>
    tpu.vector_store %arg8[%c0_33, %c0_34, %c0_35], %64 {strides = array<i32>} : memref<4x8x1xf32, #tpu.memory_space<vmem>>, vector<1x8x1xf32>,
    %65 = vector.extract_strided_slice %8 {offsets = [0, 8], sizes = [8, 8], strides = [1, 1]} : vector<8x32xbf16> to vector<8x8xbf16>
    %66 = vector.extract_strided_slice %10 {offsets = [0, 8], sizes = [8, 8], strides = [1, 1]} : vector<8x32xbf16> to vector<8x8xbf16>
    %cst_36 = arith.constant dense<0.000000e+00> : vector<8x8xf32>
    %67 = tpu.matmul %65, %66, %cst_36 {dimension_numbers = #tpu.dot_dimension_numbers<[1], [1], [0], [0], [0, 0, 1, 0], [], []>} : vector<8x8xbf16>, vector<8x8xbf16>, vector<8x8xf32> -> vector<8x8xf32>
    %68 = arith.addf %67, %27 : vector<8x8xf32>
    %c1 = arith.constant 1 : index
    %c0_37 = arith.constant 0 : index
    %c0_38 = arith.constant 0 : index
    %69 = vector.load %arg8[%c1, %c0_37, %c0_38] : memref<4x8x1xf32, #tpu.memory_space<vmem>>, vector<1x8x1xf32>
    %70 = vector.shape_cast %69 : vector<1x8x1xf32> to vector<8x1xf32>
    %cst_39 = arith.constant dense<0xFF800000> : vector<8xf32>
    %71 = vector.multi_reduction <maximumf>, %68, %cst_39 [1] : vector<8x8xf32> to vector<8xf32>
    %72 = vector.shape_cast %71 : vector<8xf32> to vector<8x1xf32>
    %73 = arith.maximumf %70, %72 : vector<8x1xf32>
    %74 = arith.subf %70, %73 : vector<8x1xf32>
    %75 = math.exp %74 : vector<8x1xf32>
    %76 = vector.broadcast %73 : vector<8x1xf32> to vector<8x8xf32>
    %77 = arith.subf %68, %76 : vector<8x8xf32>
    %78 = math.exp %77 : vector<8x8xf32>
    %c1_40 = arith.constant 1 : index
    %c0_41 = arith.constant 0 : index
    %c0_42 = arith.constant 0 : index
    %79 = vector.load %arg9[%c1_40, %c0_41, %c0_42] : memref<4x8x1xf32, #tpu.memory_space<vmem>>, vector<1x8x1xf32>
    %80 = vector.shape_cast %79 : vector<1x8x1xf32> to vector<8x1xf32>
    %81 = arith.mulf %75, %80 : vector<8x1xf32>
    %cst_43 = arith.constant dense<0.000000e+00> : vector<8xf32>
    %82 = vector.multi_reduction <add>, %78, %cst_43 [1] : vector<8x8xf32> to vector<8xf32>
    %83 = vector.shape_cast %82 : vector<8xf32> to vector<8x1xf32>
    %84 = arith.addf %81, %83 : vector<8x1xf32>
    %c1_44 = arith.constant 1 : index
    %c0_45 = arith.constant 0 : index
    %c0_46 = arith.constant 0 : index
    %85 = vector.load %arg9[%c1_44, %c0_45, %c0_46] : memref<4x8x1xf32, #tpu.memory_space<vmem>>, vector<1x8x1xf32>
    %86 = vector.shape_cast %85 : vector<1x8x1xf32> to vector<8x1xf32>
    %87 = vector.shape_cast %84 : vector<8x1xf32> to vector<1x8x1xf32>
    tpu.vector_store %arg9[%c1_44, %c0_45, %c0_46], %87 {strides = array<i32>} : memref<4x8x1xf32, #tpu.memory_space<vmem>>, vector<1x8x1xf32>,
    %c1_47 = arith.constant 1 : index
    %c0_48 = arith.constant 0 : index
    %c0_49 = arith.constant 0 : index
    %88 = vector.load %arg10[%c1_47, %c0_48, %c0_49] : memref<4x8x8xf32, #tpu.memory_space<vmem>>, vector<1x8x8xf32>
    %89 = vector.shape_cast %88 : vector<1x8x8xf32> to vector<8x8xf32>
    %90 = vector.broadcast %75 : vector<8x1xf32> to vector<8x8xf32>
    %91 = arith.mulf %90, %89 : vector<8x8xf32>
    %92 = arith.truncf %78 : vector<8x8xf32> to vector<8x8xbf16>
    %93 = vector.extract_strided_slice %12 {offsets = [0, 8], sizes = [8, 8], strides = [1, 1]} : vector<8x32xbf16> to vector<8x8xbf16>
    %cst_50 = arith.constant dense<0.000000e+00> : vector<8x8xf32>
    %94 = tpu.matmul %92, %93, %cst_50 {dimension_numbers = #tpu.dot_dimension_numbers<[1], [0], [0], [1], [0, 0, 1, 1], [], []>} : vector<8x8xbf16>, vector<8x8xbf16>, vector<8x8xf32> -> vector<8x8xf32>
    %95 = arith.addf %91, %94 : vector<8x8xf32>
    %c1_51 = arith.constant 1 : index
    %c0_52 = arith.constant 0 : index
    %c0_53 = arith.constant 0 : index
    %96 = vector.load %arg10[%c1_51, %c0_52, %c0_53] : memref<4x8x8xf32, #tpu.memory_space<vmem>>, vector<1x8x8xf32>
    %97 = vector.shape_cast %96 : vector<1x8x8xf32> to vector<8x8xf32>
    %98 = vector.shape_cast %95 : vector<8x8xf32> to vector<1x8x8xf32>
    tpu.vector_store %arg10[%c1_51, %c0_52, %c0_53], %98 {strides = array<i32>} : memref<4x8x8xf32, #tpu.memory_space<vmem>>, vector<1x8x8xf32>,
    %c1_54 = arith.constant 1 : index
    %c0_55 = arith.constant 0 : index
    %c0_56 = arith.constant 0 : index
    %99 = vector.load %arg8[%c1_54, %c0_55, %c0_56] : memref<4x8x1xf32, #tpu.memory_space<vmem>>, vector<1x8x1xf32>
    %100 = vector.shape_cast %99 : vector<1x8x1xf32> to vector<8x1xf32>
    %101 = vector.shape_cast %73 : vector<8x1xf32> to vector<1x8x1xf32>
    tpu.vector_store %arg8[%c1_54, %c0_55, %c0_56], %101 {strides = array<i32>} : memref<4x8x1xf32, #tpu.memory_space<vmem>>, vector<1x8x1xf32>,
    %102 = vector.extract_strided_slice %8 {offsets = [0, 16], sizes = [8, 8], strides = [1, 1]} : vector<8x32xbf16> to vector<8x8xbf16>
    %103 = vector.extract_strided_slice %10 {offsets = [0, 16], sizes = [8, 8], strides = [1, 1]} : vector<8x32xbf16> to vector<8x8xbf16>
    %cst_57 = arith.constant dense<0.000000e+00> : vector<8x8xf32>
    %104 = tpu.matmul %102, %103, %cst_57 {dimension_numbers = #tpu.dot_dimension_numbers<[1], [1], [0], [0], [0, 0, 1, 0], [], []>} : vector<8x8xbf16>, vector<8x8xbf16>, vector<8x8xf32> -> vector<8x8xf32>
    %105 = arith.addf %104, %27 : vector<8x8xf32>
    %c2 = arith.constant 2 : index
    %c0_58 = arith.constant 0 : index
    %c0_59 = arith.constant 0 : index
    %106 = vector.load %arg8[%c2, %c0_58, %c0_59] : memref<4x8x1xf32, #tpu.memory_space<vmem>>, vector<1x8x1xf32>
    %107 = vector.shape_cast %106 : vector<1x8x1xf32> to vector<8x1xf32>
    %cst_60 = arith.constant dense<0xFF800000> : vector<8xf32>
    %108 = vector.multi_reduction <maximumf>, %105, %cst_60 [1] : vector<8x8xf32> to vector<8xf32>
    %109 = vector.shape_cast %108 : vector<8xf32> to vector<8x1xf32>
    %110 = arith.maximumf %107, %109 : vector<8x1xf32>
    %111 = arith.subf %107, %110 : vector<8x1xf32>
    %112 = math.exp %111 : vector<8x1xf32>
    %113 = vector.broadcast %110 : vector<8x1xf32> to vector<8x8xf32>
    %114 = arith.subf %105, %113 : vector<8x8xf32>
    %115 = math.exp %114 : vector<8x8xf32>
    %c2_61 = arith.constant 2 : index
    %c0_62 = arith.constant 0 : index
    %c0_63 = arith.constant 0 : index
    %116 = vector.load %arg9[%c2_61, %c0_62, %c0_63] : memref<4x8x1xf32, #tpu.memory_space<vmem>>, vector<1x8x1xf32>
    %117 = vector.shape_cast %116 : vector<1x8x1xf32> to vector<8x1xf32>
    %118 = arith.mulf %112, %117 : vector<8x1xf32>
    %cst_64 = arith.constant dense<0.000000e+00> : vector<8xf32>
    %119 = vector.multi_reduction <add>, %115, %cst_64 [1] : vector<8x8xf32> to vector<8xf32>
    %120 = vector.shape_cast %119 : vector<8xf32> to vector<8x1xf32>
    %121 = arith.addf %118, %120 : vector<8x1xf32>
    %c2_65 = arith.constant 2 : index
    %c0_66 = arith.constant 0 : index
    %c0_67 = arith.constant 0 : index
    %122 = vector.load %arg9[%c2_65, %c0_66, %c0_67] : memref<4x8x1xf32, #tpu.memory_space<vmem>>, vector<1x8x1xf32>
    %123 = vector.shape_cast %122 : vector<1x8x1xf32> to vector<8x1xf32>
    %124 = vector.shape_cast %121 : vector<8x1xf32> to vector<1x8x1xf32>
    tpu.vector_store %arg9[%c2_65, %c0_66, %c0_67], %124 {strides = array<i32>} : memref<4x8x1xf32, #tpu.memory_space<vmem>>, vector<1x8x1xf32>,
    %c2_68 = arith.constant 2 : index
    %c0_69 = arith.constant 0 : index
    %c0_70 = arith.constant 0 : index
    %125 = vector.load %arg10[%c2_68, %c0_69, %c0_70] : memref<4x8x8xf32, #tpu.memory_space<vmem>>, vector<1x8x8xf32>
    %126 = vector.shape_cast %125 : vector<1x8x8xf32> to vector<8x8xf32>
    %127 = vector.broadcast %112 : vector<8x1xf32> to vector<8x8xf32>
    %128 = arith.mulf %127, %126 : vector<8x8xf32>
    %129 = arith.truncf %115 : vector<8x8xf32> to vector<8x8xbf16>
    %130 = vector.extract_strided_slice %12 {offsets = [0, 16], sizes = [8, 8], strides = [1, 1]} : vector<8x32xbf16> to vector<8x8xbf16>
    %cst_71 = arith.constant dense<0.000000e+00> : vector<8x8xf32>
    %131 = tpu.matmul %129, %130, %cst_71 {dimension_numbers = #tpu.dot_dimension_numbers<[1], [0], [0], [1], [0, 0, 1, 1], [], []>} : vector<8x8xbf16>, vector<8x8xbf16>, vector<8x8xf32> -> vector<8x8xf32>
    %132 = arith.addf %128, %131 : vector<8x8xf32>
    %c2_72 = arith.constant 2 : index
    %c0_73 = arith.constant 0 : index
    %c0_74 = arith.constant 0 : index
    %133 = vector.load %arg10[%c2_72, %c0_73, %c0_74] : memref<4x8x8xf32, #tpu.memory_space<vmem>>, vector<1x8x8xf32>
    %134 = vector.shape_cast %133 : vector<1x8x8xf32> to vector<8x8xf32>
    %135 = vector.shape_cast %132 : vector<8x8xf32> to vector<1x8x8xf32>
    tpu.vector_store %arg10[%c2_72, %c0_73, %c0_74], %135 {strides = array<i32>} : memref<4x8x8xf32, #tpu.memory_space<vmem>>, vector<1x8x8xf32>,
    %c2_75 = arith.constant 2 : index
    %c0_76 = arith.constant 0 : index
    %c0_77 = arith.constant 0 : index
    %136 = vector.load %arg8[%c2_75, %c0_76, %c0_77] : memref<4x8x1xf32, #tpu.memory_space<vmem>>, vector<1x8x1xf32>
    %137 = vector.shape_cast %136 : vector<1x8x1xf32> to vector<8x1xf32>
    %138 = vector.shape_cast %110 : vector<8x1xf32> to vector<1x8x1xf32>
    tpu.vector_store %arg8[%c2_75, %c0_76, %c0_77], %138 {strides = array<i32>} : memref<4x8x1xf32, #tpu.memory_space<vmem>>, vector<1x8x1xf32>,
    %139 = vector.extract_strided_slice %8 {offsets = [0, 24], sizes = [8, 8], strides = [1, 1]} : vector<8x32xbf16> to vector<8x8xbf16>
    %140 = vector.extract_strided_slice %10 {offsets = [0, 24], sizes = [8, 8], strides = [1, 1]} : vector<8x32xbf16> to vector<8x8xbf16>
    %cst_78 = arith.constant dense<0.000000e+00> : vector<8x8xf32>
    %141 = tpu.matmul %139, %140, %cst_78 {dimension_numbers = #tpu.dot_dimension_numbers<[1], [1], [0], [0], [0, 0, 1, 0], [], []>} : vector<8x8xbf16>, vector<8x8xbf16>, vector<8x8xf32> -> vector<8x8xf32>
    %142 = arith.addf %141, %27 : vector<8x8xf32>
    %c3 = arith.constant 3 : index
    %c0_79 = arith.constant 0 : index
    %c0_80 = arith.constant 0 : index
    %143 = vector.load %arg8[%c3, %c0_79, %c0_80] : memref<4x8x1xf32, #tpu.memory_space<vmem>>, vector<1x8x1xf32>
    %144 = vector.shape_cast %143 : vector<1x8x1xf32> to vector<8x1xf32>
    %cst_81 = arith.constant dense<0xFF800000> : vector<8xf32>
    %145 = vector.multi_reduction <maximumf>, %142, %cst_81 [1] : vector<8x8xf32> to vector<8xf32>
    %146 = vector.shape_cast %145 : vector<8xf32> to vector<8x1xf32>
    %147 = arith.maximumf %144, %146 : vector<8x1xf32>
    %148 = arith.subf %144, %147 : vector<8x1xf32>
    %149 = math.exp %148 : vector<8x1xf32>
    %150 = vector.broadcast %147 : vector<8x1xf32> to vector<8x8xf32>
    %151 = arith.subf %142, %150 : vector<8x8xf32>
    %152 = math.exp %151 : vector<8x8xf32>
    %c3_82 = arith.constant 3 : index
    %c0_83 = arith.constant 0 : index
    %c0_84 = arith.constant 0 : index
    %153 = vector.load %arg9[%c3_82, %c0_83, %c0_84] : memref<4x8x1xf32, #tpu.memory_space<vmem>>, vector<1x8x1xf32>
    %154 = vector.shape_cast %153 : vector<1x8x1xf32> to vector<8x1xf32>
    %155 = arith.mulf %149, %154 : vector<8x1xf32>
    %cst_85 = arith.constant dense<0.000000e+00> : vector<8xf32>
    %156 = vector.multi_reduction <add>, %152, %cst_85 [1] : vector<8x8xf32> to vector<8xf32>
    %157 = vector.shape_cast %156 : vector<8xf32> to vector<8x1xf32>
    %158 = arith.addf %155, %157 : vector<8x1xf32>
    %c3_86 = arith.constant 3 : index
    %c0_87 = arith.constant 0 : index
    %c0_88 = arith.constant 0 : index
    %159 = vector.load %arg9[%c3_86, %c0_87, %c0_88] : memref<4x8x1xf32, #tpu.memory_space<vmem>>, vector<1x8x1xf32>
    %160 = vector.shape_cast %159 : vector<1x8x1xf32> to vector<8x1xf32>
    %161 = vector.shape_cast %158 : vector<8x1xf32> to vector<1x8x1xf32>
    tpu.vector_store %arg9[%c3_86, %c0_87, %c0_88], %161 {strides = array<i32>} : memref<4x8x1xf32, #tpu.memory_space<vmem>>, vector<1x8x1xf32>,
    %c3_89 = arith.constant 3 : index
    %c0_90 = arith.constant 0 : index
    %c0_91 = arith.constant 0 : index
    %162 = vector.load %arg10[%c3_89, %c0_90, %c0_91] : memref<4x8x8xf32, #tpu.memory_space<vmem>>, vector<1x8x8xf32>
    %163 = vector.shape_cast %162 : vector<1x8x8xf32> to vector<8x8xf32>
    %164 = vector.broadcast %149 : vector<8x1xf32> to vector<8x8xf32>
    %165 = arith.mulf %164, %163 : vector<8x8xf32>
    %166 = arith.truncf %152 : vector<8x8xf32> to vector<8x8xbf16>
    %167 = vector.extract_strided_slice %12 {offsets = [0, 24], sizes = [8, 8], strides = [1, 1]} : vector<8x32xbf16> to vector<8x8xbf16>
    %cst_92 = arith.constant dense<0.000000e+00> : vector<8x8xf32>
    %168 = tpu.matmul %166, %167, %cst_92 {dimension_numbers = #tpu.dot_dimension_numbers<[1], [0], [0], [1], [0, 0, 1, 1], [], []>} : vector<8x8xbf16>, vector<8x8xbf16>, vector<8x8xf32> -> vector<8x8xf32>
    %169 = arith.addf %165, %168 : vector<8x8xf32>
    %c3_93 = arith.constant 3 : index
    %c0_94 = arith.constant 0 : index
    %c0_95 = arith.constant 0 : index
    %170 = vector.load %arg10[%c3_93, %c0_94, %c0_95] : memref<4x8x8xf32, #tpu.memory_space<vmem>>, vector<1x8x8xf32>
    %171 = vector.shape_cast %170 : vector<1x8x8xf32> to vector<8x8xf32>
    %172 = vector.shape_cast %169 : vector<8x8xf32> to vector<1x8x8xf32>
    tpu.vector_store %arg10[%c3_93, %c0_94, %c0_95], %172 {strides = array<i32>} : memref<4x8x8xf32, #tpu.memory_space<vmem>>, vector<1x8x8xf32>,
    %c3_96 = arith.constant 3 : index
    %c0_97 = arith.constant 0 : index
    %c0_98 = arith.constant 0 : index
    %173 = vector.load %arg8[%c3_96, %c0_97, %c0_98] : memref<4x8x1xf32, #tpu.memory_space<vmem>>, vector<1x8x1xf32>
    %174 = vector.shape_cast %173 : vector<1x8x1xf32> to vector<8x1xf32>
    %175 = vector.shape_cast %147 : vector<8x1xf32> to vector<1x8x1xf32>
    tpu.vector_store %arg8[%c3_96, %c0_97, %c0_98], %175 {strides = array<i32>} : memref<4x8x1xf32, #tpu.memory_space<vmem>>, vector<1x8x1xf32>,
    %c0_i32_99 = arith.constant 0 : i32
    %176 = arith.cmpi eq, %arg2, %c0_i32_99 : i32
    %177 = arith.extui %176 : i1 to i32
    %c0_i32_100 = arith.constant 0 : i32
    %178 = arith.cmpi ne, %177, %c0_i32_100 : i32
    scf.if %178 {
      %c0_101 = arith.constant 0 : index
      %c0_102 = arith.constant 0 : index
      %c0_103 = arith.constant 0 : index
      %179 = vector.load %arg9[%c0_101, %c0_102, %c0_103] : memref<4x8x1xf32, #tpu.memory_space<vmem>>, vector<1x8x1xf32>
      %180 = vector.shape_cast %179 : vector<1x8x1xf32> to vector<8x1xf32>
      %181 = tpu.reciprocal %180 {approx = true} : vector<8x1xf32> -> vector<8x1xf32>
      %c0_104 = arith.constant 0 : index
      %c0_105 = arith.constant 0 : index
      %c0_106 = arith.constant 0 : index
      %182 = vector.load %arg10[%c0_104, %c0_105, %c0_106] : memref<4x8x8xf32, #tpu.memory_space<vmem>>, vector<1x8x8xf32>
      %183 = vector.shape_cast %182 : vector<1x8x8xf32> to vector<8x8xf32>
      %184 = vector.broadcast %181 : vector<8x1xf32> to vector<8x8xf32>
      %185 = arith.mulf %183, %184 : vector<8x8xf32>
      %186 = arith.truncf %185 : vector<8x8xf32> to vector<8x8xbf16>
      %c0_107 = arith.constant 0 : index
      %c0_108 = arith.constant 0 : index
      %c0_109 = arith.constant 0 : index
      %187 = vector.load %arg7[%c0_107, %c0_108, %c0_109] : memref<1x8x32xbf16, #tpu.memory_space<vmem>>, vector<1x8x8xbf16>
      %188 = vector.shape_cast %187 : vector<1x8x8xbf16> to vector<8x8xbf16>
      %189 = vector.shape_cast %186 : vector<8x8xbf16> to vector<1x8x8xbf16>
      tpu.vector_store %arg7[%c0_107, %c0_108, %c0_109], %189 {strides = array<i32>} : memref<1x8x32xbf16, #tpu.memory_space<vmem>>, vector<1x8x8xbf16>,
      %c1_110 = arith.constant 1 : index
      %c0_111 = arith.constant 0 : index
      %c0_112 = arith.constant 0 : index
      %190 = vector.load %arg9[%c1_110, %c0_111, %c0_112] : memref<4x8x1xf32, #tpu.memory_space<vmem>>, vector<1x8x1xf32>
      %191 = vector.shape_cast %190 : vector<1x8x1xf32> to vector<8x1xf32>
      %192 = tpu.reciprocal %191 {approx = true} : vector<8x1xf32> -> vector<8x1xf32>
      %c1_113 = arith.constant 1 : index
      %c0_114 = arith.constant 0 : index
      %c0_115 = arith.constant 0 : index
      %193 = vector.load %arg10[%c1_113, %c0_114, %c0_115] : memref<4x8x8xf32, #tpu.memory_space<vmem>>, vector<1x8x8xf32>
      %194 = vector.shape_cast %193 : vector<1x8x8xf32> to vector<8x8xf32>
      %195 = vector.broadcast %192 : vector<8x1xf32> to vector<8x8xf32>
      %196 = arith.mulf %194, %195 : vector<8x8xf32>
      %197 = arith.truncf %196 : vector<8x8xf32> to vector<8x8xbf16>
      %c0_116 = arith.constant 0 : index
      %c0_117 = arith.constant 0 : index
      %c8 = arith.constant 8 : index
      %198 = vector.load %arg7[%c0_116, %c0_117, %c8] : memref<1x8x32xbf16, #tpu.memory_space<vmem>>, vector<1x8x8xbf16>
      %199 = vector.shape_cast %198 : vector<1x8x8xbf16> to vector<8x8xbf16>
      %200 = vector.shape_cast %197 : vector<8x8xbf16> to vector<1x8x8xbf16>
      tpu.vector_store %arg7[%c0_116, %c0_117, %c8], %200 {strides = array<i32>} : memref<1x8x32xbf16, #tpu.memory_space<vmem>>, vector<1x8x8xbf16>,
      %c2_118 = arith.constant 2 : index
      %c0_119 = arith.constant 0 : index
      %c0_120 = arith.constant 0 : index
      %201 = vector.load %arg9[%c2_118, %c0_119, %c0_120] : memref<4x8x1xf32, #tpu.memory_space<vmem>>, vector<1x8x1xf32>
      %202 = vector.shape_cast %201 : vector<1x8x1xf32> to vector<8x1xf32>
      %203 = tpu.reciprocal %202 {approx = true} : vector<8x1xf32> -> vector<8x1xf32>
      %c2_121 = arith.constant 2 : index
      %c0_122 = arith.constant 0 : index
      %c0_123 = arith.constant 0 : index
      %204 = vector.load %arg10[%c2_121, %c0_122, %c0_123] : memref<4x8x8xf32, #tpu.memory_space<vmem>>, vector<1x8x8xf32>
      %205 = vector.shape_cast %204 : vector<1x8x8xf32> to vector<8x8xf32>
      %206 = vector.broadcast %203 : vector<8x1xf32> to vector<8x8xf32>
      %207 = arith.mulf %205, %206 : vector<8x8xf32>
      %208 = arith.truncf %207 : vector<8x8xf32> to vector<8x8xbf16>
      %c0_124 = arith.constant 0 : index
      %c0_125 = arith.constant 0 : index
      %c16 = arith.constant 16 : index
      %209 = vector.load %arg7[%c0_124, %c0_125, %c16] : memref<1x8x32xbf16, #tpu.memory_space<vmem>>, vector<1x8x8xbf16>
      %210 = vector.shape_cast %209 : vector<1x8x8xbf16> to vector<8x8xbf16>
      %211 = vector.shape_cast %208 : vector<8x8xbf16> to vector<1x8x8xbf16>
      tpu.vector_store %arg7[%c0_124, %c0_125, %c16], %211 {strides = array<i32>} : memref<1x8x32xbf16, #tpu.memory_space<vmem>>, vector<1x8x8xbf16>,
      %c3_126 = arith.constant 3 : index
      %c0_127 = arith.constant 0 : index
      %c0_128 = arith.constant 0 : index
      %212 = vector.load %arg9[%c3_126, %c0_127, %c0_128] : memref<4x8x1xf32, #tpu.memory_space<vmem>>, vector<1x8x1xf32>
      %213 = vector.shape_cast %212 : vector<1x8x1xf32> to vector<8x1xf32>
      %214 = tpu.reciprocal %213 {approx = true} : vector<8x1xf32> -> vector<8x1xf32>
      %c3_129 = arith.constant 3 : index
      %c0_130 = arith.constant 0 : index
      %c0_131 = arith.constant 0 : index
      %215 = vector.load %arg10[%c3_129, %c0_130, %c0_131] : memref<4x8x8xf32, #tpu.memory_space<vmem>>, vector<1x8x8xf32>
      %216 = vector.shape_cast %215 : vector<1x8x8xf32> to vector<8x8xf32>
      %217 = vector.broadcast %214 : vector<8x1xf32> to vector<8x8xf32>
      %218 = arith.mulf %216, %217 : vector<8x8xf32>
      %219 = arith.truncf %218 : vector<8x8xf32> to vector<8x8xbf16>
      %c0_132 = arith.constant 0 : index
      %c0_133 = arith.constant 0 : index
      %c24 = arith.constant 24 : index
      %220 = vector.load %arg7[%c0_132, %c0_133, %c24] : memref<1x8x32xbf16, #tpu.memory_space<vmem>>, vector<1x8x8xbf16>
      %221 = vector.shape_cast %220 : vector<1x8x8xbf16> to vector<8x8xbf16>
      %222 = vector.shape_cast %219 : vector<8x8xbf16> to vector<1x8x8xbf16>
      tpu.vector_store %arg7[%c0_132, %c0_133, %c24], %222 {strides = array<i32>} : memref<1x8x32xbf16, #tpu.memory_space<vmem>>, vector<1x8x8xbf16>,
    } else {
    }
    return
  }
  func.func @transform_0(%arg0: i32, %arg1: i32, %arg2: i32) -> (i32, i32, i32) {
    %c0_i32 = arith.constant 0 : i32
    %c0_i32_0 = arith.constant 0 : i32
    return %arg0, %arg1, %c0_i32 : i32, i32, i32
  }
  func.func @transform_1(%arg0: i32, %arg1: i32, %arg2: i32) -> (i32, i32, i32) {
    %c0_i32 = arith.constant 0 : i32
    %c0_i32_0 = arith.constant 0 : i32
    return %arg0, %arg2, %c0_i32 : i32, i32, i32
  }
  func.func @transform_2(%arg0: i32, %arg1: i32, %arg2: i32) -> (i32, i32, i32) {
    %c0_i32 = arith.constant 0 : i32
    %c0_i32_0 = arith.constant 0 : i32
    return %arg0, %arg2, %c0_i32 : i32, i32, i32
  }
  func.func @transform_3(%arg0: i32, %arg1: i32, %arg2: i32) -> (i32, i32, i32) {
    %c0_i32 = arith.constant 0 : i32
    %c0_i32_0 = arith.constant 0 : i32
    return %arg0, %c0_i32, %arg2 : i32, i32, i32
  }
  func.func @transform_4(%arg0: i32, %arg1: i32, %arg2: i32) -> (i32, i32, i32) {
    %c0_i32 = arith.constant 0 : i32
    %c0_i32_0 = arith.constant 0 : i32
    return %arg0, %arg1, %c0_i32 : i32, i32, i32
  }
}

module attributes {stable_mosaic.version = 11 : i64} {
  func.func @_fused_linear_kernel(%arg0: i32, %arg1: i32, %arg2: i32, %arg3: memref<16x32xbf16, #tpu.memory_space<vmem>>, %arg4: memref<32x256xbf16, #tpu.memory_space<vmem>>, %arg5: memref<16x256xf32, #tpu.memory_space<vmem>>, %arg6: memref<16x256xf32, #tpu.memory_space<vmem>>) attributes {dimension_semantics = [#tpu.dimension_semantics<parallel>, #tpu.dimension_semantics<parallel>, #tpu.dimension_semantics<arbitrary>], iteration_bounds = array<i64: 1, 1, 1>, scalar_prefetch = 0 : i64, scratch_operands = 1 : i64, tpu.core_type = #tpu.core_type<tc>, window_params = [{transform_indices = @transform_0, window_bounds = array<i64: 16, 32>}, {transform_indices = @transform_1, window_bounds = array<i64: 32, 256>}, {transform_indices = @transform_2, window_bounds = array<i64: 16, 256>}]} {
    %c0_i32 = arith.constant 0 : i32
    %0 = arith.cmpi eq, %arg2, %c0_i32 : i32
    %1 = arith.extui %0 : i1 to i32
    %c0_i32_0 = arith.constant 0 : i32
    %2 = arith.cmpi ne, %1, %c0_i32_0 : i32
    scf.if %2 {
      %cst_10 = arith.constant 0.000000e+00 : f32
      %12 = vector.broadcast %cst_10 : f32 to vector<16x256xf32>
      %c0_11 = arith.constant 0 : index
      %c0_12 = arith.constant 0 : index
      %13 = vector.load %arg6[%c0_11, %c0_12] : memref<16x256xf32, #tpu.memory_space<vmem>>, vector<16x256xf32>
      tpu.vector_store %arg6[%c0_11, %c0_12], %12 {strides = array<i32>} : memref<16x256xf32, #tpu.memory_space<vmem>>, vector<16x256xf32>,
    } else {
    }
    %c0 = arith.constant 0 : index
    %c0_1 = arith.constant 0 : index
    %3 = vector.load %arg3[%c0, %c0_1] : memref<16x32xbf16, #tpu.memory_space<vmem>>, vector<16x32xbf16>
    %c0_2 = arith.constant 0 : index
    %c0_3 = arith.constant 0 : index
    %4 = vector.load %arg6[%c0_2, %c0_3] : memref<16x256xf32, #tpu.memory_space<vmem>>, vector<16x256xf32>
    %c0_4 = arith.constant 0 : index
    %c0_5 = arith.constant 0 : index
    %5 = vector.load %arg4[%c0_4, %c0_5] : memref<32x256xbf16, #tpu.memory_space<vmem>>, vector<32x256xbf16>
    %cst = arith.constant dense<0.000000e+00> : vector<16x256xf32>
    %6 = tpu.matmul %3, %5, %cst {dimension_numbers = #tpu.dot_dimension_numbers<[1], [0], [0], [1], [0, 0, 1, 1], [], []>} : vector<16x32xbf16>, vector<32x256xbf16>, vector<16x256xf32> -> vector<16x256xf32>
    %7 = arith.addf %4, %6 : vector<16x256xf32>
    %c0_6 = arith.constant 0 : index
    %c0_7 = arith.constant 0 : index
    %8 = vector.load %arg6[%c0_6, %c0_7] : memref<16x256xf32, #tpu.memory_space<vmem>>, vector<16x256xf32>
    tpu.vector_store %arg6[%c0_6, %c0_7], %7 {strides = array<i32>} : memref<16x256xf32, #tpu.memory_space<vmem>>, vector<16x256xf32>,
    %c0_i32_8 = arith.constant 0 : i32
    %9 = arith.cmpi eq, %arg2, %c0_i32_8 : i32
    %10 = arith.extui %9 : i1 to i32
    %c0_i32_9 = arith.constant 0 : i32
    %11 = arith.cmpi ne, %10, %c0_i32_9 : i32
    scf.if %11 {
      %c0_10 = arith.constant 0 : index
      %c0_11 = arith.constant 0 : index
      %12 = vector.load %arg6[%c0_10, %c0_11] : memref<16x256xf32, #tpu.memory_space<vmem>>, vector<16x256xf32>
      %c0_12 = arith.constant 0 : index
      %c0_13 = arith.constant 0 : index
      %13 = vector.load %arg5[%c0_12, %c0_13] : memref<16x256xf32, #tpu.memory_space<vmem>>, vector<16x256xf32>
      tpu.vector_store %arg5[%c0_12, %c0_13], %12 {strides = array<i32>} : memref<16x256xf32, #tpu.memory_space<vmem>>, vector<16x256xf32>,
    } else {
    }
    return
  }
  func.func @transform_0(%arg0: i32, %arg1: i32, %arg2: i32) -> (i32, i32) {
    %c0_i32 = arith.constant 0 : i32
    return %arg0, %arg2 : i32, i32
  }
  func.func @transform_1(%arg0: i32, %arg1: i32, %arg2: i32) -> (i32, i32) {
    %c0_i32 = arith.constant 0 : i32
    return %arg2, %arg1 : i32, i32
  }
  func.func @transform_2(%arg0: i32, %arg1: i32, %arg2: i32) -> (i32, i32) {
    %c0_i32 = arith.constant 0 : i32
    return %arg0, %arg1 : i32, i32
  }
}

</mosaic_0001>

<llo_original>
// kernel: transformer_forward.29
$region0: #{transformer_forward.29}
  #allocation0 [shape = 'u32[]', space=smem, size = 0x4, offset = 0x4, fixed_abs, tag = 'smem constant byte address 0x4 - core index']
  #allocation1 [shape = 'u32[144,128]{1,0:T(1,128)}', space=vmem, size = 0x12000, scoped, tag = 'internal scratch']
  %s0 = inlined_call_operand.vmem [shape: bf16[16,32], index: 0, kind: input, shape index: {}]
  %s1 = inlined_call_operand.vmem [shape: bf16[32,32], index: 1, kind: input, shape index: {}]
  %s2 = inlined_call_operand.vmem [shape: f32[1,32], index: 2, kind: input, shape index: {}]
  %s3 = inlined_call_operand.vmem [shape: bf16[16,32], index: 3, kind: input, shape index: {}]
  %s4 = inlined_call_operand.vmem [shape: f32[1,32], index: 4, kind: input, shape index: {}]
  %s5 = inlined_call_operand.vmem [shape: f32[1,32], index: 5, kind: input, shape index: {}]
  %s6 = inlined_call_operand.vmem [shape: bf16[16,32], index: 6, kind: output, shape index: {}]
  %s7 = sld [smem:[#allocation0]]
  $region34: #{transformer_forward.29} parent=0
    _
  %s9 = ssub.s32 1, %s7
  %s10 = scalar_select 0, %s9, %s7
  // Predicated region
  $region2: #{transformer_forward.29} parent=0 // pred_check
    _
  $region3: #{transformer_forward.29} parent=0 // pred_check_branch
    %12 = sbr.rel (0) target = $region5
  $region4: #{transformer_forward.29} parent=0 // pred_region
    _
  $region5: #{transformer_forward.29} parent=0 // pred_fallthru
    _
  // Predicated region
  $region6: #{transformer_forward.29} parent=0 // pred_check
    _
  $region7: #{transformer_forward.29} parent=0 // pred_check_branch
    %14 = sbr.rel (0) target = $region9
  $region8: #{transformer_forward.29} parent=0 // pred_region
    _
  $region9: #{transformer_forward.29} parent=0 // pred_fallthru
    _
  // Predicated region
  $region10: #{transformer_forward.29} parent=0 // pred_check
    _
  $region11: #{transformer_forward.29} parent=0 // pred_check_branch
    %16 = sbr.rel (0) target = $region13
  $region12: #{transformer_forward.29} parent=0 // pred_region
    _
  $region13: #{transformer_forward.29} parent=0 // pred_fallthru
    _
  // Predicated region
  $region14: #{transformer_forward.29} parent=0 // pred_check
    _
  $region15: #{transformer_forward.29} parent=0 // pred_check_branch
    %18 = sbr.rel (0) target = $region17
  $region16: #{transformer_forward.29} parent=0 // pred_region
    _
  $region17: #{transformer_forward.29} parent=0 // pred_fallthru
    _
  // Predicated region
  $region18: #{transformer_forward.29} parent=0 // pred_check
    _
  $region19: #{transformer_forward.29} parent=0 // pred_check_branch
    %20 = sbr.rel (0) target = $region21
  $region20: #{transformer_forward.29} parent=0 // pred_region
    _
  $region21: #{transformer_forward.29} parent=0 // pred_fallthru
    _
  // Predicated region
  $region22: #{transformer_forward.29} parent=0 // pred_check
    _
  $region23: #{transformer_forward.29} parent=0 // pred_check_branch
    %22 = sbr.rel (0) target = $region25
  $region24: #{transformer_forward.29} parent=0 // pred_region
    _
  $region25: #{transformer_forward.29} parent=0 // pred_fallthru
    _
  %v24 = vld [vmem:[%s0] sm:$0xf]
  %v25 = vld [vmem:[%s0 + $0x4] sm:$0xf]
  %v26 = vld [vmem:[%s1] sm:$0xf]
  %v27 = vld [vmem:[%s1 + $0x4] sm:$0xf]
  %v28 = vld [vmem:[%s1 + $0x8] sm:$0xf]
  %v29 = vld [vmem:[%s1 + $0xc] sm:$0xf]
  %v30 = vld [vmem:[%s2] sm:$0x1]
  %v32 = vlaneseq
  %v33 = vshrl.u32 %v32, 7
  %v34 = vsub.s32 0, %v33
  %v35 = vrot.slane %v30, %v34
  %v39 = vunpack.c.l.b16 %v24
  %v40 = vunpack.c.l.b16 %v25
  %v41 = vpack.c.b16 %v40, %v39
  %v46 = vunpack.c.l.b16 %v26
  %v47 = vunpack.c.l.b16 %v27
  %v48 = vunpack.c.l.b16 %v28
  %v49 = vunpack.c.l.b16 %v29
  %v50 = vpack.c.b16 %v47, %v46
  %v51 = vpack.c.b16 %v49, %v48
  %vm54 = vcmask 261120
  %v56 = vsel %vm54, %v41, 0
  %58 = vmatprep.subr.bf16.mxu0 0
  %59 = vmatpush1.bf16.msra.mxu0 %v50
  %60 = vmatprep.subr.bf16.mxu0 0
  %61 = vmatpush1.bf16.msra.mxu0 %v51
  %62 = vmatprep.subr.bf16.mxu0 0
  %63 = vmatpush1.bf16.msra.mxu0 0
  %64 = vmatprep.subr.bf16.mxu0 0
  %65 = vmatpush1.bf16.msra.mxu0 0
  %66 = vmatprep.subr.bf16.mxu0 0
  %67 = vmatpush1.bf16.msra.mxu0 0
  %68 = vmatprep.subr.bf16.mxu0 0
  %69 = vmatpush1.bf16.msra.mxu0 0
  %70 = vmatprep.subr.bf16.mxu0 0
  %71 = vmatpush1.bf16.msra.mxu0 0
  %72 = vmatprep.subr.bf16.mxu0 0
  %73 = vmatpush1.bf16.msra.mxu0 0
  %74 = vmatprep.subr.bf16.mxu0 0
  %75 = vmatpush1.bf16.msra.mxu0 0
  %76 = vmatprep.subr.bf16.mxu0 0
  %77 = vmatpush1.bf16.msra.mxu0 0
  %78 = vmatprep.subr.bf16.mxu0 0
  %79 = vmatpush1.bf16.msra.mxu0 0
  %80 = vmatprep.subr.bf16.mxu0 0
  %81 = vmatpush1.bf16.msra.mxu0 0
  %82 = vmatprep.subr.bf16.mxu0 0
  %83 = vmatpush1.bf16.msra.mxu0 0
  %84 = vmatprep.subr.bf16.mxu0 0
  %85 = vmatpush1.bf16.msra.mxu0 0
  %86 = vmatprep.subr.bf16.mxu0 0
  %87 = vmatpush1.bf16.msra.mxu0 0
  %88 = vmatprep.subr.bf16.mxu0 0
  %89 = vmatpush1.bf16.msra.mxu0 0
  %90 = vmatprep.mubr.bf16.mxu0 0
  %91 = vmatmul.mubr.bf16.gmra.mrb[0].mxu0 %v56
  %v92 = vpop.f32.mrb[0].mxu0
  %v93 = vadd.f32 %v35, %v92
  %v94 = vpop.f32.mrb[0].mxu0
  %v95 = vpop.f32.mrb[0].mxu0
  %v96 = vadd.f32 %v35, %v95
  %v97 = vpop.f32.mrb[0].mxu0
  %98 = vdwg.mxu0
  %v99 = vld [vmem:[%s3] sm:$0xf]
  %v100 = vld [vmem:[%s3 + $0x4] sm:$0xf]
  %v101 = vunpack.c.l.bf16 %v99
  %v102 = vunpack.c.l.bf16 %v100
  %v103 = vadd.f32 %v93, %v101
  %v104 = vadd.f32 %v96, %v102
  %v105 = vsel %vm54, %v103, 0.0
  %106 = vadd.xlane.f32.xlu0 %v105
  %v107 = vpop.xlane.xlu0 %106
  %v108 = vsel %vm54, %v104, 0.0
  %109 = vadd.xlane.f32.xlu0 %v108
  %v110 = vpop.xlane.xlu0 %109
  %v111 = vrcp.pop 32.0
  %v112 = vmul.f32 %v107, %v111
  %v113 = vmul.f32 %v110, %v111
  %v114 = vsub.f32 %v103, %v112
  %v115 = vsub.f32 %v104, %v113
  %v116 = vmul.f32 %v114, %v114
  %v117 = vmul.f32 %v115, %v115
  %v118 = vsel %vm54, %v116, 0.0
  %119 = vadd.xlane.f32.xlu0 %v118
  %v120 = vpop.xlane.xlu0 %119
  %v121 = vsel %vm54, %v117, 0.0
  %122 = vadd.xlane.f32.xlu0 %v121
  %v123 = vpop.xlane.xlu0 %122
  %v124 = vmul.f32 %v120, %v111
  %v125 = vmul.f32 %v123, %v111
  %v126 = vadd.f32 %v124, 1e-05
  %v127 = vadd.f32 %v125, 1e-05
  %v128 = vrsqrt.pop %v126
  %v129 = vrsqrt.pop %v127
  %v130 = vmul.f32 %v114, %v128
  %v131 = vmul.f32 %v115, %v129
  %v132 = vld [vmem:[%s4] sm:$0x1]
  %v134 = vlaneseq
  %v135 = vshrl.u32 %v134, 7
  %v136 = vsub.s32 0, %v135
  %v137 = vrot.slane %v132, %v136
  %v139 = vmul.f32 %v130, %v137
  %v140 = vmul.f32 %v131, %v137
  %v141 = vld [vmem:[%s5] sm:$0x1]
  %v143 = vlaneseq
  %v144 = vshrl.u32 %v143, 7
  %v145 = vsub.s32 0, %v144
  %v146 = vrot.slane %v141, %v145
  %v148 = vadd.f32 %v139, %v146
  %v149 = vadd.f32 %v140, %v146
  %v150 = vpack.c.bf16 %v149, %v148
  %v152 = vunpack.c.l.b16 %v150
  %v153 = vunpack.c.h.b16 %v150
  %v154 = vpack.c.b16 %v152, %v152
  %v155 = vpack.c.b16 %v153, %v153
  %vm158 = vcmask 257024
  %159 = vst.msk [vmem:[%s6] sm:$0xf] %vm158, %v154
  %160 = vst.msk [vmem:[%s6 + $0x4] sm:$0xf] %vm158, %v155
  // Predicated region
  $region26: #{transformer_forward.29} parent=0 // pred_check
    _
  $region27: #{transformer_forward.29} parent=0 // pred_check_branch
    %162 = sbr.rel (0) target = $region29
  $region28: #{transformer_forward.29} parent=0 // pred_region
    _
  $region29: #{transformer_forward.29} parent=0 // pred_fallthru
    _
  // Predicated region
  $region30: #{transformer_forward.29} parent=0 // pred_check
    _
  $region31: #{transformer_forward.29} parent=0 // pred_check_branch
    %164 = sbr.rel (0) target = $region33
  $region32: #{transformer_forward.29} parent=0 // pred_region
    _
  $region33: #{transformer_forward.29} parent=0 // pred_fallthru
    _

// kernel: transformer_forward.27
$region0: #{transformer_forward.27}
  #allocation0 [shape = 'u32[]', space=smem, size = 0x4, offset = 0x4, fixed_abs, tag = 'smem constant byte address 0x4 - core index']
  #allocation1 [shape = 'u32[144,128]{1,0:T(1,128)}', space=vmem, size = 0x12000, scoped, tag = 'internal scratch']
  #allocation2 [shape = 'f32[16,32]{1,0:T(8,128)}', space=vmem, size = 0x2000, scoped, tag = 'scratch operand']
  #allocation3 [shape = 'f32[16,32]{1,0:T(8,128)}', space=vmem, size = 0x2000, scoped, tag = 'scratch operand']
  #allocation4 [shape = 'f32[16,32]{1,0:T(8,128)}', space=vmem, size = 0x2000, scoped, tag = 'scratch operand']
  %s0 = inlined_call_operand.vmem [shape: bf16[16,32], index: 0, kind: input, shape index: {}]
  %s1 = inlined_call_operand.vmem [shape: bf16[32,32], index: 1, kind: input, shape index: {}]
  %s2 = inlined_call_operand.vmem [shape: bf16[32,32], index: 2, kind: input, shape index: {}]
  %s3 = inlined_call_operand.vmem [shape: bf16[32,32], index: 3, kind: input, shape index: {}]
  %s4 = inlined_call_operand.vmem [shape: f32[1,32], index: 4, kind: input, shape index: {}]
  %s5 = inlined_call_operand.vmem [shape: f32[1,32], index: 5, kind: input, shape index: {}]
  %s6 = inlined_call_operand.vmem [shape: f32[1,32], index: 6, kind: input, shape index: {}]
  %s7 = inlined_call_operand.vmem [shape: bf16[16,32], index: 7, kind: output, shape index: {0}]
  %s8 = inlined_call_operand.vmem [shape: bf16[16,32], index: 8, kind: output, shape index: {1}]
  %s9 = inlined_call_operand.vmem [shape: bf16[16,32], index: 9, kind: output, shape index: {2}]
  %10 = xla_tuple %s7, %s8, %s9
  %s11 = sld [smem:[#allocation0]]
  $region62: #{transformer_forward.27} parent=0
    _
  %s13 = ssub.s32 1, %s11
  %s14 = scalar_select 0, %s13, %s11
  // Predicated region
  $region2: #{transformer_forward.27} parent=0 // pred_check
    _
  $region3: #{transformer_forward.27} parent=0 // pred_check_branch
    %16 = sbr.rel (0) target = $region5
  $region4: #{transformer_forward.27} parent=0 // pred_region
    _
  $region5: #{transformer_forward.27} parent=0 // pred_fallthru
    _
  // Predicated region
  $region6: #{transformer_forward.27} parent=0 // pred_check
    _
  $region7: #{transformer_forward.27} parent=0 // pred_check_branch
    %18 = sbr.rel (0) target = $region9
  $region8: #{transformer_forward.27} parent=0 // pred_region
    _
  $region9: #{transformer_forward.27} parent=0 // pred_fallthru
    _
  // Predicated region
  $region10: #{transformer_forward.27} parent=0 // pred_check
    _
  $region11: #{transformer_forward.27} parent=0 // pred_check_branch
    %20 = sbr.rel (0) target = $region13
  $region12: #{transformer_forward.27} parent=0 // pred_region
    _
  $region13: #{transformer_forward.27} parent=0 // pred_fallthru
    _
  // Predicated region
  $region14: #{transformer_forward.27} parent=0 // pred_check
    _
  $region15: #{transformer_forward.27} parent=0 // pred_check_branch
    %22 = sbr.rel (0) target = $region17
  $region16: #{transformer_forward.27} parent=0 // pred_region
    _
  $region17: #{transformer_forward.27} parent=0 // pred_fallthru
    _
  // Predicated region
  $region18: #{transformer_forward.27} parent=0 // pred_check
    _
  $region19: #{transformer_forward.27} parent=0 // pred_check_branch
    %24 = sbr.rel (0) target = $region21
  $region20: #{transformer_forward.27} parent=0 // pred_region
    _
  $region21: #{transformer_forward.27} parent=0 // pred_fallthru
    _
  // Predicated region
  $region22: #{transformer_forward.27} parent=0 // pred_check
    _
  $region23: #{transformer_forward.27} parent=0 // pred_check_branch
    %26 = sbr.rel (0) target = $region25
  $region24: #{transformer_forward.27} parent=0 // pred_region
    _
  $region25: #{transformer_forward.27} parent=0 // pred_fallthru
    _
  // Predicated region
  $region26: #{transformer_forward.27} parent=0 // pred_check
    _
  $region27: #{transformer_forward.27} parent=0 // pred_check_branch
    %28 = sbr.rel (0) target = $region29
  $region28: #{transformer_forward.27} parent=0 // pred_region
    _
  $region29: #{transformer_forward.27} parent=0 // pred_fallthru
    _
  %p30 = scmp.eq.s32.totalorder 0, 0
  // Predicated region
  $region30: #{transformer_forward.27} parent=0 // pred_check
    %p31 = pneg %p30
  $region31: #{transformer_forward.27} parent=0 // pred_check_branch
    %33 = sbr.rel (%p31) target = $region33
  $region32: #{transformer_forward.27} parent=0 // pred_region
    %vm34 = vcmask 261120
    %35 = vst.msk [vmem:[#allocation2] sm:$0xff] %vm34, 0.0
    %36 = vst.msk [vmem:[#allocation2 + $0x8] sm:$0xff] %vm34, 0.0
    %37 = vst.msk [vmem:[#allocation3] sm:$0xff] %vm34, 0.0
    %38 = vst.msk [vmem:[#allocation3 + $0x8] sm:$0xff] %vm34, 0.0
    %39 = vst.msk [vmem:[#allocation4] sm:$0xff] %vm34, 0.0
    %40 = vst.msk [vmem:[#allocation4 + $0x8] sm:$0xff] %vm34, 0.0
  $region33: #{transformer_forward.27} parent=0 // pred_fallthru
    _
  %v41 = vld [vmem:[%s0] sm:$0xf]
  %v42 = vld [vmem:[%s0 + $0x4] sm:$0xf]
  %v43 = vld [vmem:[#allocation2] sm:$0xff]
  %v44 = vld [vmem:[#allocation2 + $0x8] sm:$0xff]
  %v45 = vld [vmem:[%s1] sm:$0xf]
  %v46 = vld [vmem:[%s1 + $0x4] sm:$0xf]
  %v47 = vld [vmem:[%s1 + $0x8] sm:$0xf]
  %v48 = vld [vmem:[%s1 + $0xc] sm:$0xf]
  %v51 = vunpack.c.l.b16 %v41
  %v52 = vunpack.c.l.b16 %v42
  %v53 = vpack.c.b16 %v52, %v51
  %v58 = vunpack.c.l.b16 %v45
  %v59 = vunpack.c.l.b16 %v46
  %v60 = vunpack.c.l.b16 %v47
  %v61 = vunpack.c.l.b16 %v48
  %v62 = vpack.c.b16 %v59, %v58
  %v63 = vpack.c.b16 %v61, %v60
  %vm66 = vcmask 261120
  %v68 = vsel %vm66, %v53, 0
  %70 = vmatprep.subr.bf16.mxu0 0
  %71 = vmatpush1.bf16.msra.mxu0 %v62
  %72 = vmatprep.subr.bf16.mxu0 0
  %73 = vmatpush1.bf16.msra.mxu0 %v63
  %74 = vmatprep.subr.bf16.mxu0 0
  %75 = vmatpush1.bf16.msra.mxu0 0
  %76 = vmatprep.subr.bf16.mxu0 0
  %77 = vmatpush1.bf16.msra.mxu0 0
  %78 = vmatprep.subr.bf16.mxu0 0
  %79 = vmatpush1.bf16.msra.mxu0 0
  %80 = vmatprep.subr.bf16.mxu0 0
  %81 = vmatpush1.bf16.msra.mxu0 0
  %82 = vmatprep.subr.bf16.mxu0 0
  %83 = vmatpush1.bf16.msra.mxu0 0
  %84 = vmatprep.subr.bf16.mxu0 0
  %85 = vmatpush1.bf16.msra.mxu0 0
  %86 = vmatprep.subr.bf16.mxu0 0
  %87 = vmatpush1.bf16.msra.mxu0 0
  %88 = vmatprep.subr.bf16.mxu0 0
  %89 = vmatpush1.bf16.msra.mxu0 0
  %90 = vmatprep.subr.bf16.mxu0 0
  %91 = vmatpush1.bf16.msra.mxu0 0
  %92 = vmatprep.subr.bf16.mxu0 0
  %93 = vmatpush1.bf16.msra.mxu0 0
  %94 = vmatprep.subr.bf16.mxu0 0
  %95 = vmatpush1.bf16.msra.mxu0 0
  %96 = vmatprep.subr.bf16.mxu0 0
  %97 = vmatpush1.bf16.msra.mxu0 0
  %98 = vmatprep.subr.bf16.mxu0 0
  %99 = vmatpush1.bf16.msra.mxu0 0
  %100 = vmatprep.subr.bf16.mxu0 0
  %101 = vmatpush1.bf16.msra.mxu0 0
  %102 = vmatprep.mubr.bf16.mxu0 0
  %103 = vmatmul.mubr.bf16.gmra.mrb[0].mxu0 %v68
  %v104 = vpop.f32.mrb[0].mxu0
  %v105 = vadd.f32 0.0, %v104
  %v106 = vpop.f32.mrb[0].mxu0
  %v107 = vpop.f32.mrb[0].mxu0
  %v108 = vadd.f32 0.0, %v107
  %v109 = vpop.f32.mrb[0].mxu0
  %110 = vdwg.mxu0
  %v111 = vadd.f32 %v43, %v105
  %v112 = vadd.f32 %v44, %v108
  %113 = vst.msk [vmem:[#allocation2] sm:$0xff] %vm66, %v111
  %114 = vst.msk [vmem:[#allocation2 + $0x8] sm:$0xff] %vm66, %v112
  %v115 = vld [vmem:[#allocation3] sm:$0xff]
  %v116 = vld [vmem:[#allocation3 + $0x8] sm:$0xff]
  %v117 = vld [vmem:[%s2] sm:$0xf]
  %v118 = vld [vmem:[%s2 + $0x4] sm:$0xf]
  %v119 = vld [vmem:[%s2 + $0x8] sm:$0xf]
  %v120 = vld [vmem:[%s2 + $0xc] sm:$0xf]
  %v125 = vunpack.c.l.b16 %v117
  %v126 = vunpack.c.l.b16 %v118
  %v127 = vunpack.c.l.b16 %v119
  %v128 = vunpack.c.l.b16 %v120
  %v129 = vpack.c.b16 %v126, %v125
  %v130 = vpack.c.b16 %v128, %v127
  %133 = vmatprep.subr.bf16.mxu0 0
  %134 = vmatpush1.bf16.msra.mxu0 %v129
  %135 = vmatprep.subr.bf16.mxu0 0
  %136 = vmatpush1.bf16.msra.mxu0 %v130
  %137 = vmatprep.subr.bf16.mxu0 0
  %138 = vmatpush1.bf16.msra.mxu0 0
  %139 = vmatprep.subr.bf16.mxu0 0
  %140 = vmatpush1.bf16.msra.mxu0 0
  %141 = vmatprep.subr.bf16.mxu0 0
  %142 = vmatpush1.bf16.msra.mxu0 0
  %143 = vmatprep.subr.bf16.mxu0 0
  %144 = vmatpush1.bf16.msra.mxu0 0
  %145 = vmatprep.subr.bf16.mxu0 0
  %146 = vmatpush1.bf16.msra.mxu0 0
  %147 = vmatprep.subr.bf16.mxu0 0
  %148 = vmatpush1.bf16.msra.mxu0 0
  %149 = vmatprep.subr.bf16.mxu0 0
  %150 = vmatpush1.bf16.msra.mxu0 0
  %151 = vmatprep.subr.bf16.mxu0 0
  %152 = vmatpush1.bf16.msra.mxu0 0
  %153 = vmatprep.subr.bf16.mxu0 0
  %154 = vmatpush1.bf16.msra.mxu0 0
  %155 = vmatprep.subr.bf16.mxu0 0
  %156 = vmatpush1.bf16.msra.mxu0 0
  %157 = vmatprep.subr.bf16.mxu0 0
  %158 = vmatpush1.bf16.msra.mxu0 0
  %159 = vmatprep.subr.bf16.mxu0 0
  %160 = vmatpush1.bf16.msra.mxu0 0
  %161 = vmatprep.subr.bf16.mxu0 0
  %162 = vmatpush1.bf16.msra.mxu0 0
  %163 = vmatprep.subr.bf16.mxu0 0
  %164 = vmatpush1.bf16.msra.mxu0 0
  %165 = vmatprep.mubr.bf16.mxu0 0
  %166 = vmatmul.mubr.bf16.gmra.mrb[0].mxu0 %v68
  %v167 = vpop.f32.mrb[0].mxu0
  %v168 = vadd.f32 0.0, %v167
  %v169 = vpop.f32.mrb[0].mxu0
  %v170 = vpop.f32.mrb[0].mxu0
  %v171 = vadd.f32 0.0, %v170
  %v172 = vpop.f32.mrb[0].mxu0
  %173 = vdwg.mxu0
  %v174 = vadd.f32 %v115, %v168
  %v175 = vadd.f32 %v116, %v171
  %176 = vst.msk [vmem:[#allocation3] sm:$0xff] %vm66, %v174
  %177 = vst.msk [vmem:[#allocation3 + $0x8] sm:$0xff] %vm66, %v175
  %v178 = vld [vmem:[#allocation4] sm:$0xff]
  %v179 = vld [vmem:[#allocation4 + $0x8] sm:$0xff]
  %v180 = vld [vmem:[%s3] sm:$0xf]
  %v181 = vld [vmem:[%s3 + $0x4] sm:$0xf]
  %v182 = vld [vmem:[%s3 + $0x8] sm:$0xf]
  %v183 = vld [vmem:[%s3 + $0xc] sm:$0xf]
  %v188 = vunpack.c.l.b16 %v180
  %v189 = vunpack.c.l.b16 %v181
  %v190 = vunpack.c.l.b16 %v182
  %v191 = vunpack.c.l.b16 %v183
  %v192 = vpack.c.b16 %v189, %v188
  %v193 = vpack.c.b16 %v191, %v190
  %196 = vmatprep.subr.bf16.mxu0 0
  %197 = vmatpush1.bf16.msra.mxu0 %v192
  %198 = vmatprep.subr.bf16.mxu0 0
  %199 = vmatpush1.bf16.msra.mxu0 %v193
  %200 = vmatprep.subr.bf16.mxu0 0
  %201 = vmatpush1.bf16.msra.mxu0 0
  %202 = vmatprep.subr.bf16.mxu0 0
  %203 = vmatpush1.bf16.msra.mxu0 0
  %204 = vmatprep.subr.bf16.mxu0 0
  %205 = vmatpush1.bf16.msra.mxu0 0
  %206 = vmatprep.subr.bf16.mxu0 0
  %207 = vmatpush1.bf16.msra.mxu0 0
  %208 = vmatprep.subr.bf16.mxu0 0
  %209 = vmatpush1.bf16.msra.mxu0 0
  %210 = vmatprep.subr.bf16.mxu0 0
  %211 = vmatpush1.bf16.msra.mxu0 0
  %212 = vmatprep.subr.bf16.mxu0 0
  %213 = vmatpush1.bf16.msra.mxu0 0
  %214 = vmatprep.subr.bf16.mxu0 0
  %215 = vmatpush1.bf16.msra.mxu0 0
  %216 = vmatprep.subr.bf16.mxu0 0
  %217 = vmatpush1.bf16.msra.mxu0 0
  %218 = vmatprep.subr.bf16.mxu0 0
  %219 = vmatpush1.bf16.msra.mxu0 0
  %220 = vmatprep.subr.bf16.mxu0 0
  %221 = vmatpush1.bf16.msra.mxu0 0
  %222 = vmatprep.subr.bf16.mxu0 0
  %223 = vmatpush1.bf16.msra.mxu0 0
  %224 = vmatprep.subr.bf16.mxu0 0
  %225 = vmatpush1.bf16.msra.mxu0 0
  %226 = vmatprep.subr.bf16.mxu0 0
  %227 = vmatpush1.bf16.msra.mxu0 0
  %228 = vmatprep.mubr.bf16.mxu0 0
  %229 = vmatmul.mubr.bf16.gmra.mrb[0].mxu0 %v68
  %v230 = vpop.f32.mrb[0].mxu0
  %v231 = vadd.f32 0.0, %v230
  %v232 = vpop.f32.mrb[0].mxu0
  %v233 = vpop.f32.mrb[0].mxu0
  %v234 = vadd.f32 0.0, %v233
  %v235 = vpop.f32.mrb[0].mxu0
  %236 = vdwg.mxu0
  %v237 = vadd.f32 %v178, %v231
  %v238 = vadd.f32 %v179, %v234
  %239 = vst.msk [vmem:[#allocation4] sm:$0xff] %vm66, %v237
  %240 = vst.msk [vmem:[#allocation4 + $0x8] sm:$0xff] %vm66, %v238
  // Predicated region
  $region34: #{transformer_forward.27} parent=0 // pred_check
    %p241 = pneg %p30
  $region35: #{transformer_forward.27} parent=0 // pred_check_branch
    %243 = sbr.rel (%p241) target = $region37
  $region36: #{transformer_forward.27} parent=0 // pred_region
    %v244 = vld [vmem:[#allocation2] sm:$0xff]
    %v245 = vld [vmem:[#allocation2 + $0x8] sm:$0xff]
    %v246 = vld [vmem:[%s4] sm:$0x1]
    %v248 = vlaneseq
    %v249 = vshrl.u32 %v248, 7
    %v250 = vsub.s32 0, %v249
    %v251 = vrot.slane %v246, %v250
    %v253 = vadd.f32 %v244, %v251
    %v254 = vadd.f32 %v245, %v251
    %v255 = vpack.c.bf16 %v254, %v253
    %v257 = vunpack.c.l.b16 %v255
    %v258 = vunpack.c.h.b16 %v255
    %v259 = vpack.c.b16 %v257, %v257
    %v260 = vpack.c.b16 %v258, %v258
    %vm263 = vcmask 257024
    %264 = vst.msk [vmem:[%s7] sm:$0xf] %vm263, %v259
    %265 = vst.msk [vmem:[%s7 + $0x4] sm:$0xf] %vm263, %v260
    %v266 = vld [vmem:[#allocation3] sm:$0xff]
    %v267 = vld [vmem:[#allocation3 + $0x8] sm:$0xff]
    %v268 = vld [vmem:[%s5] sm:$0x1]
    %v270 = vlaneseq
    %v271 = vshrl.u32 %v270, 7
    %v272 = vsub.s32 0, %v271
    %v273 = vrot.slane %v268, %v272
    %v275 = vadd.f32 %v266, %v273
    %v276 = vadd.f32 %v267, %v273
    %v277 = vpack.c.bf16 %v276, %v275
    %v279 = vunpack.c.l.b16 %v277
    %v280 = vunpack.c.h.b16 %v277
    %v281 = vpack.c.b16 %v279, %v279
    %v282 = vpack.c.b16 %v280, %v280
    %285 = vst.msk [vmem:[%s8] sm:$0xf] %vm263, %v281
    %286 = vst.msk [vmem:[%s8 + $0x4] sm:$0xf] %vm263, %v282
    %v287 = vld [vmem:[#allocation4] sm:$0xff]
    %v288 = vld [vmem:[#allocation4 + $0x8] sm:$0xff]
    %v289 = vld [vmem:[%s6] sm:$0x1]
    %v291 = vlaneseq
    %v292 = vshrl.u32 %v291, 7
    %v293 = vsub.s32 0, %v292
    %v294 = vrot.slane %v289, %v293
    %v296 = vadd.f32 %v287, %v294
    %v297 = vadd.f32 %v288, %v294
    %v298 = vpack.c.bf16 %v297, %v296
    %v300 = vunpack.c.l.b16 %v298
    %v301 = vunpack.c.h.b16 %v298
    %v302 = vpack.c.b16 %v300, %v300
    %v303 = vpack.c.b16 %v301, %v301
    %306 = vst.msk [vmem:[%s9] sm:$0xf] %vm263, %v302
    %307 = vst.msk [vmem:[%s9 + $0x4] sm:$0xf] %vm263, %v303
  $region37: #{transformer_forward.27} parent=0 // pred_fallthru
    _
  // Predicated region
  $region38: #{transformer_forward.27} parent=0 // pred_check
    _
  $region39: #{transformer_forward.27} parent=0 // pred_check_branch
    %309 = sbr.rel (0) target = $region41
  $region40: #{transformer_forward.27} parent=0 // pred_region
    _
  $region41: #{transformer_forward.27} parent=0 // pred_fallthru
    _
  // Predicated region
  $region42: #{transformer_forward.27} parent=0 // pred_check
    _
  $region43: #{transformer_forward.27} parent=0 // pred_check_branch
    %311 = sbr.rel (0) target = $region45
  $region44: #{transformer_forward.27} parent=0 // pred_region
    _
  $region45: #{transformer_forward.27} parent=0 // pred_fallthru
    _
  // Predicated region
  $region46: #{transformer_forward.27} parent=0 // pred_check
    _
  $region47: #{transformer_forward.27} parent=0 // pred_check_branch
    %313 = sbr.rel (0) target = $region49
  $region48: #{transformer_forward.27} parent=0 // pred_region
    _
  $region49: #{transformer_forward.27} parent=0 // pred_fallthru
    _
  // Predicated region
  $region50: #{transformer_forward.27} parent=0 // pred_check
    _
  $region51: #{transformer_forward.27} parent=0 // pred_check_branch
    %315 = sbr.rel (0) target = $region53
  $region52: #{transformer_forward.27} parent=0 // pred_region
    _
  $region53: #{transformer_forward.27} parent=0 // pred_fallthru
    _
  // Predicated region
  $region54: #{transformer_forward.27} parent=0 // pred_check
    _
  $region55: #{transformer_forward.27} parent=0 // pred_check_branch
    %317 = sbr.rel (0) target = $region57
  $region56: #{transformer_forward.27} parent=0 // pred_region
    _
  $region57: #{transformer_forward.27} parent=0 // pred_fallthru
    _
  // Predicated region
  $region58: #{transformer_forward.27} parent=0 // pred_check
    _
  $region59: #{transformer_forward.27} parent=0 // pred_check_branch
    %319 = sbr.rel (0) target = $region61
  $region60: #{transformer_forward.27} parent=0 // pred_region
    _
  $region61: #{transformer_forward.27} parent=0 // pred_fallthru
    _

// kernel: transformer_forward.30
$region0: #{transformer_forward.30}
  #allocation0 [shape = 'u32[]', space=smem, size = 0x4, offset = 0x4, fixed_abs, tag = 'smem constant byte address 0x4 - core index']
  #allocation1 [shape = 'u32[144,128]{1,0:T(1,128)}', space=vmem, size = 0x12000, scoped, tag = 'internal scratch']
  #allocation2 [shape = 'f32[16,32]{1,0:T(8,128)}', space=vmem, size = 0x2000, scoped, tag = 'scratch operand']
  %s0 = inlined_call_operand.vmem [shape: bf16[16,32], index: 0, kind: input, shape index: {}]
  %s1 = inlined_call_operand.vmem [shape: bf16[32,64], index: 1, kind: input, shape index: {}]
  %s2 = inlined_call_operand.vmem [shape: f32[1,64], index: 2, kind: input, shape index: {}]
  %s3 = inlined_call_operand.vmem [shape: bf16[64,32], index: 3, kind: input, shape index: {}]
  %s4 = inlined_call_operand.vmem [shape: f32[1,32], index: 4, kind: input, shape index: {}]
  %s5 = inlined_call_operand.vmem [shape: f32[1,32], index: 5, kind: input, shape index: {}]
  %s6 = inlined_call_operand.vmem [shape: f32[1,32], index: 6, kind: input, shape index: {}]
  %s7 = inlined_call_operand.vmem [shape: bf16[16,32], index: 7, kind: output, shape index: {}]
  %s8 = sld [smem:[#allocation0]]
  $region46: #{transformer_forward.30} parent=0
    _
  %s10 = ssub.s32 1, %s8
  %s11 = scalar_select 0, %s10, %s8
  // Predicated region
  $region2: #{transformer_forward.30} parent=0 // pred_check
    _
  $region3: #{transformer_forward.30} parent=0 // pred_check_branch
    %13 = sbr.rel (0) target = $region5
  $region4: #{transformer_forward.30} parent=0 // pred_region
    _
  $region5: #{transformer_forward.30} parent=0 // pred_fallthru
    _
  // Predicated region
  $region6: #{transformer_forward.30} parent=0 // pred_check
    _
  $region7: #{transformer_forward.30} parent=0 // pred_check_branch
    %15 = sbr.rel (0) target = $region9
  $region8: #{transformer_forward.30} parent=0 // pred_region
    _
  $region9: #{transformer_forward.30} parent=0 // pred_fallthru
    _
  // Predicated region
  $region10: #{transformer_forward.30} parent=0 // pred_check
    _
  $region11: #{transformer_forward.30} parent=0 // pred_check_branch
    %17 = sbr.rel (0) target = $region13
  $region12: #{transformer_forward.30} parent=0 // pred_region
    _
  $region13: #{transformer_forward.30} parent=0 // pred_fallthru
    _
  // Predicated region
  $region14: #{transformer_forward.30} parent=0 // pred_check
    _
  $region15: #{transformer_forward.30} parent=0 // pred_check_branch
    %19 = sbr.rel (0) target = $region17
  $region16: #{transformer_forward.30} parent=0 // pred_region
    _
  $region17: #{transformer_forward.30} parent=0 // pred_fallthru
    _
  // Predicated region
  $region18: #{transformer_forward.30} parent=0 // pred_check
    _
  $region19: #{transformer_forward.30} parent=0 // pred_check_branch
    %21 = sbr.rel (0) target = $region21
  $region20: #{transformer_forward.30} parent=0 // pred_region
    _
  $region21: #{transformer_forward.30} parent=0 // pred_fallthru
    _
  // Predicated region
  $region22: #{transformer_forward.30} parent=0 // pred_check
    _
  $region23: #{transformer_forward.30} parent=0 // pred_check_branch
    %23 = sbr.rel (0) target = $region25
  $region24: #{transformer_forward.30} parent=0 // pred_region
    _
  $region25: #{transformer_forward.30} parent=0 // pred_fallthru
    _
  // Predicated region
  $region26: #{transformer_forward.30} parent=0 // pred_check
    _
  $region27: #{transformer_forward.30} parent=0 // pred_check_branch
    %25 = sbr.rel (0) target = $region29
  $region28: #{transformer_forward.30} parent=0 // pred_region
    _
  $region29: #{transformer_forward.30} parent=0 // pred_fallthru
    _
  %p27 = scmp.eq.s32.totalorder 0, 0
  // Predicated region
  $region30: #{transformer_forward.30} parent=0 // pred_check
    %p28 = pneg %p27
  $region31: #{transformer_forward.30} parent=0 // pred_check_branch
    %30 = sbr.rel (%p28) target = $region33
  $region32: #{transformer_forward.30} parent=0 // pred_region
    %vm31 = vcmask 261120
    %32 = vst.msk [vmem:[#allocation2] sm:$0xff] %vm31, 0.0
    %33 = vst.msk [vmem:[#allocation2 + $0x8] sm:$0xff] %vm31, 0.0
  $region33: #{transformer_forward.30} parent=0 // pred_fallthru
    _
  %v34 = vld [vmem:[%s0] sm:$0xf]
  %v35 = vld [vmem:[%s0 + $0x4] sm:$0xf]
  %v36 = vld [vmem:[%s1] sm:$0xf]
  %v37 = vld [vmem:[%s1 + $0x4] sm:$0xf]
  %v38 = vld [vmem:[%s1 + $0x8] sm:$0xf]
  %v39 = vld [vmem:[%s1 + $0xc] sm:$0xf]
  %v40 = vld [vmem:[%s2] sm:$0x1]
  %v42 = vlaneseq
  %v43 = vshrl.u32 %v42, 7
  %v44 = vsub.s32 0, %v43
  %v45 = vrot.slane %v40, %v44
  %v49 = vunpack.c.l.b16 %v34
  %v50 = vunpack.c.l.b16 %v35
  %v51 = vpack.c.b16 %v50, %v49
  %v56 = vunpack.c.l.b16 %v36
  %v57 = vunpack.c.l.b16 %v37
  %v58 = vunpack.c.l.b16 %v38
  %v59 = vunpack.c.l.b16 %v39
  %v60 = vpack.c.b16 %v57, %v56
  %v61 = vpack.c.b16 %v59, %v58
  %vm64 = vcmask 261120
  %v66 = vsel %vm64, %v51, 0
  %68 = vmatprep.subr.bf16.mxu0 0
  %69 = vmatpush1.bf16.msra.mxu0 %v60
  %70 = vmatprep.subr.bf16.mxu0 0
  %71 = vmatpush1.bf16.msra.mxu0 %v61
  %72 = vmatprep.subr.bf16.mxu0 0
  %73 = vmatpush1.bf16.msra.mxu0 0
  %74 = vmatprep.subr.bf16.mxu0 0
  %75 = vmatpush1.bf16.msra.mxu0 0
  %76 = vmatprep.subr.bf16.mxu0 0
  %77 = vmatpush1.bf16.msra.mxu0 0
  %78 = vmatprep.subr.bf16.mxu0 0
  %79 = vmatpush1.bf16.msra.mxu0 0
  %80 = vmatprep.subr.bf16.mxu0 0
  %81 = vmatpush1.bf16.msra.mxu0 0
  %82 = vmatprep.subr.bf16.mxu0 0
  %83 = vmatpush1.bf16.msra.mxu0 0
  %84 = vmatprep.subr.bf16.mxu0 0
  %85 = vmatpush1.bf16.msra.mxu0 0
  %86 = vmatprep.subr.bf16.mxu0 0
  %87 = vmatpush1.bf16.msra.mxu0 0
  %88 = vmatprep.subr.bf16.mxu0 0
  %89 = vmatpush1.bf16.msra.mxu0 0
  %90 = vmatprep.subr.bf16.mxu0 0
  %91 = vmatpush1.bf16.msra.mxu0 0
  %92 = vmatprep.subr.bf16.mxu0 0
  %93 = vmatpush1.bf16.msra.mxu0 0
  %94 = vmatprep.subr.bf16.mxu0 0
  %95 = vmatpush1.bf16.msra.mxu0 0
  %96 = vmatprep.subr.bf16.mxu0 0
  %97 = vmatpush1.bf16.msra.mxu0 0
  %98 = vmatprep.subr.bf16.mxu0 0
  %99 = vmatpush1.bf16.msra.mxu0 0
  %100 = vmatprep.mubr.bf16.mxu0 0
  %101 = vmatmul.mubr.bf16.gmra.mrb[0].mxu0 %v66
  %v102 = vpop.f32.mrb[0].mxu0
  %v103 = vadd.f32 %v45, %v102
  %v104 = vpop.f32.mrb[0].mxu0
  %v105 = vpop.f32.mrb[0].mxu0
  %v106 = vadd.f32 %v45, %v105
  %v107 = vpop.f32.mrb[0].mxu0
  %108 = vdwg.mxu0
  %v109 = vmax.f32 %v103, 0.0
  %v110 = vmax.f32 %v106, 0.0
  %v111 = vld [vmem:[#allocation2] sm:$0xff]
  %v112 = vld [vmem:[#allocation2 + $0x8] sm:$0xff]
  %v113 = vpack.c.bf16 %v110, %v109
  %v114 = vld [vmem:[%s3] sm:$0xf]
  %v115 = vld [vmem:[%s3 + $0x4] sm:$0xf]
  %v116 = vld [vmem:[%s3 + $0x8] sm:$0xf]
  %v117 = vld [vmem:[%s3 + $0xc] sm:$0xf]
  %v118 = vld [vmem:[%s3 + $0x10] sm:$0xf]
  %v119 = vld [vmem:[%s3 + $0x14] sm:$0xf]
  %v120 = vld [vmem:[%s3 + $0x18] sm:$0xf]
  %v121 = vld [vmem:[%s3 + $0x1c] sm:$0xf]
  %v130 = vunpack.c.l.b16 %v114
  %v131 = vunpack.c.l.b16 %v115
  %v132 = vunpack.c.l.b16 %v116
  %v133 = vunpack.c.l.b16 %v117
  %v134 = vunpack.c.l.b16 %v118
  %v135 = vunpack.c.l.b16 %v119
  %v136 = vunpack.c.l.b16 %v120
  %v137 = vunpack.c.l.b16 %v121
  %v138 = vpack.c.b16 %v131, %v130
  %v139 = vpack.c.b16 %v133, %v132
  %v140 = vpack.c.b16 %v135, %v134
  %v141 = vpack.c.b16 %v137, %v136
  %vm146 = vcmask 523264
  %v148 = vsel %vm146, %v113, 0
  %150 = vmatprep.subr.bf16.mxu0 0
  %151 = vmatpush1.bf16.msra.mxu0 %v138
  %152 = vmatprep.subr.bf16.mxu0 0
  %153 = vmatpush1.bf16.msra.mxu0 %v139
  %154 = vmatprep.subr.bf16.mxu0 0
  %155 = vmatpush1.bf16.msra.mxu0 %v140
  %156 = vmatprep.subr.bf16.mxu0 0
  %157 = vmatpush1.bf16.msra.mxu0 %v141
  %158 = vmatprep.subr.bf16.mxu0 0
  %159 = vmatpush1.bf16.msra.mxu0 0
  %160 = vmatprep.subr.bf16.mxu0 0
  %161 = vmatpush1.bf16.msra.mxu0 0
  %162 = vmatprep.subr.bf16.mxu0 0
  %163 = vmatpush1.bf16.msra.mxu0 0
  %164 = vmatprep.subr.bf16.mxu0 0
  %165 = vmatpush1.bf16.msra.mxu0 0
  %166 = vmatprep.subr.bf16.mxu0 0
  %167 = vmatpush1.bf16.msra.mxu0 0
  %168 = vmatprep.subr.bf16.mxu0 0
  %169 = vmatpush1.bf16.msra.mxu0 0
  %170 = vmatprep.subr.bf16.mxu0 0
  %171 = vmatpush1.bf16.msra.mxu0 0
  %172 = vmatprep.subr.bf16.mxu0 0
  %173 = vmatpush1.bf16.msra.mxu0 0
  %174 = vmatprep.subr.bf16.mxu0 0
  %175 = vmatpush1.bf16.msra.mxu0 0
  %176 = vmatprep.subr.bf16.mxu0 0
  %177 = vmatpush1.bf16.msra.mxu0 0
  %178 = vmatprep.subr.bf16.mxu0 0
  %179 = vmatpush1.bf16.msra.mxu0 0
  %180 = vmatprep.subr.bf16.mxu0 0
  %181 = vmatpush1.bf16.msra.mxu0 0
  %182 = vmatprep.mubr.bf16.mxu0 0
  %183 = vmatmul.mubr.bf16.gmra.mrb[0].mxu0 %v148
  %v184 = vpop.f32.mrb[0].mxu0
  %v185 = vadd.f32 0.0, %v184
  %v186 = vpop.f32.mrb[0].mxu0
  %v187 = vpop.f32.mrb[0].mxu0
  %v188 = vadd.f32 0.0, %v187
  %v189 = vpop.f32.mrb[0].mxu0
  %190 = vdwg.mxu0
  %v191 = vadd.f32 %v111, %v185
  %v192 = vadd.f32 %v112, %v188
  %193 = vst.msk [vmem:[#allocation2] sm:$0xff] %vm64, %v191
  %194 = vst.msk [vmem:[#allocation2 + $0x8] sm:$0xff] %vm64, %v192
  // Predicated region
  $region34: #{transformer_forward.30} parent=0 // pred_check
    %p195 = pneg %p27
  $region35: #{transformer_forward.30} parent=0 // pred_check_branch
    %197 = sbr.rel (%p195) target = $region37
  $region36: #{transformer_forward.30} parent=0 // pred_region
    %v198 = vld [vmem:[#allocation2] sm:$0xff]
    %v199 = vld [vmem:[#allocation2 + $0x8] sm:$0xff]
    %v200 = vld [vmem:[%s4] sm:$0x1]
    %v202 = vlaneseq
    %v203 = vshrl.u32 %v202, 7
    %v204 = vsub.s32 0, %v203
    %v205 = vrot.slane %v200, %v204
    %v207 = vadd.f32 %v198, %v205
    %v208 = vadd.f32 %v199, %v205
    %v209 = vunpack.c.l.bf16 %v34
    %v210 = vunpack.c.l.bf16 %v35
    %v211 = vadd.f32 %v207, %v209
    %v212 = vadd.f32 %v208, %v210
    %v213 = vsel %vm64, %v211, 0.0
    %214 = vadd.xlane.f32.xlu0 %v213
    %v215 = vpop.xlane.xlu0 %214
    %v216 = vsel %vm64, %v212, 0.0
    %217 = vadd.xlane.f32.xlu0 %v216
    %v218 = vpop.xlane.xlu0 %217
    %v219 = vrcp.pop 32.0
    %v220 = vmul.f32 %v215, %v219
    %v221 = vmul.f32 %v218, %v219
    %v222 = vsub.f32 %v211, %v220
    %v223 = vsub.f32 %v212, %v221
    %v224 = vmul.f32 %v222, %v222
    %v225 = vmul.f32 %v223, %v223
    %v226 = vsel %vm64, %v224, 0.0
    %227 = vadd.xlane.f32.xlu0 %v226
    %v228 = vpop.xlane.xlu0 %227
    %v229 = vsel %vm64, %v225, 0.0
    %230 = vadd.xlane.f32.xlu0 %v229
    %v231 = vpop.xlane.xlu0 %230
    %v232 = vmul.f32 %v228, %v219
    %v233 = vmul.f32 %v231, %v219
    %v234 = vadd.f32 %v232, 1e-05
    %v235 = vadd.f32 %v233, 1e-05
    %v236 = vrsqrt.pop %v234
    %v237 = vrsqrt.pop %v235
    %v238 = vmul.f32 %v222, %v236
    %v239 = vmul.f32 %v223, %v237
    %v240 = vld [vmem:[%s5] sm:$0x1]
    %v242 = vlaneseq
    %v243 = vshrl.u32 %v242, 7
    %v244 = vsub.s32 0, %v243
    %v245 = vrot.slane %v240, %v244
    %v247 = vmul.f32 %v238, %v245
    %v248 = vmul.f32 %v239, %v245
    %v249 = vld [vmem:[%s6] sm:$0x1]
    %v251 = vlaneseq
    %v252 = vshrl.u32 %v251, 7
    %v253 = vsub.s32 0, %v252
    %v254 = vrot.slane %v249, %v253
    %v256 = vadd.f32 %v247, %v254
    %v257 = vadd.f32 %v248, %v254
    %v258 = vpack.c.bf16 %v257, %v256
    %v260 = vunpack.c.l.b16 %v258
    %v261 = vunpack.c.h.b16 %v258
    %v262 = vpack.c.b16 %v260, %v260
    %v263 = vpack.c.b16 %v261, %v261
    %vm266 = vcmask 257024
    %267 = vst.msk [vmem:[%s7] sm:$0xf] %vm266, %v262
    %268 = vst.msk [vmem:[%s7 + $0x4] sm:$0xf] %vm266, %v263
  $region37: #{transformer_forward.30} parent=0 // pred_fallthru
    _
  // Predicated region
  $region38: #{transformer_forward.30} parent=0 // pred_check
    _
  $region39: #{transformer_forward.30} parent=0 // pred_check_branch
    %270 = sbr.rel (0) target = $region41
  $region40: #{transformer_forward.30} parent=0 // pred_region
    _
  $region41: #{transformer_forward.30} parent=0 // pred_fallthru
    _
  // Predicated region
  $region42: #{transformer_forward.30} parent=0 // pred_check
    _
  $region43: #{transformer_forward.30} parent=0 // pred_check_branch
    %272 = sbr.rel (0) target = $region45
  $region44: #{transformer_forward.30} parent=0 // pred_region
    _
  $region45: #{transformer_forward.30} parent=0 // pred_fallthru
    _

// kernel: transformer_forward.28
$region0: #{transformer_forward.28}
  #allocation0 [shape = 'u32[]', space=smem, size = 0x4, offset = 0x4, fixed_abs, tag = 'smem constant byte address 0x4 - core index']
  #allocation1 [shape = 'u32[144,128]{1,0:T(1,128)}', space=vmem, size = 0x12000, scoped, tag = 'internal scratch']
  #allocation2 [shape = 'f32[4,8,1]{2,1,0:T(8,128)}', space=vmem, size = 0x4000, scoped, tag = 'scratch operand']
  #allocation3 [shape = 'f32[4,8,1]{2,1,0:T(8,128)}', space=vmem, size = 0x4000, scoped, tag = 'scratch operand']
  #allocation4 [shape = 'f32[4,8,8]{2,1,0:T(8,128)}', space=vmem, size = 0x4000, scoped, tag = 'scratch operand']
  %s0 = inlined_call_operand.vmem [shape: bf16[2,8,32], index: 0, kind: input, shape index: {}]
  %s1 = inlined_call_operand.vmem [shape: bf16[2,8,32], index: 1, kind: input, shape index: {}]
  %s2 = inlined_call_operand.vmem [shape: bf16[2,8,32], index: 2, kind: input, shape index: {}]
  %s3 = inlined_call_operand.vmem [shape: f32[2,1,8], index: 3, kind: input, shape index: {}]
  %s4 = inlined_call_operand.vmem [shape: bf16[2,8,32], index: 4, kind: output, shape index: {}]
  %s5 = sld [smem:[#allocation0]]
  $region57: #{transformer_forward.28} parent=0
    _
  %s7 = ssub.s32 1, %s5
  %s8 = scalar_select 0, %s7, %s5
  loop: start=0, step=1, limit=4
  $region2: #{transformer_forward.28} parent=0 // loop_pre_header
    _
  $region3: #{transformer_forward.28} parent=0 // loop_header
    %s10 = sphi 0, %s14
    %p11 = scmp.ge.s32.totalorder %s10, 4
    %s17 = sphi 0, %s36
    %s18 = sphi 0, %s32
    %s19 = sphi 0, %s28
    %s20 = sphi 0, %s17
    %s21 = sphi 0, %s18
    %s22 = sphi 0, %s19
    %s23 = sphi 0, %s20
    %s24 = sphi 0, %s21
    %s25 = sphi 0, %s22
    %s41 = sphi 0, %s43
    %s44 = sphi 0, %s41
    %s45 = sphi 0, %s44
    %s61 = sphi 0, %s45
    %s69 = sphi 0, %s71
    %s72 = sphi 0, %s69
    %s73 = sphi 0, %s72
    %s89 = sphi 0, %s73
    %s97 = sphi 0, %s99
    %s100 = sphi 0, %s97
    %s101 = sphi 0, %s100
    %s117 = sphi 0, %s101
    %s125 = sphi 0, %s127
    %s128 = sphi 0, %s125
    %s129 = sphi 0, %s128
    %s145 = sphi 0, %s129
    %s153 = sphi 0, %s155
    %s156 = sphi 0, %s153
    %s157 = sphi 0, %s156
    %s173 = sphi 0, %s157
  $region4: #{transformer_forward.28} parent=0 // loop_header_branch
    %13 = sbr.rel (%p11) target = $region8
  $region5: #{transformer_forward.28} parent=0 // loop_body
    %s15 = ssub.s32 %s10, 1
    %s16 = ssub.s32 %s10, 2
    %s26 = sadd.s32 1, %s19
    %p27 = scmp.ge.s32.totalorder %s26, 1
    %s28 = scalar_select %p27, 0, %s26
    %s29 = sadd.s32 1, %s18
    %s30 = scalar_select %p27, %s29, %s18
    %p31 = scmp.ge.s32.totalorder %s30, 1
    %s32 = scalar_select %p31, 0, %s30
    %s33 = sadd.s32 1, %s17
    %s34 = scalar_select %p31, %s33, %s17
    %p35 = scmp.ge.s32.totalorder %s34, 2
    %s36 = scalar_select %p35, 0, %s34
    %s37 = ssub.s32 %s17, %s36
    %s38 = ssub.s32 %s18, %s32
    %s39 = sor.u32 %s37, %s38
    %p40 = scmp.eq.s32.totalorder %s39, 0
    %s42 = sadd.s32 %s41, 1
    %s43 = scalar_select %p40, %s41, %s42
    %p46 = pneg %p40
    %p47 = scmp.eq.s32.totalorder %s10, 1
    %p48 = por %p46, %p47
    %p49 = scmp.ne.s32.totalorder %s41, %s44
    %p50 = scmp.eq.s32.totalorder %s10, 0
    %p51 = por %p49, %p50
    %p52 = scmp.ne.s32.totalorder %s41, %s44
    %p53 = scmp.eq.s32.totalorder %s15, 1
    %p54 = por %p52, %p53
    %p55 = scmp.ne.s32.totalorder %s44, %s45
    %p56 = scmp.eq.s32.totalorder %s15, 0
    %p57 = por %p55, %p56
    %p58 = scmp.ne.s32.totalorder %s44, %s45
    %p59 = scmp.eq.s32.totalorder %s16, 1
    %p60 = por %p58, %p59
    %p62 = scmp.ne.s32.totalorder %s45, %s61
    %p63 = scmp.eq.s32.totalorder %s16, 0
    %p64 = por %p62, %p63
    %s65 = ssub.s32 %s17, %s36
    %s66 = ssub.s32 %s19, %s28
    %s67 = sor.u32 %s65, %s66
    %p68 = scmp.eq.s32.totalorder %s67, 0
    %s70 = sadd.s32 %s69, 1
    %s71 = scalar_select %p68, %s69, %s70
    %p74 = pneg %p68
    %p75 = scmp.eq.s32.totalorder %s10, 1
    %p76 = por %p74, %p75
    %p77 = scmp.ne.s32.totalorder %s69, %s72
    %p78 = scmp.eq.s32.totalorder %s10, 0
    %p79 = por %p77, %p78
    %p80 = scmp.ne.s32.totalorder %s69, %s72
    %p81 = scmp.eq.s32.totalorder %s15, 1
    %p82 = por %p80, %p81
    %p83 = scmp.ne.s32.totalorder %s72, %s73
    %p84 = scmp.eq.s32.totalorder %s15, 0
    %p85 = por %p83, %p84
    %p86 = scmp.ne.s32.totalorder %s72, %s73
    %p87 = scmp.eq.s32.totalorder %s16, 1
    %p88 = por %p86, %p87
    %p90 = scmp.ne.s32.totalorder %s73, %s89
    %p91 = scmp.eq.s32.totalorder %s16, 0
    %p92 = por %p90, %p91
    %s93 = ssub.s32 %s17, %s36
    %s94 = ssub.s32 %s19, %s28
    %s95 = sor.u32 %s93, %s94
    %p96 = scmp.eq.s32.totalorder %s95, 0
    %s98 = sadd.s32 %s97, 1
    %s99 = scalar_select %p96, %s97, %s98
    %p102 = pneg %p96
    %p103 = scmp.eq.s32.totalorder %s10, 1
    %p104 = por %p102, %p103
    %p105 = scmp.ne.s32.totalorder %s97, %s100
    %p106 = scmp.eq.s32.totalorder %s10, 0
    %p107 = por %p105, %p106
    %p108 = scmp.ne.s32.totalorder %s97, %s100
    %p109 = scmp.eq.s32.totalorder %s15, 1
    %p110 = por %p108, %p109
    %p111 = scmp.ne.s32.totalorder %s100, %s101
    %p112 = scmp.eq.s32.totalorder %s15, 0
    %p113 = por %p111, %p112
    %p114 = scmp.ne.s32.totalorder %s100, %s101
    %p115 = scmp.eq.s32.totalorder %s16, 1
    %p116 = por %p114, %p115
    %p118 = scmp.ne.s32.totalorder %s101, %s117
    %p119 = scmp.eq.s32.totalorder %s16, 0
    %p120 = por %p118, %p119
    %s121 = ssub.s32 %s17, %s36
    %s122 = ssub.s32 %s19, %s28
    %s123 = sor.u32 %s121, %s122
    %p124 = scmp.eq.s32.totalorder %s123, 0
    %s126 = sadd.s32 %s125, 1
    %s127 = scalar_select %p124, %s125, %s126
    %p130 = pneg %p124
    %p131 = scmp.eq.s32.totalorder %s10, 1
    %p132 = por %p130, %p131
    %p133 = scmp.ne.s32.totalorder %s125, %s128
    %p134 = scmp.eq.s32.totalorder %s10, 0
    %p135 = por %p133, %p134
    %p136 = scmp.ne.s32.totalorder %s125, %s128
    %p137 = scmp.eq.s32.totalorder %s15, 1
    %p138 = por %p136, %p137
    %p139 = scmp.ne.s32.totalorder %s128, %s129
    %p140 = scmp.eq.s32.totalorder %s15, 0
    %p141 = por %p139, %p140
    %p142 = scmp.ne.s32.totalorder %s128, %s129
    %p143 = scmp.eq.s32.totalorder %s16, 1
    %p144 = por %p142, %p143
    %p146 = scmp.ne.s32.totalorder %s129, %s145
    %p147 = scmp.eq.s32.totalorder %s16, 0
    %p148 = por %p146, %p147
    %s149 = ssub.s32 %s17, %s36
    %s150 = ssub.s32 %s18, %s32
    %s151 = sor.u32 %s149, %s150
    %p152 = scmp.eq.s32.totalorder %s151, 0
    %s154 = sadd.s32 %s153, 1
    %s155 = scalar_select %p152, %s153, %s154
    %p158 = pneg %p152
    %p159 = scmp.eq.s32.totalorder %s10, 1
    %p160 = por %p158, %p159
    %p161 = scmp.ne.s32.totalorder %s153, %s156
    %p162 = scmp.eq.s32.totalorder %s10, 0
    %p163 = por %p161, %p162
    %p164 = scmp.ne.s32.totalorder %s153, %s156
    %p165 = scmp.eq.s32.totalorder %s15, 1
    %p166 = por %p164, %p165
    %p167 = scmp.ne.s32.totalorder %s156, %s157
    %p168 = scmp.eq.s32.totalorder %s15, 0
    %p169 = por %p167, %p168
    %p170 = scmp.ne.s32.totalorder %s156, %s157
    %p171 = scmp.eq.s32.totalorder %s16, 1
    %p172 = por %p170, %p171
    %p174 = scmp.ne.s32.totalorder %s157, %s173
    %p175 = scmp.eq.s32.totalorder %s16, 0
    %p176 = por %p174, %p175
    %p177 = scmp.le.s32.totalorder 1, %s10
    %p178 = scmp.lt.s32.totalorder %s10, 3
    %p179 = pnand %p177, %p178
    %p180 = pneg %p179
    // Predicated region
    $region9: #{transformer_forward.28} parent=5 // pred_check
      _
    $region10: #{transformer_forward.28} parent=5 // pred_check_branch
      %182 = sbr.rel (%p179) target = $region12
    $region11: #{transformer_forward.28} parent=5 // pred_region
      %s183 = ssub.s32 %s10, 1
    $region12: #{transformer_forward.28} parent=5 // pred_fallthru
      _
    %p184 = scmp.lt.s32.totalorder %s10, 2
    // Predicated region
    $region13: #{transformer_forward.28} parent=5 // pred_check
      %p185 = pneg %p184
    $region14: #{transformer_forward.28} parent=5 // pred_check_branch
      %187 = sbr.rel (%p185) target = $region16
    $region15: #{transformer_forward.28} parent=5 // pred_region
      // Predicated region
      $region17: #{transformer_forward.28} parent=15 // pred_check
        %p188 = pneg %p51
      $region18: #{transformer_forward.28} parent=15 // pred_check_branch
        %190 = sbr.rel (%p188) target = $region20
      $region19: #{transformer_forward.28} parent=15 // pred_region
        %p191 = scmp.lt.s32.totalorder %s17, 1
        %s192 = scalar_select %p191, %s17, 1
        %p193 = scmp.lt.s32.totalorder %s18, 0
        %s194 = scalar_select %p193, %s18, 0
        %s195 = sadd.s32 %s194, %s192
        %s196 = smul.addr %s195, 4
        %s197 = scalar_lea.vmem %s0, %s196
      $region20: #{transformer_forward.28} parent=15 // pred_fallthru
        _
      // Predicated region
      $region21: #{transformer_forward.28} parent=15 // pred_check
        %p198 = pneg %p79
      $region22: #{transformer_forward.28} parent=15 // pred_check_branch
        %200 = sbr.rel (%p198) target = $region24
      $region23: #{transformer_forward.28} parent=15 // pred_region
        %p201 = scmp.lt.s32.totalorder %s17, 1
        %s202 = scalar_select %p201, %s17, 1
        %p203 = scmp.lt.s32.totalorder %s19, 0
        %s204 = scalar_select %p203, %s19, 0
        %s205 = sadd.s32 %s204, %s202
        %s206 = smul.addr %s205, 4
        %s207 = scalar_lea.vmem %s1, %s206
      $region24: #{transformer_forward.28} parent=15 // pred_fallthru
        _
      // Predicated region
      $region25: #{transformer_forward.28} parent=15 // pred_check
        %p208 = pneg %p107
      $region26: #{transformer_forward.28} parent=15 // pred_check_branch
        %210 = sbr.rel (%p208) target = $region28
      $region27: #{transformer_forward.28} parent=15 // pred_region
        %p211 = scmp.lt.s32.totalorder %s17, 1
        %s212 = scalar_select %p211, %s17, 1
        %p213 = scmp.lt.s32.totalorder %s19, 0
        %s214 = scalar_select %p213, %s19, 0
        %s215 = sadd.s32 %s214, %s212
        %s216 = smul.addr %s215, 4
        %s217 = scalar_lea.vmem %s2, %s216
      $region28: #{transformer_forward.28} parent=15 // pred_fallthru
        _
      // Predicated region
      $region29: #{transformer_forward.28} parent=15 // pred_check
        %p218 = pneg %p135
      $region30: #{transformer_forward.28} parent=15 // pred_check_branch
        %220 = sbr.rel (%p218) target = $region32
      $region31: #{transformer_forward.28} parent=15 // pred_region
        %p221 = scmp.lt.s32.totalorder %s17, 1
        %s222 = scalar_select %p221, %s17, 1
        %p223 = scmp.lt.s32.totalorder %s19, 0
        %s224 = scalar_select %p223, %s19, 0
        %s225 = sadd.s32 %s224, %s222
        %s226 = scalar_lea.vmem %s3, %s225
      $region32: #{transformer_forward.28} parent=15 // pred_fallthru
        _
    $region16: #{transformer_forward.28} parent=5 // pred_fallthru
      _
    %p227 = scmp.le.s32.totalorder 1, %s10
    %p228 = scmp.lt.s32.totalorder %s10, 3
    %p229 = pnand %p227, %p228
    %p230 = pneg %p229
    // Predicated region
    $region33: #{transformer_forward.28} parent=5 // pred_check
      _
    $region34: #{transformer_forward.28} parent=5 // pred_check_branch
      %232 = sbr.rel (%p229) target = $region36
    $region35: #{transformer_forward.28} parent=5 // pred_region
      %s233 = ssub.s32 %s10, 1
      %p234 = scmp.lt.s32.totalorder %s20, 1
      %s235 = scalar_select %p234, %s20, 1
      %p236 = scmp.lt.s32.totalorder %s21, 0
      %s237 = scalar_select %p236, %s21, 0
      %s238 = sadd.s32 %s237, %s235
      %s239 = smul.addr %s238, 4
      %s240 = scalar_lea.vmem %s0, %s239
      %p241 = pneg %p57
      %p242 = pneg %p54
      %p243 = scmp.lt.s32.totalorder %s20, 1
      %s244 = scalar_select %p243, %s20, 1
      %p245 = scmp.lt.s32.totalorder %s22, 0
      %s246 = scalar_select %p245, %s22, 0
      %s247 = sadd.s32 %s246, %s244
      %s248 = smul.addr %s247, 4
      %s249 = scalar_lea.vmem %s1, %s248
      %p250 = pneg %p85
      %p251 = pneg %p82
      %p252 = scmp.lt.s32.totalorder %s20, 1
      %s253 = scalar_select %p252, %s20, 1
      %p254 = scmp.lt.s32.totalorder %s22, 0
      %s255 = scalar_select %p254, %s22, 0
      %s256 = sadd.s32 %s255, %s253
      %s257 = smul.addr %s256, 4
      %s258 = scalar_lea.vmem %s2, %s257
      %p259 = pneg %p113
      %p260 = pneg %p110
      %p261 = scmp.lt.s32.totalorder %s20, 1
      %s262 = scalar_select %p261, %s20, 1
      %p263 = scmp.lt.s32.totalorder %s22, 0
      %s264 = scalar_select %p263, %s22, 0
      %s265 = sadd.s32 %s264, %s262
      %s266 = scalar_lea.vmem %s3, %s265
      %p267 = pneg %p141
      %p268 = pneg %p138
      %p269 = pneg %p169
      %p270 = pneg %p166
      %p271 = scmp.lt.s32.totalorder %s20, 1
      %s272 = scalar_select %p271, %s20, 1
      %p273 = scmp.lt.s32.totalorder %s21, 0
      %s274 = scalar_select %p273, %s21, 0
      %s275 = sadd.s32 %s274, %s272
      %s276 = smul.addr %s275, 4
      %s277 = scalar_lea.vmem %s4, %s276
      %p278 = scmp.lt.s32.totalorder %s20, 1
      %s279 = scalar_select %p278, %s20, 1
      %p280 = scmp.lt.s32.totalorder %s21, 0
      %s281 = scalar_select %p280, %s21, 0
      %s282 = sadd.s32 %s281, %s279
      %s283 = smul.addr %s282, 4
      %s284 = scalar_lea.vmem %s0, %s283
      %p285 = scmp.lt.s32.totalorder %s20, 1
      %s286 = scalar_select %p285, %s20, 1
      %p287 = scmp.lt.s32.totalorder %s22, 0
      %s288 = scalar_select %p287, %s22, 0
      %s289 = sadd.s32 %s288, %s286
      %s290 = smul.addr %s289, 4
      %s291 = scalar_lea.vmem %s1, %s290
      %p292 = scmp.lt.s32.totalorder %s20, 1
      %s293 = scalar_select %p292, %s20, 1
      %p294 = scmp.lt.s32.totalorder %s22, 0
      %s295 = scalar_select %p294, %s22, 0
      %s296 = sadd.s32 %s295, %s293
      %s297 = smul.addr %s296, 4
      %s298 = scalar_lea.vmem %s2, %s297
      %p299 = scmp.lt.s32.totalorder %s20, 1
      %s300 = scalar_select %p299, %s20, 1
      %p301 = scmp.lt.s32.totalorder %s22, 0
      %s302 = scalar_select %p301, %s22, 0
      %s303 = sadd.s32 %s302, %s300
      %s304 = scalar_lea.vmem %s3, %s303
      %p305 = scmp.lt.s32.totalorder %s20, 1
      %s306 = scalar_select %p305, %s20, 1
      %p307 = scmp.lt.s32.totalorder %s21, 0
      %s308 = scalar_select %p307, %s21, 0
      %s309 = sadd.s32 %s308, %s306
      %s310 = smul.addr %s309, 4
      %s311 = scalar_lea.vmem %s4, %s310
      %p313 = scmp.eq.s32.totalorder %s22, 0
      // Predicated region
      $region37: #{transformer_forward.28} parent=35 // pred_check
        %p314 = pneg %p313
      $region38: #{transformer_forward.28} parent=35 // pred_check_branch
        %316 = sbr.rel (%p314) target = $region40
      $region39: #{transformer_forward.28} parent=35 // pred_region
        %vm317 = vcmask 7168
        %318 = vst.msk [vmem:[#allocation2] sm:$0xff] %vm317, -inf
        %319 = vst.msk [vmem:[#allocation2 + $0x8] sm:$0xff] %vm317, -inf
        %320 = vst.msk [vmem:[#allocation2 + $0x10] sm:$0xff] %vm317, -inf
        %321 = vst.msk [vmem:[#allocation2 + $0x18] sm:$0xff] %vm317, -inf
        %322 = vst.msk [vmem:[#allocation3] sm:$0xff] %vm317, 0.0
        %323 = vst.msk [vmem:[#allocation3 + $0x8] sm:$0xff] %vm317, 0.0
        %324 = vst.msk [vmem:[#allocation3 + $0x10] sm:$0xff] %vm317, 0.0
        %325 = vst.msk [vmem:[#allocation3 + $0x18] sm:$0xff] %vm317, 0.0
        %vm326 = vcmask 64512
        %327 = vst.msk [vmem:[#allocation4] sm:$0xff] %vm326, 0.0
        %328 = vst.msk [vmem:[#allocation4 + $0x8] sm:$0xff] %vm326, 0.0
        %329 = vst.msk [vmem:[#allocation4 + $0x10] sm:$0xff] %vm326, 0.0
        %330 = vst.msk [vmem:[#allocation4 + $0x18] sm:$0xff] %vm326, 0.0
      $region40: #{transformer_forward.28} parent=35 // pred_fallthru
        _
      %v331 = vld [vmem:[%s284] sm:$0xf]
      %v332 = vunpack.c.l.bf16 %v331
      %v333 = vmul.f32 %v332, 0.35355338
      %v334 = vpack.c.bf16 %v333, %v333
      %v335 = vld [vmem:[%s291] sm:$0xf]
      %v336 = vld [vmem:[%s298] sm:$0xf]
      %v337 = vld [vmem:[%s304] sm:$0x1]
      %v339 = vlaneseq
      %v340 = vshrl.u32 %v339, 7
      %v341 = vsub.s32 0, %v340
      %v342 = vrot.slane %v337, %v341
      %vm344 = vcmask 64512
      %v346 = vsel %vm344, %v334, 0
      %v349 = vsel %vm344, %v335, 0
      %351 = vmatprep.subr.bf16.mxu0 0
      %352 = vmatpush1.bf16.xpose.msra.mxu0 %v349
      %353 = vmatprep.subr.bf16.mxu0 0
      %354 = vmatpush1.bf16.xpose.msra.mxu0 0
      %355 = vmatprep.subr.bf16.mxu0 0
      %356 = vmatpush1.bf16.xpose.msra.mxu0 0
      %357 = vmatprep.subr.bf16.mxu0 0
      %358 = vmatpush1.bf16.xpose.msra.mxu0 0
      %359 = vmatprep.subr.bf16.mxu0 0
      %360 = vmatpush1.bf16.xpose.msra.mxu0 0
      %361 = vmatprep.subr.bf16.mxu0 0
      %362 = vmatpush1.bf16.xpose.msra.mxu0 0
      %363 = vmatprep.subr.bf16.mxu0 0
      %364 = vmatpush1.bf16.xpose.msra.mxu0 0
      %365 = vmatprep.subr.bf16.mxu0 0
      %366 = vmatpush1.bf16.xpose.msra.mxu0 0
      %367 = vmatprep.subr.bf16.mxu0 0
      %368 = vmatpush1.bf16.xpose.msra.mxu0 0
      %369 = vmatprep.subr.bf16.mxu0 0
      %370 = vmatpush1.bf16.xpose.msra.mxu0 0
      %371 = vmatprep.subr.bf16.mxu0 0
      %372 = vmatpush1.bf16.xpose.msra.mxu0 0
      %373 = vmatprep.subr.bf16.mxu0 0
      %374 = vmatpush1.bf16.xpose.msra.mxu0 0
      %375 = vmatprep.subr.bf16.mxu0 0
      %376 = vmatpush1.bf16.xpose.msra.mxu0 0
      %377 = vmatprep.subr.bf16.mxu0 0
      %378 = vmatpush1.bf16.xpose.msra.mxu0 0
      %379 = vmatprep.subr.bf16.mxu0 0
      %380 = vmatpush1.bf16.xpose.msra.mxu0 0
      %381 = vmatprep.subr.bf16.mxu0 0
      %382 = vmatpush1.bf16.xpose.msra.mxu0 0
      %383 = vmatprep.mubr.bf16.mxu0 0
      %384 = vmatmul.mubr.bf16.gmra.mrb[0].mxu0 %v346
      %v385 = vpop.f32.mrb[0].mxu0
      %v386 = vadd.f32 %v342, %v385
      %v387 = vpop.f32.mrb[0].mxu0
      %v388 = vpop.f32.mrb[0].mxu0
      %v389 = vpop.f32.mrb[0].mxu0
      %390 = vdwg.mxu0
      %v391 = vld [vmem:[#allocation2] sm:$0xff]
      %v392 = vsel %vm344, %v386, -inf
      %393 = vmax.xlane.f32.xlu0 %v392
      %v394 = vpop.xlane.xlu0 %393
      %v395 = vmax.f32 %v391, %v394
      %v396 = vsub.f32 %v391, %v395
      %v397 = vmul.f32 %v396, 1.442695
      %v398 = vpow.pop %v397
      %400 = vset.pattern.permute.xlu0 0
      %401 = vperm.xlu0 %400, %v395
      %v402 = vpop.permute.xlu0 %401
      %v404 = vsub.f32 %v386, %v402
      %v405 = vmul.f32 %v404, 1.442695
      %v406 = vpow.pop %v405
      %v407 = vld [vmem:[#allocation3] sm:$0xff]
      %v408 = vmul.f32 %v398, %v407
      %v409 = vsel %vm344, %v406, 0.0
      %410 = vadd.xlane.f32.xlu0 %v409
      %v411 = vpop.xlane.xlu0 %410
      %v412 = vadd.f32 %v408, %v411
      %vm413 = vcmask 7168
      %414 = vst.msk [vmem:[#allocation3] sm:$0xff] %vm413, %v412
      %v415 = vld [vmem:[#allocation4] sm:$0xff]
      %417 = vset.pattern.permute.xlu0 0
      %418 = vperm.xlu0 %417, %v398
      %v419 = vpop.permute.xlu0 %418
      %v421 = vmul.f32 %v419, %v415
      %v422 = vpack.c.bf16 %v406, %v406
      %v424 = vsel %vm344, %v422, 0
      %vm426 = vcmask 1043456
      %v428 = vsel %vm426, %v336, 0
      %430 = vmatprep.subr.bf16.mxu0 0
      %431 = vmatpush1.bf16.msra.mxu0 %v428
      %432 = vmatprep.subr.bf16.mxu0 0
      %433 = vmatpush1.bf16.msra.mxu0 0
      %434 = vmatprep.subr.bf16.mxu0 0
      %435 = vmatpush1.bf16.msra.mxu0 0
      %436 = vmatprep.subr.bf16.mxu0 0
      %437 = vmatpush1.bf16.msra.mxu0 0
      %438 = vmatprep.subr.bf16.mxu0 0
      %439 = vmatpush1.bf16.msra.mxu0 0
      %440 = vmatprep.subr.bf16.mxu0 0
      %441 = vmatpush1.bf16.msra.mxu0 0
      %442 = vmatprep.subr.bf16.mxu0 0
      %443 = vmatpush1.bf16.msra.mxu0 0
      %444 = vmatprep.subr.bf16.mxu0 0
      %445 = vmatpush1.bf16.msra.mxu0 0
      %446 = vmatprep.subr.bf16.mxu0 0
      %447 = vmatpush1.bf16.msra.mxu0 0
      %448 = vmatprep.subr.bf16.mxu0 0
      %449 = vmatpush1.bf16.msra.mxu0 0
      %450 = vmatprep.subr.bf16.mxu0 0
      %451 = vmatpush1.bf16.msra.mxu0 0
      %452 = vmatprep.subr.bf16.mxu0 0
      %453 = vmatpush1.bf16.msra.mxu0 0
      %454 = vmatprep.subr.bf16.mxu0 0
      %455 = vmatpush1.bf16.msra.mxu0 0
      %456 = vmatprep.subr.bf16.mxu0 0
      %457 = vmatpush1.bf16.msra.mxu0 0
      %458 = vmatprep.subr.bf16.mxu0 0
      %459 = vmatpush1.bf16.msra.mxu0 0
      %460 = vmatprep.subr.bf16.mxu0 0
      %461 = vmatpush1.bf16.msra.mxu0 0
      %462 = vmatprep.mubr.bf16.mxu0 0
      %463 = vmatmul.mubr.bf16.gmra.mrb[0].mxu0 %v424
      %v464 = vpop.f32.mrb[0].mxu0
      %v465 = vadd.f32 0.0, %v464
      %v466 = vpop.f32.mrb[0].mxu0
      %v467 = vpop.f32.mrb[0].mxu0
      %v468 = vpop.f32.mrb[0].mxu0
      %469 = vdwg.mxu0
      %v470 = vadd.f32 %v421, %v465
      %471 = vst.msk [vmem:[#allocation4] sm:$0xff] %vm344, %v470
      %472 = vst.msk [vmem:[#allocation2] sm:$0xff] %vm413, %v395
      %474 = vrot.lane.b32.xlu0 %v334, 120
      %v475 = vpop.permute.xlu0 %474
      %v477 = vunpack.c.l.b16 %v335
      %v478 = vpack.c.b16 %v477, %v477
      %479 = vrot.lane.b32.xlu0 %v478, 120
      %v480 = vpop.permute.xlu0 %479
      %v482 = vsel %vm344, %v475, 0
      %v485 = vsel %vm344, %v480, 0
      %487 = vmatprep.subr.bf16.mxu0 0
      %488 = vmatpush1.bf16.xpose.msra.mxu0 %v485
      %489 = vmatprep.subr.bf16.mxu0 0
      %490 = vmatpush1.bf16.xpose.msra.mxu0 0
      %491 = vmatprep.subr.bf16.mxu0 0
      %492 = vmatpush1.bf16.xpose.msra.mxu0 0
      %493 = vmatprep.subr.bf16.mxu0 0
      %494 = vmatpush1.bf16.xpose.msra.mxu0 0
      %495 = vmatprep.subr.bf16.mxu0 0
      %496 = vmatpush1.bf16.xpose.msra.mxu0 0
      %497 = vmatprep.subr.bf16.mxu0 0
      %498 = vmatpush1.bf16.xpose.msra.mxu0 0
      %499 = vmatprep.subr.bf16.mxu0 0
      %500 = vmatpush1.bf16.xpose.msra.mxu0 0
      %501 = vmatprep.subr.bf16.mxu0 0
      %502 = vmatpush1.bf16.xpose.msra.mxu0 0
      %503 = vmatprep.subr.bf16.mxu0 0
      %504 = vmatpush1.bf16.xpose.msra.mxu0 0
      %505 = vmatprep.subr.bf16.mxu0 0
      %506 = vmatpush1.bf16.xpose.msra.mxu0 0
      %507 = vmatprep.subr.bf16.mxu0 0
      %508 = vmatpush1.bf16.xpose.msra.mxu0 0
      %509 = vmatprep.subr.bf16.mxu0 0
      %510 = vmatpush1.bf16.xpose.msra.mxu0 0
      %511 = vmatprep.subr.bf16.mxu0 0
      %512 = vmatpush1.bf16.xpose.msra.mxu0 0
      %513 = vmatprep.subr.bf16.mxu0 0
      %514 = vmatpush1.bf16.xpose.msra.mxu0 0
      %515 = vmatprep.subr.bf16.mxu0 0
      %516 = vmatpush1.bf16.xpose.msra.mxu0 0
      %517 = vmatprep.subr.bf16.mxu0 0
      %518 = vmatpush1.bf16.xpose.msra.mxu0 0
      %519 = vmatprep.mubr.bf16.mxu0 0
      %520 = vmatmul.mubr.bf16.gmra.mrb[0].mxu0 %v482
      %v521 = vpop.f32.mrb[0].mxu0
      %v522 = vadd.f32 %v342, %v521
      %v523 = vpop.f32.mrb[0].mxu0
      %v524 = vpop.f32.mrb[0].mxu0
      %v525 = vpop.f32.mrb[0].mxu0
      %526 = vdwg.mxu0
      %s527 = scalar_lea.vmem [#allocation2], 8
      %v528 = vld [vmem:[%s527] sm:$0xff]
      %v529 = vsel %vm344, %v522, -inf
      %530 = vmax.xlane.f32.xlu0 %v529
      %v531 = vpop.xlane.xlu0 %530
      %v532 = vmax.f32 %v528, %v531
      %v533 = vsub.f32 %v528, %v532
      %v534 = vmul.f32 %v533, 1.442695
      %v535 = vpow.pop %v534
      %537 = vset.pattern.permute.xlu0 0
      %538 = vperm.xlu0 %537, %v532
      %v539 = vpop.permute.xlu0 %538
      %v541 = vsub.f32 %v522, %v539
      %v542 = vmul.f32 %v541, 1.442695
      %v543 = vpow.pop %v542
      %s544 = scalar_lea.vmem [#allocation3], 8
      %v545 = vld [vmem:[%s544] sm:$0xff]
      %v546 = vmul.f32 %v535, %v545
      %v547 = vsel %vm344, %v543, 0.0
      %548 = vadd.xlane.f32.xlu0 %v547
      %v549 = vpop.xlane.xlu0 %548
      %v550 = vadd.f32 %v546, %v549
      %551 = vst.msk [vmem:[%s544] sm:$0xff] %vm413, %v550
      %s552 = scalar_lea.vmem [#allocation4], 8
      %v553 = vld [vmem:[%s552] sm:$0xff]
      %555 = vset.pattern.permute.xlu0 0
      %556 = vperm.xlu0 %555, %v535
      %v557 = vpop.permute.xlu0 %556
      %v559 = vmul.f32 %v557, %v553
      %v560 = vpack.c.bf16 %v543, %v543
      %v562 = vunpack.c.l.b16 %v336
      %v563 = vpack.c.b16 %v562, %v562
      %564 = vrot.lane.b32.xlu0 %v563, 120
      %v565 = vpop.permute.xlu0 %564
      %v567 = vsel %vm344, %v560, 0
      %v570 = vsel %vm426, %v565, 0
      %572 = vmatprep.subr.bf16.mxu0 0
      %573 = vmatpush1.bf16.msra.mxu0 %v570
      %574 = vmatprep.subr.bf16.mxu0 0
      %575 = vmatpush1.bf16.msra.mxu0 0
      %576 = vmatprep.subr.bf16.mxu0 0
      %577 = vmatpush1.bf16.msra.mxu0 0
      %578 = vmatprep.subr.bf16.mxu0 0
      %579 = vmatpush1.bf16.msra.mxu0 0
      %580 = vmatprep.subr.bf16.mxu0 0
      %581 = vmatpush1.bf16.msra.mxu0 0
      %582 = vmatprep.subr.bf16.mxu0 0
      %583 = vmatpush1.bf16.msra.mxu0 0
      %584 = vmatprep.subr.bf16.mxu0 0
      %585 = vmatpush1.bf16.msra.mxu0 0
      %586 = vmatprep.subr.bf16.mxu0 0
      %587 = vmatpush1.bf16.msra.mxu0 0
      %588 = vmatprep.subr.bf16.mxu0 0
      %589 = vmatpush1.bf16.msra.mxu0 0
      %590 = vmatprep.subr.bf16.mxu0 0
      %591 = vmatpush1.bf16.msra.mxu0 0
      %592 = vmatprep.subr.bf16.mxu0 0
      %593 = vmatpush1.bf16.msra.mxu0 0
      %594 = vmatprep.subr.bf16.mxu0 0
      %595 = vmatpush1.bf16.msra.mxu0 0
      %596 = vmatprep.subr.bf16.mxu0 0
      %597 = vmatpush1.bf16.msra.mxu0 0
      %598 = vmatprep.subr.bf16.mxu0 0
      %599 = vmatpush1.bf16.msra.mxu0 0
      %600 = vmatprep.subr.bf16.mxu0 0
      %601 = vmatpush1.bf16.msra.mxu0 0
      %602 = vmatprep.subr.bf16.mxu0 0
      %603 = vmatpush1.bf16.msra.mxu0 0
      %604 = vmatprep.mubr.bf16.mxu0 0
      %605 = vmatmul.mubr.bf16.gmra.mrb[0].mxu0 %v567
      %v606 = vpop.f32.mrb[0].mxu0
      %v607 = vadd.f32 0.0, %v606
      %v608 = vpop.f32.mrb[0].mxu0
      %v609 = vpop.f32.mrb[0].mxu0
      %v610 = vpop.f32.mrb[0].mxu0
      %611 = vdwg.mxu0
      %v612 = vadd.f32 %v559, %v607
      %613 = vst.msk [vmem:[%s552] sm:$0xff] %vm344, %v612
      %614 = vst.msk [vmem:[%s527] sm:$0xff] %vm413, %v532
      %615 = vrot.lane.b32.xlu0 %v334, 112
      %v616 = vpop.permute.xlu0 %615
      %617 = vrot.lane.b32.xlu0 %v478, 112
      %v618 = vpop.permute.xlu0 %617
      %v620 = vsel %vm344, %v616, 0
      %v623 = vsel %vm344, %v618, 0
      %625 = vmatprep.subr.bf16.mxu0 0
      %626 = vmatpush1.bf16.xpose.msra.mxu0 %v623
      %627 = vmatprep.subr.bf16.mxu0 0
      %628 = vmatpush1.bf16.xpose.msra.mxu0 0
      %629 = vmatprep.subr.bf16.mxu0 0
      %630 = vmatpush1.bf16.xpose.msra.mxu0 0
      %631 = vmatprep.subr.bf16.mxu0 0
      %632 = vmatpush1.bf16.xpose.msra.mxu0 0
      %633 = vmatprep.subr.bf16.mxu0 0
      %634 = vmatpush1.bf16.xpose.msra.mxu0 0
      %635 = vmatprep.subr.bf16.mxu0 0
      %636 = vmatpush1.bf16.xpose.msra.mxu0 0
      %637 = vmatprep.subr.bf16.mxu0 0
      %638 = vmatpush1.bf16.xpose.msra.mxu0 0
      %639 = vmatprep.subr.bf16.mxu0 0
      %640 = vmatpush1.bf16.xpose.msra.mxu0 0
      %641 = vmatprep.subr.bf16.mxu0 0
      %642 = vmatpush1.bf16.xpose.msra.mxu0 0
      %643 = vmatprep.subr.bf16.mxu0 0
      %644 = vmatpush1.bf16.xpose.msra.mxu0 0
      %645 = vmatprep.subr.bf16.mxu0 0
      %646 = vmatpush1.bf16.xpose.msra.mxu0 0
      %647 = vmatprep.subr.bf16.mxu0 0
      %648 = vmatpush1.bf16.xpose.msra.mxu0 0
      %649 = vmatprep.subr.bf16.mxu0 0
      %650 = vmatpush1.bf16.xpose.msra.mxu0 0
      %651 = vmatprep.subr.bf16.mxu0 0
      %652 = vmatpush1.bf16.xpose.msra.mxu0 0
      %653 = vmatprep.subr.bf16.mxu0 0
      %654 = vmatpush1.bf16.xpose.msra.mxu0 0
      %655 = vmatprep.subr.bf16.mxu0 0
      %656 = vmatpush1.bf16.xpose.msra.mxu0 0
      %657 = vmatprep.mubr.bf16.mxu0 0
      %658 = vmatmul.mubr.bf16.gmra.mrb[0].mxu0 %v620
      %v659 = vpop.f32.mrb[0].mxu0
      %v660 = vadd.f32 %v342, %v659
      %v661 = vpop.f32.mrb[0].mxu0
      %v662 = vpop.f32.mrb[0].mxu0
      %v663 = vpop.f32.mrb[0].mxu0
      %664 = vdwg.mxu0
      %s665 = scalar_lea.vmem [#allocation2], 16
      %v666 = vld [vmem:[%s665] sm:$0xff]
      %v667 = vsel %vm344, %v660, -inf
      %668 = vmax.xlane.f32.xlu0 %v667
      %v669 = vpop.xlane.xlu0 %668
      %v670 = vmax.f32 %v666, %v669
      %v671 = vsub.f32 %v666, %v670
      %v672 = vmul.f32 %v671, 1.442695
      %v673 = vpow.pop %v672
      %675 = vset.pattern.permute.xlu0 0
      %676 = vperm.xlu0 %675, %v670
      %v677 = vpop.permute.xlu0 %676
      %v679 = vsub.f32 %v660, %v677
      %v680 = vmul.f32 %v679, 1.442695
      %v681 = vpow.pop %v680
      %s682 = scalar_lea.vmem [#allocation3], 16
      %v683 = vld [vmem:[%s682] sm:$0xff]
      %v684 = vmul.f32 %v673, %v683
      %v685 = vsel %vm344, %v681, 0.0
      %686 = vadd.xlane.f32.xlu0 %v685
      %v687 = vpop.xlane.xlu0 %686
      %v688 = vadd.f32 %v684, %v687
      %689 = vst.msk [vmem:[%s682] sm:$0xff] %vm413, %v688
      %s690 = scalar_lea.vmem [#allocation4], 16
      %v691 = vld [vmem:[%s690] sm:$0xff]
      %693 = vset.pattern.permute.xlu0 0
      %694 = vperm.xlu0 %693, %v673
      %v695 = vpop.permute.xlu0 %694
      %v697 = vmul.f32 %v695, %v691
      %v698 = vpack.c.bf16 %v681, %v681
      %699 = vrot.lane.b32.xlu0 %v563, 112
      %v700 = vpop.permute.xlu0 %699
      %v702 = vsel %vm344, %v698, 0
      %v705 = vsel %vm426, %v700, 0
      %707 = vmatprep.subr.bf16.mxu0 0
      %708 = vmatpush1.bf16.msra.mxu0 %v705
      %709 = vmatprep.subr.bf16.mxu0 0
      %710 = vmatpush1.bf16.msra.mxu0 0
      %711 = vmatprep.subr.bf16.mxu0 0
      %712 = vmatpush1.bf16.msra.mxu0 0
      %713 = vmatprep.subr.bf16.mxu0 0
      %714 = vmatpush1.bf16.msra.mxu0 0
      %715 = vmatprep.subr.bf16.mxu0 0
      %716 = vmatpush1.bf16.msra.mxu0 0
      %717 = vmatprep.subr.bf16.mxu0 0
      %718 = vmatpush1.bf16.msra.mxu0 0
      %719 = vmatprep.subr.bf16.mxu0 0
      %720 = vmatpush1.bf16.msra.mxu0 0
      %721 = vmatprep.subr.bf16.mxu0 0
      %722 = vmatpush1.bf16.msra.mxu0 0
      %723 = vmatprep.subr.bf16.mxu0 0
      %724 = vmatpush1.bf16.msra.mxu0 0
      %725 = vmatprep.subr.bf16.mxu0 0
      %726 = vmatpush1.bf16.msra.mxu0 0
      %727 = vmatprep.subr.bf16.mxu0 0
      %728 = vmatpush1.bf16.msra.mxu0 0
      %729 = vmatprep.subr.bf16.mxu0 0
      %730 = vmatpush1.bf16.msra.mxu0 0
      %731 = vmatprep.subr.bf16.mxu0 0
      %732 = vmatpush1.bf16.msra.mxu0 0
      %733 = vmatprep.subr.bf16.mxu0 0
      %734 = vmatpush1.bf16.msra.mxu0 0
      %735 = vmatprep.subr.bf16.mxu0 0
      %736 = vmatpush1.bf16.msra.mxu0 0
      %737 = vmatprep.subr.bf16.mxu0 0
      %738 = vmatpush1.bf16.msra.mxu0 0
      %739 = vmatprep.mubr.bf16.mxu0 0
      %740 = vmatmul.mubr.bf16.gmra.mrb[0].mxu0 %v702
      %v741 = vpop.f32.mrb[0].mxu0
      %v742 = vadd.f32 0.0, %v741
      %v743 = vpop.f32.mrb[0].mxu0
      %v744 = vpop.f32.mrb[0].mxu0
      %v745 = vpop.f32.mrb[0].mxu0
      %746 = vdwg.mxu0
      %v747 = vadd.f32 %v697, %v742
      %748 = vst.msk [vmem:[%s690] sm:$0xff] %vm344, %v747
      %749 = vst.msk [vmem:[%s665] sm:$0xff] %vm413, %v670
      %750 = vrot.lane.b32.xlu0 %v334, 104
      %v751 = vpop.permute.xlu0 %750
      %752 = vrot.lane.b32.xlu0 %v478, 104
      %v753 = vpop.permute.xlu0 %752
      %v755 = vsel %vm344, %v751, 0
      %v758 = vsel %vm344, %v753, 0
      %760 = vmatprep.subr.bf16.mxu0 0
      %761 = vmatpush1.bf16.xpose.msra.mxu0 %v758
      %762 = vmatprep.subr.bf16.mxu0 0
      %763 = vmatpush1.bf16.xpose.msra.mxu0 0
      %764 = vmatprep.subr.bf16.mxu0 0
      %765 = vmatpush1.bf16.xpose.msra.mxu0 0
      %766 = vmatprep.subr.bf16.mxu0 0
      %767 = vmatpush1.bf16.xpose.msra.mxu0 0
      %768 = vmatprep.subr.bf16.mxu0 0
      %769 = vmatpush1.bf16.xpose.msra.mxu0 0
      %770 = vmatprep.subr.bf16.mxu0 0
      %771 = vmatpush1.bf16.xpose.msra.mxu0 0
      %772 = vmatprep.subr.bf16.mxu0 0
      %773 = vmatpush1.bf16.xpose.msra.mxu0 0
      %774 = vmatprep.subr.bf16.mxu0 0
      %775 = vmatpush1.bf16.xpose.msra.mxu0 0
      %776 = vmatprep.subr.bf16.mxu0 0
      %777 = vmatpush1.bf16.xpose.msra.mxu0 0
      %778 = vmatprep.subr.bf16.mxu0 0
      %779 = vmatpush1.bf16.xpose.msra.mxu0 0
      %780 = vmatprep.subr.bf16.mxu0 0
      %781 = vmatpush1.bf16.xpose.msra.mxu0 0
      %782 = vmatprep.subr.bf16.mxu0 0
      %783 = vmatpush1.bf16.xpose.msra.mxu0 0
      %784 = vmatprep.subr.bf16.mxu0 0
      %785 = vmatpush1.bf16.xpose.msra.mxu0 0
      %786 = vmatprep.subr.bf16.mxu0 0
      %787 = vmatpush1.bf16.xpose.msra.mxu0 0
      %788 = vmatprep.subr.bf16.mxu0 0
      %789 = vmatpush1.bf16.xpose.msra.mxu0 0
      %790 = vmatprep.subr.bf16.mxu0 0
      %791 = vmatpush1.bf16.xpose.msra.mxu0 0
      %792 = vmatprep.mubr.bf16.mxu0 0
      %793 = vmatmul.mubr.bf16.gmra.mrb[0].mxu0 %v755
      %v794 = vpop.f32.mrb[0].mxu0
      %v795 = vadd.f32 %v342, %v794
      %v796 = vpop.f32.mrb[0].mxu0
      %v797 = vpop.f32.mrb[0].mxu0
      %v798 = vpop.f32.mrb[0].mxu0
      %799 = vdwg.mxu0
      %s800 = scalar_lea.vmem [#allocation2], 24
      %v801 = vld [vmem:[%s800] sm:$0xff]
      %v802 = vsel %vm344, %v795, -inf
      %803 = vmax.xlane.f32.xlu0 %v802
      %v804 = vpop.xlane.xlu0 %803
      %v805 = vmax.f32 %v801, %v804
      %v806 = vsub.f32 %v801, %v805
      %v807 = vmul.f32 %v806, 1.442695
      %v808 = vpow.pop %v807
      %810 = vset.pattern.permute.xlu0 0
      %811 = vperm.xlu0 %810, %v805
      %v812 = vpop.permute.xlu0 %811
      %v814 = vsub.f32 %v795, %v812
      %v815 = vmul.f32 %v814, 1.442695
      %v816 = vpow.pop %v815
      %s817 = scalar_lea.vmem [#allocation3], 24
      %v818 = vld [vmem:[%s817] sm:$0xff]
      %v819 = vmul.f32 %v808, %v818
      %v820 = vsel %vm344, %v816, 0.0
      %821 = vadd.xlane.f32.xlu0 %v820
      %v822 = vpop.xlane.xlu0 %821
      %v823 = vadd.f32 %v819, %v822
      %824 = vst.msk [vmem:[%s817] sm:$0xff] %vm413, %v823
      %s825 = scalar_lea.vmem [#allocation4], 24
      %v826 = vld [vmem:[%s825] sm:$0xff]
      %828 = vset.pattern.permute.xlu0 0
      %829 = vperm.xlu0 %828, %v808
      %v830 = vpop.permute.xlu0 %829
      %v832 = vmul.f32 %v830, %v826
      %v833 = vpack.c.bf16 %v816, %v816
      %834 = vrot.lane.b32.xlu0 %v563, 104
      %v835 = vpop.permute.xlu0 %834
      %v837 = vsel %vm344, %v833, 0
      %v840 = vsel %vm426, %v835, 0
      %842 = vmatprep.subr.bf16.mxu0 0
      %843 = vmatpush1.bf16.msra.mxu0 %v840
      %844 = vmatprep.subr.bf16.mxu0 0
      %845 = vmatpush1.bf16.msra.mxu0 0
      %846 = vmatprep.subr.bf16.mxu0 0
      %847 = vmatpush1.bf16.msra.mxu0 0
      %848 = vmatprep.subr.bf16.mxu0 0
      %849 = vmatpush1.bf16.msra.mxu0 0
      %850 = vmatprep.subr.bf16.mxu0 0
      %851 = vmatpush1.bf16.msra.mxu0 0
      %852 = vmatprep.subr.bf16.mxu0 0
      %853 = vmatpush1.bf16.msra.mxu0 0
      %854 = vmatprep.subr.bf16.mxu0 0
      %855 = vmatpush1.bf16.msra.mxu0 0
      %856 = vmatprep.subr.bf16.mxu0 0
      %857 = vmatpush1.bf16.msra.mxu0 0
      %858 = vmatprep.subr.bf16.mxu0 0
      %859 = vmatpush1.bf16.msra.mxu0 0
      %860 = vmatprep.subr.bf16.mxu0 0
      %861 = vmatpush1.bf16.msra.mxu0 0
      %862 = vmatprep.subr.bf16.mxu0 0
      %863 = vmatpush1.bf16.msra.mxu0 0
      %864 = vmatprep.subr.bf16.mxu0 0
      %865 = vmatpush1.bf16.msra.mxu0 0
      %866 = vmatprep.subr.bf16.mxu0 0
      %867 = vmatpush1.bf16.msra.mxu0 0
      %868 = vmatprep.subr.bf16.mxu0 0
      %869 = vmatpush1.bf16.msra.mxu0 0
      %870 = vmatprep.subr.bf16.mxu0 0
      %871 = vmatpush1.bf16.msra.mxu0 0
      %872 = vmatprep.subr.bf16.mxu0 0
      %873 = vmatpush1.bf16.msra.mxu0 0
      %874 = vmatprep.mubr.bf16.mxu0 0
      %875 = vmatmul.mubr.bf16.gmra.mrb[0].mxu0 %v837
      %v876 = vpop.f32.mrb[0].mxu0
      %v877 = vadd.f32 0.0, %v876
      %v878 = vpop.f32.mrb[0].mxu0
      %v879 = vpop.f32.mrb[0].mxu0
      %v880 = vpop.f32.mrb[0].mxu0
      %881 = vdwg.mxu0
      %v882 = vadd.f32 %v832, %v877
      %883 = vst.msk [vmem:[%s825] sm:$0xff] %vm344, %v882
      %884 = vst.msk [vmem:[%s800] sm:$0xff] %vm413, %v805
      // Predicated region
      $region41: #{transformer_forward.28} parent=35 // pred_check
        %p885 = pneg %p313
      $region42: #{transformer_forward.28} parent=35 // pred_check_branch
        %887 = sbr.rel (%p885) target = $region44
      $region43: #{transformer_forward.28} parent=35 // pred_region
        %v888 = vld [vmem:[#allocation3] sm:$0xff]
        %v889 = vrcp.pop %v888
        %v890 = vld [vmem:[#allocation4] sm:$0xff]
        %892 = vset.pattern.permute.xlu0 0
        %893 = vperm.xlu0 %892, %v889
        %v894 = vpop.permute.xlu0 %893
        %v896 = vmul.f32 %v890, %v894
        %v897 = vpack.c.bf16 %v896, %v896
        %vm898 = vcmask 60416
        %899 = vst.msk [vmem:[%s311] sm:$0xf] %vm898, %v897
        %v900 = vld [vmem:[%s544] sm:$0xff]
        %v901 = vrcp.pop %v900
        %v902 = vld [vmem:[%s552] sm:$0xff]
        %904 = vset.pattern.permute.xlu0 0
        %905 = vperm.xlu0 %904, %v901
        %v906 = vpop.permute.xlu0 %905
        %v908 = vmul.f32 %v902, %v906
        %v909 = vpack.c.bf16 %v908, %v908
        %v911 = vunpack.c.l.b16 %v909
        %v912 = vpack.c.b16 %v911, %v911
        %913 = vrot.lane.b32.xlu0 %v912, 8
        %v914 = vpop.permute.xlu0 %913
        %vm916 = vcmask 126016
        %917 = vst.msk [vmem:[%s311] sm:$0xf] %vm916, %v914
        %v918 = vld [vmem:[%s682] sm:$0xff]
        %v919 = vrcp.pop %v918
        %v920 = vld [vmem:[%s690] sm:$0xff]
        %922 = vset.pattern.permute.xlu0 0
        %923 = vperm.xlu0 %922, %v919
        %v924 = vpop.permute.xlu0 %923
        %v926 = vmul.f32 %v920, %v924
        %v927 = vpack.c.bf16 %v926, %v926
        %v929 = vunpack.c.l.b16 %v927
        %v930 = vpack.c.b16 %v929, %v929
        %931 = vrot.lane.b32.xlu0 %v930, 16
        %v932 = vpop.permute.xlu0 %931
        %vm934 = vcmask 191616
        %935 = vst.msk [vmem:[%s311] sm:$0xf] %vm934, %v932
        %v936 = vld [vmem:[%s817] sm:$0xff]
        %v937 = vrcp.pop %v936
        %v938 = vld [vmem:[%s825] sm:$0xff]
        %940 = vset.pattern.permute.xlu0 0
        %941 = vperm.xlu0 %940, %v937
        %v942 = vpop.permute.xlu0 %941
        %v944 = vmul.f32 %v938, %v942
        %v945 = vpack.c.bf16 %v944, %v944
        %v947 = vunpack.c.l.b16 %v945
        %v948 = vpack.c.b16 %v947, %v947
        %949 = vrot.lane.b32.xlu0 %v948, 24
        %v950 = vpop.permute.xlu0 %949
        %vm952 = vcmask 257216
        %953 = vst.msk [vmem:[%s311] sm:$0xf] %vm952, %v950
      $region44: #{transformer_forward.28} parent=35 // pred_fallthru
        _
      %p954 = scmp.lt.s32.totalorder %s20, 1
      %s955 = scalar_select %p954, %s20, 1
      %p956 = scmp.lt.s32.totalorder %s21, 0
      %s957 = scalar_select %p956, %s21, 0
      %s958 = sadd.s32 %s957, %s955
      %s959 = smul.addr %s958, 4
      %s960 = scalar_lea.vmem %s4, %s959
      // Predicated region
      $region45: #{transformer_forward.28} parent=35 // pred_check
        %p961 = pneg %p166
      $region46: #{transformer_forward.28} parent=35 // pred_check_branch
        %963 = sbr.rel (%p961) target = $region48
      $region47: #{transformer_forward.28} parent=35 // pred_region
        _
      $region48: #{transformer_forward.28} parent=35 // pred_fallthru
        _
    $region36: #{transformer_forward.28} parent=5 // pred_fallthru
      _
    %p964 = scmp.le.s32.totalorder 2, %s10
    // Predicated region
    $region49: #{transformer_forward.28} parent=5 // pred_check
      %p965 = pneg %p964
    $region50: #{transformer_forward.28} parent=5 // pred_check_branch
      %967 = sbr.rel (%p965) target = $region52
    $region51: #{transformer_forward.28} parent=5 // pred_region
      %s968 = ssub.s32 %s10, 2
      // Predicated region
      $region53: #{transformer_forward.28} parent=51 // pred_check
        %p969 = pneg %p172
      $region54: #{transformer_forward.28} parent=51 // pred_check_branch
        %971 = sbr.rel (%p969) target = $region56
      $region55: #{transformer_forward.28} parent=51 // pred_region
        %p972 = scmp.lt.s32.totalorder %s23, 1
        %s973 = scalar_select %p972, %s23, 1
        %p974 = scmp.lt.s32.totalorder %s24, 0
        %s975 = scalar_select %p974, %s24, 0
        %s976 = sadd.s32 %s975, %s973
        %s977 = smul.addr %s976, 4
        %s978 = scalar_lea.vmem %s4, %s977
      $region56: #{transformer_forward.28} parent=51 // pred_fallthru
        _
    $region52: #{transformer_forward.28} parent=5 // pred_fallthru
      _
  $region6: #{transformer_forward.28} parent=0 // loop_footer
    %s14 = sadd.s32 1, %s10
  $region7: #{transformer_forward.28} parent=0 // loop_footer_branch
    %9 = sbr.rel target = $region3
  $region8: #{transformer_forward.28} parent=0 // loop_exit
    _

// kernel: transformer_forward.35
$region0: #{transformer_forward.35}
  #allocation0 [shape = 'u32[]', space=smem, size = 0x4, offset = 0x4, fixed_abs, tag = 'smem constant byte address 0x4 - core index']
  #allocation1 [shape = 'u32[144,128]{1,0:T(1,128)}', space=vmem, size = 0x12000, scoped, tag = 'internal scratch']
  %s0 = inlined_call_operand.vmem [shape: bf16[16,32], index: 0, kind: input, shape index: {}]
  %s1 = inlined_call_operand.vmem [shape: f32[1,32], index: 1, kind: input, shape index: {}]
  %s2 = inlined_call_operand.vmem [shape: f32[1,32], index: 2, kind: input, shape index: {}]
  %s3 = inlined_call_operand.vmem [shape: bf16[16,32], index: 3, kind: output, shape index: {}]
  %s4 = sld [smem:[#allocation0]]
  $region22: #{transformer_forward.35} parent=0
    _
  %s6 = ssub.s32 1, %s4
  %s7 = scalar_select 0, %s6, %s4
  // Predicated region
  $region2: #{transformer_forward.35} parent=0 // pred_check
    _
  $region3: #{transformer_forward.35} parent=0 // pred_check_branch
    %9 = sbr.rel (0) target = $region5
  $region4: #{transformer_forward.35} parent=0 // pred_region
    _
  $region5: #{transformer_forward.35} parent=0 // pred_fallthru
    _
  // Predicated region
  $region6: #{transformer_forward.35} parent=0 // pred_check
    _
  $region7: #{transformer_forward.35} parent=0 // pred_check_branch
    %11 = sbr.rel (0) target = $region9
  $region8: #{transformer_forward.35} parent=0 // pred_region
    _
  $region9: #{transformer_forward.35} parent=0 // pred_fallthru
    _
  // Predicated region
  $region10: #{transformer_forward.35} parent=0 // pred_check
    _
  $region11: #{transformer_forward.35} parent=0 // pred_check_branch
    %13 = sbr.rel (0) target = $region13
  $region12: #{transformer_forward.35} parent=0 // pred_region
    _
  $region13: #{transformer_forward.35} parent=0 // pred_fallthru
    _
  %v14 = vld [vmem:[%s0] sm:$0xf]
  %v15 = vld [vmem:[%s0 + $0x4] sm:$0xf]
  %v16 = vunpack.c.l.bf16 %v14
  %v17 = vunpack.c.l.bf16 %v15
  %vm18 = vcmask 261120
  %v19 = vsel %vm18, %v16, 0.0
  %20 = vadd.xlane.f32.xlu0 %v19
  %v21 = vpop.xlane.xlu0 %20
  %v22 = vsel %vm18, %v17, 0.0
  %23 = vadd.xlane.f32.xlu0 %v22
  %v24 = vpop.xlane.xlu0 %23
  %v25 = vrcp.pop 32.0
  %v26 = vmul.f32 %v21, %v25
  %v27 = vmul.f32 %v24, %v25
  %v28 = vsub.f32 %v16, %v26
  %v29 = vsub.f32 %v17, %v27
  %v30 = vmul.f32 %v28, %v28
  %v31 = vmul.f32 %v29, %v29
  %v32 = vsel %vm18, %v30, 0.0
  %33 = vadd.xlane.f32.xlu0 %v32
  %v34 = vpop.xlane.xlu0 %33
  %v35 = vsel %vm18, %v31, 0.0
  %36 = vadd.xlane.f32.xlu0 %v35
  %v37 = vpop.xlane.xlu0 %36
  %v38 = vmul.f32 %v34, %v25
  %v39 = vmul.f32 %v37, %v25
  %v40 = vadd.f32 %v38, 1e-05
  %v41 = vadd.f32 %v39, 1e-05
  %v42 = vrsqrt.pop %v40
  %v43 = vrsqrt.pop %v41
  %v44 = vmul.f32 %v28, %v42
  %v45 = vmul.f32 %v29, %v43
  %v46 = vld [vmem:[%s1] sm:$0x1]
  %v48 = vlaneseq
  %v49 = vshrl.u32 %v48, 7
  %v50 = vsub.s32 0, %v49
  %v51 = vrot.slane %v46, %v50
  %v53 = vmul.f32 %v44, %v51
  %v54 = vmul.f32 %v45, %v51
  %v55 = vld [vmem:[%s2] sm:$0x1]
  %v57 = vlaneseq
  %v58 = vshrl.u32 %v57, 7
  %v59 = vsub.s32 0, %v58
  %v60 = vrot.slane %v55, %v59
  %v62 = vadd.f32 %v53, %v60
  %v63 = vadd.f32 %v54, %v60
  %v64 = vpack.c.bf16 %v63, %v62
  %v66 = vunpack.c.l.b16 %v64
  %v67 = vunpack.c.h.b16 %v64
  %v68 = vpack.c.b16 %v66, %v66
  %v69 = vpack.c.b16 %v67, %v67
  %vm72 = vcmask 257024
  %73 = vst.msk [vmem:[%s3] sm:$0xf] %vm72, %v68
  %74 = vst.msk [vmem:[%s3 + $0x4] sm:$0xf] %vm72, %v69
  // Predicated region
  $region14: #{transformer_forward.35} parent=0 // pred_check
    _
  $region15: #{transformer_forward.35} parent=0 // pred_check_branch
    %76 = sbr.rel (0) target = $region17
  $region16: #{transformer_forward.35} parent=0 // pred_region
    _
  $region17: #{transformer_forward.35} parent=0 // pred_fallthru
    _
  // Predicated region
  $region18: #{transformer_forward.35} parent=0 // pred_check
    _
  $region19: #{transformer_forward.35} parent=0 // pred_check_branch
    %78 = sbr.rel (0) target = $region21
  $region20: #{transformer_forward.35} parent=0 // pred_region
    _
  $region21: #{transformer_forward.35} parent=0 // pred_fallthru
    _

// kernel: transformer_forward.40
$region0: #{transformer_forward.40}
  #allocation0 [shape = 'u32[]', space=smem, size = 0x4, offset = 0x4, fixed_abs, tag = 'smem constant byte address 0x4 - core index']
  #allocation1 [shape = 'u32[144,128]{1,0:T(1,128)}', space=vmem, size = 0x12000, scoped, tag = 'internal scratch']
  #allocation2 [shape = 'f32[16,32]{1,0:T(8,128)}', space=vmem, size = 0x2000, scoped, tag = 'scratch operand']
  #allocation3 [shape = 'f32[16,32]{1,0:T(8,128)}', space=vmem, size = 0x2000, scoped, tag = 'scratch operand']
  %s0 = inlined_call_operand.vmem [shape: bf16[16,32], index: 0, kind: input, shape index: {}]
  %s1 = inlined_call_operand.vmem [shape: bf16[32,32], index: 1, kind: input, shape index: {}]
  %s2 = inlined_call_operand.vmem [shape: bf16[32,32], index: 2, kind: input, shape index: {}]
  %s3 = inlined_call_operand.vmem [shape: f32[1,32], index: 3, kind: input, shape index: {}]
  %s4 = inlined_call_operand.vmem [shape: f32[1,32], index: 4, kind: input, shape index: {}]
  %s5 = inlined_call_operand.vmem [shape: bf16[16,32], index: 5, kind: output, shape index: {0}]
  %s6 = inlined_call_operand.vmem [shape: bf16[16,32], index: 6, kind: output, shape index: {1}]
  %7 = xla_tuple %s5, %s6
  %s8 = sld [smem:[#allocation0]]
  $region46: #{transformer_forward.40} parent=0
    _
  %s10 = ssub.s32 1, %s8
  %s11 = scalar_select 0, %s10, %s8
  // Predicated region
  $region2: #{transformer_forward.40} parent=0 // pred_check
    _
  $region3: #{transformer_forward.40} parent=0 // pred_check_branch
    %13 = sbr.rel (0) target = $region5
  $region4: #{transformer_forward.40} parent=0 // pred_region
    _
  $region5: #{transformer_forward.40} parent=0 // pred_fallthru
    _
  // Predicated region
  $region6: #{transformer_forward.40} parent=0 // pred_check
    _
  $region7: #{transformer_forward.40} parent=0 // pred_check_branch
    %15 = sbr.rel (0) target = $region9
  $region8: #{transformer_forward.40} parent=0 // pred_region
    _
  $region9: #{transformer_forward.40} parent=0 // pred_fallthru
    _
  // Predicated region
  $region10: #{transformer_forward.40} parent=0 // pred_check
    _
  $region11: #{transformer_forward.40} parent=0 // pred_check_branch
    %17 = sbr.rel (0) target = $region13
  $region12: #{transformer_forward.40} parent=0 // pred_region
    _
  $region13: #{transformer_forward.40} parent=0 // pred_fallthru
    _
  // Predicated region
  $region14: #{transformer_forward.40} parent=0 // pred_check
    _
  $region15: #{transformer_forward.40} parent=0 // pred_check_branch
    %19 = sbr.rel (0) target = $region17
  $region16: #{transformer_forward.40} parent=0 // pred_region
    _
  $region17: #{transformer_forward.40} parent=0 // pred_fallthru
    _
  // Predicated region
  $region18: #{transformer_forward.40} parent=0 // pred_check
    _
  $region19: #{transformer_forward.40} parent=0 // pred_check_branch
    %21 = sbr.rel (0) target = $region21
  $region20: #{transformer_forward.40} parent=0 // pred_region
    _
  $region21: #{transformer_forward.40} parent=0 // pred_fallthru
    _
  %p23 = scmp.eq.s32.totalorder 0, 0
  // Predicated region
  $region22: #{transformer_forward.40} parent=0 // pred_check
    %p24 = pneg %p23
  $region23: #{transformer_forward.40} parent=0 // pred_check_branch
    %26 = sbr.rel (%p24) target = $region25
  $region24: #{transformer_forward.40} parent=0 // pred_region
    %vm27 = vcmask 261120
    %28 = vst.msk [vmem:[#allocation2] sm:$0xff] %vm27, 0.0
    %29 = vst.msk [vmem:[#allocation2 + $0x8] sm:$0xff] %vm27, 0.0
    %30 = vst.msk [vmem:[#allocation3] sm:$0xff] %vm27, 0.0
    %31 = vst.msk [vmem:[#allocation3 + $0x8] sm:$0xff] %vm27, 0.0
  $region25: #{transformer_forward.40} parent=0 // pred_fallthru
    _
  %v32 = vld [vmem:[%s0] sm:$0xf]
  %v33 = vld [vmem:[%s0 + $0x4] sm:$0xf]
  %v34 = vld [vmem:[#allocation2] sm:$0xff]
  %v35 = vld [vmem:[#allocation2 + $0x8] sm:$0xff]
  %v36 = vld [vmem:[%s1] sm:$0xf]
  %v37 = vld [vmem:[%s1 + $0x4] sm:$0xf]
  %v38 = vld [vmem:[%s1 + $0x8] sm:$0xf]
  %v39 = vld [vmem:[%s1 + $0xc] sm:$0xf]
  %v42 = vunpack.c.l.b16 %v32
  %v43 = vunpack.c.l.b16 %v33
  %v44 = vpack.c.b16 %v43, %v42
  %v49 = vunpack.c.l.b16 %v36
  %v50 = vunpack.c.l.b16 %v37
  %v51 = vunpack.c.l.b16 %v38
  %v52 = vunpack.c.l.b16 %v39
  %v53 = vpack.c.b16 %v50, %v49
  %v54 = vpack.c.b16 %v52, %v51
  %vm57 = vcmask 261120
  %v59 = vsel %vm57, %v44, 0
  %61 = vmatprep.subr.bf16.mxu0 0
  %62 = vmatpush1.bf16.msra.mxu0 %v53
  %63 = vmatprep.subr.bf16.mxu0 0
  %64 = vmatpush1.bf16.msra.mxu0 %v54
  %65 = vmatprep.subr.bf16.mxu0 0
  %66 = vmatpush1.bf16.msra.mxu0 0
  %67 = vmatprep.subr.bf16.mxu0 0
  %68 = vmatpush1.bf16.msra.mxu0 0
  %69 = vmatprep.subr.bf16.mxu0 0
  %70 = vmatpush1.bf16.msra.mxu0 0
  %71 = vmatprep.subr.bf16.mxu0 0
  %72 = vmatpush1.bf16.msra.mxu0 0
  %73 = vmatprep.subr.bf16.mxu0 0
  %74 = vmatpush1.bf16.msra.mxu0 0
  %75 = vmatprep.subr.bf16.mxu0 0
  %76 = vmatpush1.bf16.msra.mxu0 0
  %77 = vmatprep.subr.bf16.mxu0 0
  %78 = vmatpush1.bf16.msra.mxu0 0
  %79 = vmatprep.subr.bf16.mxu0 0
  %80 = vmatpush1.bf16.msra.mxu0 0
  %81 = vmatprep.subr.bf16.mxu0 0
  %82 = vmatpush1.bf16.msra.mxu0 0
  %83 = vmatprep.subr.bf16.mxu0 0
  %84 = vmatpush1.bf16.msra.mxu0 0
  %85 = vmatprep.subr.bf16.mxu0 0
  %86 = vmatpush1.bf16.msra.mxu0 0
  %87 = vmatprep.subr.bf16.mxu0 0
  %88 = vmatpush1.bf16.msra.mxu0 0
  %89 = vmatprep.subr.bf16.mxu0 0
  %90 = vmatpush1.bf16.msra.mxu0 0
  %91 = vmatprep.subr.bf16.mxu0 0
  %92 = vmatpush1.bf16.msra.mxu0 0
  %93 = vmatprep.mubr.bf16.mxu0 0
  %94 = vmatmul.mubr.bf16.gmra.mrb[0].mxu0 %v59
  %v95 = vpop.f32.mrb[0].mxu0
  %v96 = vadd.f32 0.0, %v95
  %v97 = vpop.f32.mrb[0].mxu0
  %v98 = vpop.f32.mrb[0].mxu0
  %v99 = vadd.f32 0.0, %v98
  %v100 = vpop.f32.mrb[0].mxu0
  %101 = vdwg.mxu0
  %v102 = vadd.f32 %v34, %v96
  %v103 = vadd.f32 %v35, %v99
  %104 = vst.msk [vmem:[#allocation2] sm:$0xff] %vm57, %v102
  %105 = vst.msk [vmem:[#allocation2 + $0x8] sm:$0xff] %vm57, %v103
  %v106 = vld [vmem:[#allocation3] sm:$0xff]
  %v107 = vld [vmem:[#allocation3 + $0x8] sm:$0xff]
  %v108 = vld [vmem:[%s2] sm:$0xf]
  %v109 = vld [vmem:[%s2 + $0x4] sm:$0xf]
  %v110 = vld [vmem:[%s2 + $0x8] sm:$0xf]
  %v111 = vld [vmem:[%s2 + $0xc] sm:$0xf]
  %v116 = vunpack.c.l.b16 %v108
  %v117 = vunpack.c.l.b16 %v109
  %v118 = vunpack.c.l.b16 %v110
  %v119 = vunpack.c.l.b16 %v111
  %v120 = vpack.c.b16 %v117, %v116
  %v121 = vpack.c.b16 %v119, %v118
  %124 = vmatprep.subr.bf16.mxu0 0
  %125 = vmatpush1.bf16.msra.mxu0 %v120
  %126 = vmatprep.subr.bf16.mxu0 0
  %127 = vmatpush1.bf16.msra.mxu0 %v121
  %128 = vmatprep.subr.bf16.mxu0 0
  %129 = vmatpush1.bf16.msra.mxu0 0
  %130 = vmatprep.subr.bf16.mxu0 0
  %131 = vmatpush1.bf16.msra.mxu0 0
  %132 = vmatprep.subr.bf16.mxu0 0
  %133 = vmatpush1.bf16.msra.mxu0 0
  %134 = vmatprep.subr.bf16.mxu0 0
  %135 = vmatpush1.bf16.msra.mxu0 0
  %136 = vmatprep.subr.bf16.mxu0 0
  %137 = vmatpush1.bf16.msra.mxu0 0
  %138 = vmatprep.subr.bf16.mxu0 0
  %139 = vmatpush1.bf16.msra.mxu0 0
  %140 = vmatprep.subr.bf16.mxu0 0
  %141 = vmatpush1.bf16.msra.mxu0 0
  %142 = vmatprep.subr.bf16.mxu0 0
  %143 = vmatpush1.bf16.msra.mxu0 0
  %144 = vmatprep.subr.bf16.mxu0 0
  %145 = vmatpush1.bf16.msra.mxu0 0
  %146 = vmatprep.subr.bf16.mxu0 0
  %147 = vmatpush1.bf16.msra.mxu0 0
  %148 = vmatprep.subr.bf16.mxu0 0
  %149 = vmatpush1.bf16.msra.mxu0 0
  %150 = vmatprep.subr.bf16.mxu0 0
  %151 = vmatpush1.bf16.msra.mxu0 0
  %152 = vmatprep.subr.bf16.mxu0 0
  %153 = vmatpush1.bf16.msra.mxu0 0
  %154 = vmatprep.subr.bf16.mxu0 0
  %155 = vmatpush1.bf16.msra.mxu0 0
  %156 = vmatprep.mubr.bf16.mxu0 0
  %157 = vmatmul.mubr.bf16.gmra.mrb[0].mxu0 %v59
  %v158 = vpop.f32.mrb[0].mxu0
  %v159 = vadd.f32 0.0, %v158
  %v160 = vpop.f32.mrb[0].mxu0
  %v161 = vpop.f32.mrb[0].mxu0
  %v162 = vadd.f32 0.0, %v161
  %v163 = vpop.f32.mrb[0].mxu0
  %164 = vdwg.mxu0
  %v165 = vadd.f32 %v106, %v159
  %v166 = vadd.f32 %v107, %v162
  %167 = vst.msk [vmem:[#allocation3] sm:$0xff] %vm57, %v165
  %168 = vst.msk [vmem:[#allocation3 + $0x8] sm:$0xff] %vm57, %v166
  // Predicated region
  $region26: #{transformer_forward.40} parent=0 // pred_check
    %p169 = pneg %p23
  $region27: #{transformer_forward.40} parent=0 // pred_check_branch
    %171 = sbr.rel (%p169) target = $region29
  $region28: #{transformer_forward.40} parent=0 // pred_region
    %v172 = vld [vmem:[#allocation2] sm:$0xff]
    %v173 = vld [vmem:[#allocation2 + $0x8] sm:$0xff]
    %v174 = vld [vmem:[%s3] sm:$0x1]
    %v176 = vlaneseq
    %v177 = vshrl.u32 %v176, 7
    %v178 = vsub.s32 0, %v177
    %v179 = vrot.slane %v174, %v178
    %v181 = vadd.f32 %v172, %v179
    %v182 = vadd.f32 %v173, %v179
    %v183 = vpack.c.bf16 %v182, %v181
    %v185 = vunpack.c.l.b16 %v183
    %v186 = vunpack.c.h.b16 %v183
    %v187 = vpack.c.b16 %v185, %v185
    %v188 = vpack.c.b16 %v186, %v186
    %vm191 = vcmask 257024
    %192 = vst.msk [vmem:[%s5] sm:$0xf] %vm191, %v187
    %193 = vst.msk [vmem:[%s5 + $0x4] sm:$0xf] %vm191, %v188
    %v194 = vld [vmem:[#allocation3] sm:$0xff]
    %v195 = vld [vmem:[#allocation3 + $0x8] sm:$0xff]
    %v196 = vld [vmem:[%s4] sm:$0x1]
    %v198 = vlaneseq
    %v199 = vshrl.u32 %v198, 7
    %v200 = vsub.s32 0, %v199
    %v201 = vrot.slane %v196, %v200
    %v203 = vadd.f32 %v194, %v201
    %v204 = vadd.f32 %v195, %v201
    %v205 = vpack.c.bf16 %v204, %v203
    %v207 = vunpack.c.l.b16 %v205
    %v208 = vunpack.c.h.b16 %v205
    %v209 = vpack.c.b16 %v207, %v207
    %v210 = vpack.c.b16 %v208, %v208
    %213 = vst.msk [vmem:[%s6] sm:$0xf] %vm191, %v209
    %214 = vst.msk [vmem:[%s6 + $0x4] sm:$0xf] %vm191, %v210
  $region29: #{transformer_forward.40} parent=0 // pred_fallthru
    _
  // Predicated region
  $region30: #{transformer_forward.40} parent=0 // pred_check
    _
  $region31: #{transformer_forward.40} parent=0 // pred_check_branch
    %216 = sbr.rel (0) target = $region33
  $region32: #{transformer_forward.40} parent=0 // pred_region
    _
  $region33: #{transformer_forward.40} parent=0 // pred_fallthru
    _
  // Predicated region
  $region34: #{transformer_forward.40} parent=0 // pred_check
    _
  $region35: #{transformer_forward.40} parent=0 // pred_check_branch
    %218 = sbr.rel (0) target = $region37
  $region36: #{transformer_forward.40} parent=0 // pred_region
    _
  $region37: #{transformer_forward.40} parent=0 // pred_fallthru
    _
  // Predicated region
  $region38: #{transformer_forward.40} parent=0 // pred_check
    _
  $region39: #{transformer_forward.40} parent=0 // pred_check_branch
    %220 = sbr.rel (0) target = $region41
  $region40: #{transformer_forward.40} parent=0 // pred_region
    _
  $region41: #{transformer_forward.40} parent=0 // pred_fallthru
    _
  // Predicated region
  $region42: #{transformer_forward.40} parent=0 // pred_check
    _
  $region43: #{transformer_forward.40} parent=0 // pred_check_branch
    %222 = sbr.rel (0) target = $region45
  $region44: #{transformer_forward.40} parent=0 // pred_region
    _
  $region45: #{transformer_forward.40} parent=0 // pred_fallthru
    _

// kernel: transformer_forward.39
$region0: #{transformer_forward.39}
  #allocation0 [shape = 'u32[]', space=smem, size = 0x4, offset = 0x4, fixed_abs, tag = 'smem constant byte address 0x4 - core index']
  #allocation1 [shape = 'u32[144,128]{1,0:T(1,128)}', space=vmem, size = 0x12000, scoped, tag = 'internal scratch']
  #allocation2 [shape = 'f32[16,32]{1,0:T(8,128)}', space=vmem, size = 0x2000, scoped, tag = 'scratch operand']
  %s0 = inlined_call_operand.vmem [shape: bf16[16,32], index: 0, kind: input, shape index: {}]
  %s1 = inlined_call_operand.vmem [shape: bf16[32,32], index: 1, kind: input, shape index: {}]
  %s2 = inlined_call_operand.vmem [shape: f32[1,32], index: 2, kind: input, shape index: {}]
  %s3 = inlined_call_operand.vmem [shape: bf16[16,32], index: 3, kind: output, shape index: {}]
  %s4 = sld [smem:[#allocation0]]
  $region30: #{transformer_forward.39} parent=0
    _
  %s6 = ssub.s32 1, %s4
  %s7 = scalar_select 0, %s6, %s4
  // Predicated region
  $region2: #{transformer_forward.39} parent=0 // pred_check
    _
  $region3: #{transformer_forward.39} parent=0 // pred_check_branch
    %9 = sbr.rel (0) target = $region5
  $region4: #{transformer_forward.39} parent=0 // pred_region
    _
  $region5: #{transformer_forward.39} parent=0 // pred_fallthru
    _
  // Predicated region
  $region6: #{transformer_forward.39} parent=0 // pred_check
    _
  $region7: #{transformer_forward.39} parent=0 // pred_check_branch
    %11 = sbr.rel (0) target = $region9
  $region8: #{transformer_forward.39} parent=0 // pred_region
    _
  $region9: #{transformer_forward.39} parent=0 // pred_fallthru
    _
  // Predicated region
  $region10: #{transformer_forward.39} parent=0 // pred_check
    _
  $region11: #{transformer_forward.39} parent=0 // pred_check_branch
    %13 = sbr.rel (0) target = $region13
  $region12: #{transformer_forward.39} parent=0 // pred_region
    _
  $region13: #{transformer_forward.39} parent=0 // pred_fallthru
    _
  %p15 = scmp.eq.s32.totalorder 0, 0
  // Predicated region
  $region14: #{transformer_forward.39} parent=0 // pred_check
    %p16 = pneg %p15
  $region15: #{transformer_forward.39} parent=0 // pred_check_branch
    %18 = sbr.rel (%p16) target = $region17
  $region16: #{transformer_forward.39} parent=0 // pred_region
    %vm19 = vcmask 261120
    %20 = vst.msk [vmem:[#allocation2] sm:$0xff] %vm19, 0.0
    %21 = vst.msk [vmem:[#allocation2 + $0x8] sm:$0xff] %vm19, 0.0
  $region17: #{transformer_forward.39} parent=0 // pred_fallthru
    _
  %v22 = vld [vmem:[%s0] sm:$0xf]
  %v23 = vld [vmem:[%s0 + $0x4] sm:$0xf]
  %v24 = vld [vmem:[#allocation2] sm:$0xff]
  %v25 = vld [vmem:[#allocation2 + $0x8] sm:$0xff]
  %v26 = vld [vmem:[%s1] sm:$0xf]
  %v27 = vld [vmem:[%s1 + $0x4] sm:$0xf]
  %v28 = vld [vmem:[%s1 + $0x8] sm:$0xf]
  %v29 = vld [vmem:[%s1 + $0xc] sm:$0xf]
  %v32 = vunpack.c.l.b16 %v22
  %v33 = vunpack.c.l.b16 %v23
  %v34 = vpack.c.b16 %v33, %v32
  %v39 = vunpack.c.l.b16 %v26
  %v40 = vunpack.c.l.b16 %v27
  %v41 = vunpack.c.l.b16 %v28
  %v42 = vunpack.c.l.b16 %v29
  %v43 = vpack.c.b16 %v40, %v39
  %v44 = vpack.c.b16 %v42, %v41
  %vm47 = vcmask 261120
  %v49 = vsel %vm47, %v34, 0
  %51 = vmatprep.subr.bf16.mxu0 0
  %52 = vmatpush1.bf16.msra.mxu0 %v43
  %53 = vmatprep.subr.bf16.mxu0 0
  %54 = vmatpush1.bf16.msra.mxu0 %v44
  %55 = vmatprep.subr.bf16.mxu0 0
  %56 = vmatpush1.bf16.msra.mxu0 0
  %57 = vmatprep.subr.bf16.mxu0 0
  %58 = vmatpush1.bf16.msra.mxu0 0
  %59 = vmatprep.subr.bf16.mxu0 0
  %60 = vmatpush1.bf16.msra.mxu0 0
  %61 = vmatprep.subr.bf16.mxu0 0
  %62 = vmatpush1.bf16.msra.mxu0 0
  %63 = vmatprep.subr.bf16.mxu0 0
  %64 = vmatpush1.bf16.msra.mxu0 0
  %65 = vmatprep.subr.bf16.mxu0 0
  %66 = vmatpush1.bf16.msra.mxu0 0
  %67 = vmatprep.subr.bf16.mxu0 0
  %68 = vmatpush1.bf16.msra.mxu0 0
  %69 = vmatprep.subr.bf16.mxu0 0
  %70 = vmatpush1.bf16.msra.mxu0 0
  %71 = vmatprep.subr.bf16.mxu0 0
  %72 = vmatpush1.bf16.msra.mxu0 0
  %73 = vmatprep.subr.bf16.mxu0 0
  %74 = vmatpush1.bf16.msra.mxu0 0
  %75 = vmatprep.subr.bf16.mxu0 0
  %76 = vmatpush1.bf16.msra.mxu0 0
  %77 = vmatprep.subr.bf16.mxu0 0
  %78 = vmatpush1.bf16.msra.mxu0 0
  %79 = vmatprep.subr.bf16.mxu0 0
  %80 = vmatpush1.bf16.msra.mxu0 0
  %81 = vmatprep.subr.bf16.mxu0 0
  %82 = vmatpush1.bf16.msra.mxu0 0
  %83 = vmatprep.mubr.bf16.mxu0 0
  %84 = vmatmul.mubr.bf16.gmra.mrb[0].mxu0 %v49
  %v85 = vpop.f32.mrb[0].mxu0
  %v86 = vadd.f32 0.0, %v85
  %v87 = vpop.f32.mrb[0].mxu0
  %v88 = vpop.f32.mrb[0].mxu0
  %v89 = vadd.f32 0.0, %v88
  %v90 = vpop.f32.mrb[0].mxu0
  %91 = vdwg.mxu0
  %v92 = vadd.f32 %v24, %v86
  %v93 = vadd.f32 %v25, %v89
  %94 = vst.msk [vmem:[#allocation2] sm:$0xff] %vm47, %v92
  %95 = vst.msk [vmem:[#allocation2 + $0x8] sm:$0xff] %vm47, %v93
  // Predicated region
  $region18: #{transformer_forward.39} parent=0 // pred_check
    %p96 = pneg %p15
  $region19: #{transformer_forward.39} parent=0 // pred_check_branch
    %98 = sbr.rel (%p96) target = $region21
  $region20: #{transformer_forward.39} parent=0 // pred_region
    %v99 = vld [vmem:[#allocation2] sm:$0xff]
    %v100 = vld [vmem:[#allocation2 + $0x8] sm:$0xff]
    %v101 = vld [vmem:[%s2] sm:$0x1]
    %v103 = vlaneseq
    %v104 = vshrl.u32 %v103, 7
    %v105 = vsub.s32 0, %v104
    %v106 = vrot.slane %v101, %v105
    %v108 = vadd.f32 %v99, %v106
    %v109 = vadd.f32 %v100, %v106
    %v110 = vpack.c.bf16 %v109, %v108
    %v112 = vunpack.c.l.b16 %v110
    %v113 = vunpack.c.h.b16 %v110
    %v114 = vpack.c.b16 %v112, %v112
    %v115 = vpack.c.b16 %v113, %v113
    %vm118 = vcmask 257024
    %119 = vst.msk [vmem:[%s3] sm:$0xf] %vm118, %v114
    %120 = vst.msk [vmem:[%s3 + $0x4] sm:$0xf] %vm118, %v115
  $region21: #{transformer_forward.39} parent=0 // pred_fallthru
    _
  // Predicated region
  $region22: #{transformer_forward.39} parent=0 // pred_check
    _
  $region23: #{transformer_forward.39} parent=0 // pred_check_branch
    %122 = sbr.rel (0) target = $region25
  $region24: #{transformer_forward.39} parent=0 // pred_region
    _
  $region25: #{transformer_forward.39} parent=0 // pred_fallthru
    _
  // Predicated region
  $region26: #{transformer_forward.39} parent=0 // pred_check
    _
  $region27: #{transformer_forward.39} parent=0 // pred_check_branch
    %124 = sbr.rel (0) target = $region29
  $region28: #{transformer_forward.39} parent=0 // pred_region
    _
  $region29: #{transformer_forward.39} parent=0 // pred_fallthru
    _

// kernel: transformer_forward.53
$region0: #{transformer_forward.53}
  #allocation0 [shape = 'u32[]', space=smem, size = 0x4, offset = 0x4, fixed_abs, tag = 'smem constant byte address 0x4 - core index']
  #allocation1 [shape = 'u32[144,128]{1,0:T(1,128)}', space=vmem, size = 0x12000, scoped, tag = 'internal scratch']
  #allocation2 [shape = 'f32[16,256]{1,0:T(8,128)}', space=vmem, size = 0x4000, scoped, tag = 'scratch operand']
  %s0 = inlined_call_operand.vmem [shape: bf16[16,32], index: 0, kind: input, shape index: {}]
  %s1 = inlined_call_operand.vmem [shape: bf16[32,256], index: 1, kind: input, shape index: {}]
  %s2 = inlined_call_operand.vmem [shape: f32[16,256], index: 2, kind: output, shape index: {}]
  %s3 = sld [smem:[#allocation0]]
  $region26: #{transformer_forward.53} parent=0
    _
  %s5 = ssub.s32 1, %s3
  %s6 = scalar_select 0, %s5, %s3
  // Predicated region
  $region2: #{transformer_forward.53} parent=0 // pred_check
    _
  $region3: #{transformer_forward.53} parent=0 // pred_check_branch
    %8 = sbr.rel (0) target = $region5
  $region4: #{transformer_forward.53} parent=0 // pred_region
    _
  $region5: #{transformer_forward.53} parent=0 // pred_fallthru
    _
  // Predicated region
  $region6: #{transformer_forward.53} parent=0 // pred_check
    _
  $region7: #{transformer_forward.53} parent=0 // pred_check_branch
    %10 = sbr.rel (0) target = $region9
  $region8: #{transformer_forward.53} parent=0 // pred_region
    _
  $region9: #{transformer_forward.53} parent=0 // pred_fallthru
    _
  %p12 = scmp.eq.s32.totalorder 0, 0
  // Predicated region
  $region10: #{transformer_forward.53} parent=0 // pred_check
    %p13 = pneg %p12
  $region11: #{transformer_forward.53} parent=0 // pred_check_branch
    %15 = sbr.rel (%p13) target = $region13
  $region12: #{transformer_forward.53} parent=0 // pred_region
    %16 = vst [vmem:[#allocation2] sm:$0xff] 0.0
    %17 = vst [vmem:[#allocation2 + $0x8] sm:$0xff] 0.0
    %18 = vst [vmem:[#allocation2 + $0x10] sm:$0xff] 0.0
    %19 = vst [vmem:[#allocation2 + $0x18] sm:$0xff] 0.0
  $region13: #{transformer_forward.53} parent=0 // pred_fallthru
    _
  %v20 = vld [vmem:[%s0] sm:$0xf]
  %v21 = vld [vmem:[%s0 + $0x4] sm:$0xf]
  %v22 = vld [vmem:[#allocation2] sm:$0xff]
  %v23 = vld [vmem:[#allocation2 + $0x8] sm:$0xff]
  %v24 = vld [vmem:[#allocation2 + $0x10] sm:$0xff]
  %v25 = vld [vmem:[#allocation2 + $0x18] sm:$0xff]
  %v26 = vld [vmem:[%s1] sm:$0xff]
  %v27 = vld [vmem:[%s1 + $0x8] sm:$0xff]
  %v28 = vld [vmem:[%s1 + $0x10] sm:$0xff]
  %v29 = vld [vmem:[%s1 + $0x18] sm:$0xff]
  %v32 = vunpack.c.l.b16 %v20
  %v33 = vunpack.c.l.b16 %v21
  %v34 = vpack.c.b16 %v33, %v32
  %v39 = vunpack.c.l.b16 %v26
  %v40 = vunpack.c.h.b16 %v26
  %v41 = vunpack.c.l.b16 %v27
  %v42 = vunpack.c.h.b16 %v27
  %v43 = vunpack.c.l.b16 %v28
  %v44 = vunpack.c.h.b16 %v28
  %v45 = vunpack.c.l.b16 %v29
  %v46 = vunpack.c.h.b16 %v29
  %v47 = vpack.c.b16 %v41, %v39
  %v48 = vpack.c.b16 %v42, %v40
  %v49 = vpack.c.b16 %v45, %v43
  %v50 = vpack.c.b16 %v46, %v44
  %vm55 = vcmask 261120
  %v57 = vsel %vm55, %v34, 0
  %59 = vmatprep.subr.bf16.mxu0 %v48
  %60 = vmatpush1.bf16.msra.mxu0 %v47
  %61 = vmatprep.subr.bf16.mxu0 %v50
  %62 = vmatpush1.bf16.msra.mxu0 %v49
  %63 = vmatprep.subr.bf16.mxu0 0
  %64 = vmatpush1.bf16.msra.mxu0 0
  %65 = vmatprep.subr.bf16.mxu0 0
  %66 = vmatpush1.bf16.msra.mxu0 0
  %67 = vmatprep.subr.bf16.mxu0 0
  %68 = vmatpush1.bf16.msra.mxu0 0
  %69 = vmatprep.subr.bf16.mxu0 0
  %70 = vmatpush1.bf16.msra.mxu0 0
  %71 = vmatprep.subr.bf16.mxu0 0
  %72 = vmatpush1.bf16.msra.mxu0 0
  %73 = vmatprep.subr.bf16.mxu0 0
  %74 = vmatpush1.bf16.msra.mxu0 0
  %75 = vmatprep.subr.bf16.mxu0 0
  %76 = vmatpush1.bf16.msra.mxu0 0
  %77 = vmatprep.subr.bf16.mxu0 0
  %78 = vmatpush1.bf16.msra.mxu0 0
  %79 = vmatprep.subr.bf16.mxu0 0
  %80 = vmatpush1.bf16.msra.mxu0 0
  %81 = vmatprep.subr.bf16.mxu0 0
  %82 = vmatpush1.bf16.msra.mxu0 0
  %83 = vmatprep.subr.bf16.mxu0 0
  %84 = vmatpush1.bf16.msra.mxu0 0
  %85 = vmatprep.subr.bf16.mxu0 0
  %86 = vmatpush1.bf16.msra.mxu0 0
  %87 = vmatprep.subr.bf16.mxu0 0
  %88 = vmatpush1.bf16.msra.mxu0 0
  %89 = vmatprep.subr.bf16.mxu0 0
  %90 = vmatpush1.bf16.msra.mxu0 0
  %91 = vmatprep.mubr.bf16.mxu0 0
  %92 = vmatmul.mubr.bf16.gmra.mrb[0].mxu0 %v57
  %v93 = vpop.f32.mrb[0].mxu0
  %v94 = vadd.f32 0.0, %v93
  %v95 = vpop.f32.mrb[0].mxu0
  %v96 = vadd.f32 0.0, %v95
  %v97 = vpop.f32.mrb[0].mxu0
  %v98 = vadd.f32 0.0, %v97
  %v99 = vpop.f32.mrb[0].mxu0
  %v100 = vadd.f32 0.0, %v99
  %101 = vdwg.mxu0
  %v102 = vadd.f32 %v22, %v94
  %v103 = vadd.f32 %v23, %v96
  %v104 = vadd.f32 %v24, %v98
  %v105 = vadd.f32 %v25, %v100
  %106 = vst [vmem:[#allocation2] sm:$0xff] %v102
  %107 = vst [vmem:[#allocation2 + $0x8] sm:$0xff] %v103
  %108 = vst [vmem:[#allocation2 + $0x10] sm:$0xff] %v104
  %109 = vst [vmem:[#allocation2 + $0x18] sm:$0xff] %v105
  // Predicated region
  $region14: #{transformer_forward.53} parent=0 // pred_check
    %p110 = pneg %p12
  $region15: #{transformer_forward.53} parent=0 // pred_check_branch
    %112 = sbr.rel (%p110) target = $region17
  $region16: #{transformer_forward.53} parent=0 // pred_region
    %v113 = vld [vmem:[#allocation2] sm:$0xff]
    %v114 = vld [vmem:[#allocation2 + $0x8] sm:$0xff]
    %v115 = vld [vmem:[#allocation2 + $0x10] sm:$0xff]
    %v116 = vld [vmem:[#allocation2 + $0x18] sm:$0xff]
    %117 = vst [vmem:[%s2] sm:$0xff] %v113
    %118 = vst [vmem:[%s2 + $0x8] sm:$0xff] %v114
    %119 = vst [vmem:[%s2 + $0x10] sm:$0xff] %v115
    %120 = vst [vmem:[%s2 + $0x18] sm:$0xff] %v116
  $region17: #{transformer_forward.53} parent=0 // pred_fallthru
    _
  // Predicated region
  $region18: #{transformer_forward.53} parent=0 // pred_check
    _
  $region19: #{transformer_forward.53} parent=0 // pred_check_branch
    %122 = sbr.rel (0) target = $region21
  $region20: #{transformer_forward.53} parent=0 // pred_region
    _
  $region21: #{transformer_forward.53} parent=0 // pred_fallthru
    _
  // Predicated region
  $region22: #{transformer_forward.53} parent=0 // pred_check
    _
  $region23: #{transformer_forward.53} parent=0 // pred_check_branch
    %124 = sbr.rel (0) target = $region25
  $region24: #{transformer_forward.53} parent=0 // pred_region
    _
  $region25: #{transformer_forward.53} parent=0 // pred_fallthru
    _

// kernel: transformer_forward.37
$region0: #{transformer_forward.37}
  #allocation0 [shape = 'u32[]', space=smem, size = 0x4, offset = 0x4, fixed_abs, tag = 'smem constant byte address 0x4 - core index']
  #allocation1 [shape = 'u32[144,128]{1,0:T(1,128)}', space=vmem, size = 0x12000, scoped, tag = 'internal scratch']
  #allocation2 [shape = 'f32[4,8,1]{2,1,0:T(8,128)}', space=vmem, size = 0x4000, scoped, tag = 'scratch operand']
  #allocation3 [shape = 'f32[4,8,1]{2,1,0:T(8,128)}', space=vmem, size = 0x4000, scoped, tag = 'scratch operand']
  #allocation4 [shape = 'f32[4,8,8]{2,1,0:T(8,128)}', space=vmem, size = 0x4000, scoped, tag = 'scratch operand']
  %s0 = inlined_call_operand.vmem [shape: bf16[2,8,32], index: 0, kind: input, shape index: {}]
  %s1 = inlined_call_operand.vmem [shape: bf16[2,8,32], index: 1, kind: input, shape index: {}]
  %s2 = inlined_call_operand.vmem [shape: bf16[2,8,32], index: 2, kind: input, shape index: {}]
  %s3 = inlined_call_operand.vmem [shape: f32[2,1,8], index: 3, kind: input, shape index: {}]
  %s4 = inlined_call_operand.vmem [shape: bf16[2,8,32], index: 4, kind: output, shape index: {}]
  %s5 = sld [smem:[#allocation0]]
  $region57: #{transformer_forward.37} parent=0
    _
  %s7 = ssub.s32 1, %s5
  %s8 = scalar_select 0, %s7, %s5
  loop: start=0, step=1, limit=4
  $region2: #{transformer_forward.37} parent=0 // loop_pre_header
    _
  $region3: #{transformer_forward.37} parent=0 // loop_header
    %s10 = sphi 0, %s14
    %p11 = scmp.ge.s32.totalorder %s10, 4
    %s17 = sphi 0, %s36
    %s18 = sphi 0, %s32
    %s19 = sphi 0, %s28
    %s20 = sphi 0, %s17
    %s21 = sphi 0, %s18
    %s22 = sphi 0, %s19
    %s23 = sphi 0, %s20
    %s24 = sphi 0, %s21
    %s25 = sphi 0, %s22
    %s41 = sphi 0, %s43
    %s44 = sphi 0, %s41
    %s45 = sphi 0, %s44
    %s61 = sphi 0, %s45
    %s69 = sphi 0, %s71
    %s72 = sphi 0, %s69
    %s73 = sphi 0, %s72
    %s89 = sphi 0, %s73
    %s97 = sphi 0, %s99
    %s100 = sphi 0, %s97
    %s101 = sphi 0, %s100
    %s117 = sphi 0, %s101
    %s125 = sphi 0, %s127
    %s128 = sphi 0, %s125
    %s129 = sphi 0, %s128
    %s145 = sphi 0, %s129
    %s153 = sphi 0, %s155
    %s156 = sphi 0, %s153
    %s157 = sphi 0, %s156
    %s173 = sphi 0, %s157
  $region4: #{transformer_forward.37} parent=0 // loop_header_branch
    %13 = sbr.rel (%p11) target = $region8
  $region5: #{transformer_forward.37} parent=0 // loop_body
    %s15 = ssub.s32 %s10, 1
    %s16 = ssub.s32 %s10, 2
    %s26 = sadd.s32 1, %s19
    %p27 = scmp.ge.s32.totalorder %s26, 1
    %s28 = scalar_select %p27, 0, %s26
    %s29 = sadd.s32 1, %s18
    %s30 = scalar_select %p27, %s29, %s18
    %p31 = scmp.ge.s32.totalorder %s30, 1
    %s32 = scalar_select %p31, 0, %s30
    %s33 = sadd.s32 1, %s17
    %s34 = scalar_select %p31, %s33, %s17
    %p35 = scmp.ge.s32.totalorder %s34, 2
    %s36 = scalar_select %p35, 0, %s34
    %s37 = ssub.s32 %s17, %s36
    %s38 = ssub.s32 %s18, %s32
    %s39 = sor.u32 %s37, %s38
    %p40 = scmp.eq.s32.totalorder %s39, 0
    %s42 = sadd.s32 %s41, 1
    %s43 = scalar_select %p40, %s41, %s42
    %p46 = pneg %p40
    %p47 = scmp.eq.s32.totalorder %s10, 1
    %p48 = por %p46, %p47
    %p49 = scmp.ne.s32.totalorder %s41, %s44
    %p50 = scmp.eq.s32.totalorder %s10, 0
    %p51 = por %p49, %p50
    %p52 = scmp.ne.s32.totalorder %s41, %s44
    %p53 = scmp.eq.s32.totalorder %s15, 1
    %p54 = por %p52, %p53
    %p55 = scmp.ne.s32.totalorder %s44, %s45
    %p56 = scmp.eq.s32.totalorder %s15, 0
    %p57 = por %p55, %p56
    %p58 = scmp.ne.s32.totalorder %s44, %s45
    %p59 = scmp.eq.s32.totalorder %s16, 1
    %p60 = por %p58, %p59
    %p62 = scmp.ne.s32.totalorder %s45, %s61
    %p63 = scmp.eq.s32.totalorder %s16, 0
    %p64 = por %p62, %p63
    %s65 = ssub.s32 %s17, %s36
    %s66 = ssub.s32 %s19, %s28
    %s67 = sor.u32 %s65, %s66
    %p68 = scmp.eq.s32.totalorder %s67, 0
    %s70 = sadd.s32 %s69, 1
    %s71 = scalar_select %p68, %s69, %s70
    %p74 = pneg %p68
    %p75 = scmp.eq.s32.totalorder %s10, 1
    %p76 = por %p74, %p75
    %p77 = scmp.ne.s32.totalorder %s69, %s72
    %p78 = scmp.eq.s32.totalorder %s10, 0
    %p79 = por %p77, %p78
    %p80 = scmp.ne.s32.totalorder %s69, %s72
    %p81 = scmp.eq.s32.totalorder %s15, 1
    %p82 = por %p80, %p81
    %p83 = scmp.ne.s32.totalorder %s72, %s73
    %p84 = scmp.eq.s32.totalorder %s15, 0
    %p85 = por %p83, %p84
    %p86 = scmp.ne.s32.totalorder %s72, %s73
    %p87 = scmp.eq.s32.totalorder %s16, 1
    %p88 = por %p86, %p87
    %p90 = scmp.ne.s32.totalorder %s73, %s89
    %p91 = scmp.eq.s32.totalorder %s16, 0
    %p92 = por %p90, %p91
    %s93 = ssub.s32 %s17, %s36
    %s94 = ssub.s32 %s19, %s28
    %s95 = sor.u32 %s93, %s94
    %p96 = scmp.eq.s32.totalorder %s95, 0
    %s98 = sadd.s32 %s97, 1
    %s99 = scalar_select %p96, %s97, %s98
    %p102 = pneg %p96
    %p103 = scmp.eq.s32.totalorder %s10, 1
    %p104 = por %p102, %p103
    %p105 = scmp.ne.s32.totalorder %s97, %s100
    %p106 = scmp.eq.s32.totalorder %s10, 0
    %p107 = por %p105, %p106
    %p108 = scmp.ne.s32.totalorder %s97, %s100
    %p109 = scmp.eq.s32.totalorder %s15, 1
    %p110 = por %p108, %p109
    %p111 = scmp.ne.s32.totalorder %s100, %s101
    %p112 = scmp.eq.s32.totalorder %s15, 0
    %p113 = por %p111, %p112
    %p114 = scmp.ne.s32.totalorder %s100, %s101
    %p115 = scmp.eq.s32.totalorder %s16, 1
    %p116 = por %p114, %p115
    %p118 = scmp.ne.s32.totalorder %s101, %s117
    %p119 = scmp.eq.s32.totalorder %s16, 0
    %p120 = por %p118, %p119
    %s121 = ssub.s32 %s17, %s36
    %s122 = ssub.s32 %s19, %s28
    %s123 = sor.u32 %s121, %s122
    %p124 = scmp.eq.s32.totalorder %s123, 0
    %s126 = sadd.s32 %s125, 1
    %s127 = scalar_select %p124, %s125, %s126
    %p130 = pneg %p124
    %p131 = scmp.eq.s32.totalorder %s10, 1
    %p132 = por %p130, %p131
    %p133 = scmp.ne.s32.totalorder %s125, %s128
    %p134 = scmp.eq.s32.totalorder %s10, 0
    %p135 = por %p133, %p134
    %p136 = scmp.ne.s32.totalorder %s125, %s128
    %p137 = scmp.eq.s32.totalorder %s15, 1
    %p138 = por %p136, %p137
    %p139 = scmp.ne.s32.totalorder %s128, %s129
    %p140 = scmp.eq.s32.totalorder %s15, 0
    %p141 = por %p139, %p140
    %p142 = scmp.ne.s32.totalorder %s128, %s129
    %p143 = scmp.eq.s32.totalorder %s16, 1
    %p144 = por %p142, %p143
    %p146 = scmp.ne.s32.totalorder %s129, %s145
    %p147 = scmp.eq.s32.totalorder %s16, 0
    %p148 = por %p146, %p147
    %s149 = ssub.s32 %s17, %s36
    %s150 = ssub.s32 %s18, %s32
    %s151 = sor.u32 %s149, %s150
    %p152 = scmp.eq.s32.totalorder %s151, 0
    %s154 = sadd.s32 %s153, 1
    %s155 = scalar_select %p152, %s153, %s154
    %p158 = pneg %p152
    %p159 = scmp.eq.s32.totalorder %s10, 1
    %p160 = por %p158, %p159
    %p161 = scmp.ne.s32.totalorder %s153, %s156
    %p162 = scmp.eq.s32.totalorder %s10, 0
    %p163 = por %p161, %p162
    %p164 = scmp.ne.s32.totalorder %s153, %s156
    %p165 = scmp.eq.s32.totalorder %s15, 1
    %p166 = por %p164, %p165
    %p167 = scmp.ne.s32.totalorder %s156, %s157
    %p168 = scmp.eq.s32.totalorder %s15, 0
    %p169 = por %p167, %p168
    %p170 = scmp.ne.s32.totalorder %s156, %s157
    %p171 = scmp.eq.s32.totalorder %s16, 1
    %p172 = por %p170, %p171
    %p174 = scmp.ne.s32.totalorder %s157, %s173
    %p175 = scmp.eq.s32.totalorder %s16, 0
    %p176 = por %p174, %p175
    %p177 = scmp.le.s32.totalorder 1, %s10
    %p178 = scmp.lt.s32.totalorder %s10, 3
    %p179 = pnand %p177, %p178
    %p180 = pneg %p179
    // Predicated region
    $region9: #{transformer_forward.37} parent=5 // pred_check
      _
    $region10: #{transformer_forward.37} parent=5 // pred_check_branch
      %182 = sbr.rel (%p179) target = $region12
    $region11: #{transformer_forward.37} parent=5 // pred_region
      %s183 = ssub.s32 %s10, 1
    $region12: #{transformer_forward.37} parent=5 // pred_fallthru
      _
    %p184 = scmp.lt.s32.totalorder %s10, 2
    // Predicated region
    $region13: #{transformer_forward.37} parent=5 // pred_check
      %p185 = pneg %p184
    $region14: #{transformer_forward.37} parent=5 // pred_check_branch
      %187 = sbr.rel (%p185) target = $region16
    $region15: #{transformer_forward.37} parent=5 // pred_region
      // Predicated region
      $region17: #{transformer_forward.37} parent=15 // pred_check
        %p188 = pneg %p51
      $region18: #{transformer_forward.37} parent=15 // pred_check_branch
        %190 = sbr.rel (%p188) target = $region20
      $region19: #{transformer_forward.37} parent=15 // pred_region
        %p191 = scmp.lt.s32.totalorder %s17, 1
        %s192 = scalar_select %p191, %s17, 1
        %p193 = scmp.lt.s32.totalorder %s18, 0
        %s194 = scalar_select %p193, %s18, 0
        %s195 = sadd.s32 %s194, %s192
        %s196 = smul.addr %s195, 4
        %s197 = scalar_lea.vmem %s0, %s196
      $region20: #{transformer_forward.37} parent=15 // pred_fallthru
        _
      // Predicated region
      $region21: #{transformer_forward.37} parent=15 // pred_check
        %p198 = pneg %p79
      $region22: #{transformer_forward.37} parent=15 // pred_check_branch
        %200 = sbr.rel (%p198) target = $region24
      $region23: #{transformer_forward.37} parent=15 // pred_region
        %p201 = scmp.lt.s32.totalorder %s17, 1
        %s202 = scalar_select %p201, %s17, 1
        %p203 = scmp.lt.s32.totalorder %s19, 0
        %s204 = scalar_select %p203, %s19, 0
        %s205 = sadd.s32 %s204, %s202
        %s206 = smul.addr %s205, 4
        %s207 = scalar_lea.vmem %s1, %s206
      $region24: #{transformer_forward.37} parent=15 // pred_fallthru
        _
      // Predicated region
      $region25: #{transformer_forward.37} parent=15 // pred_check
        %p208 = pneg %p107
      $region26: #{transformer_forward.37} parent=15 // pred_check_branch
        %210 = sbr.rel (%p208) target = $region28
      $region27: #{transformer_forward.37} parent=15 // pred_region
        %p211 = scmp.lt.s32.totalorder %s17, 1
        %s212 = scalar_select %p211, %s17, 1
        %p213 = scmp.lt.s32.totalorder %s19, 0
        %s214 = scalar_select %p213, %s19, 0
        %s215 = sadd.s32 %s214, %s212
        %s216 = smul.addr %s215, 4
        %s217 = scalar_lea.vmem %s2, %s216
      $region28: #{transformer_forward.37} parent=15 // pred_fallthru
        _
      // Predicated region
      $region29: #{transformer_forward.37} parent=15 // pred_check
        %p218 = pneg %p135
      $region30: #{transformer_forward.37} parent=15 // pred_check_branch
        %220 = sbr.rel (%p218) target = $region32
      $region31: #{transformer_forward.37} parent=15 // pred_region
        %p221 = scmp.lt.s32.totalorder %s17, 1
        %s222 = scalar_select %p221, %s17, 1
        %p223 = scmp.lt.s32.totalorder %s19, 0
        %s224 = scalar_select %p223, %s19, 0
        %s225 = sadd.s32 %s224, %s222
        %s226 = scalar_lea.vmem %s3, %s225
      $region32: #{transformer_forward.37} parent=15 // pred_fallthru
        _
    $region16: #{transformer_forward.37} parent=5 // pred_fallthru
      _
    %p227 = scmp.le.s32.totalorder 1, %s10
    %p228 = scmp.lt.s32.totalorder %s10, 3
    %p229 = pnand %p227, %p228
    %p230 = pneg %p229
    // Predicated region
    $region33: #{transformer_forward.37} parent=5 // pred_check
      _
    $region34: #{transformer_forward.37} parent=5 // pred_check_branch
      %232 = sbr.rel (%p229) target = $region36
    $region35: #{transformer_forward.37} parent=5 // pred_region
      %s233 = ssub.s32 %s10, 1
      %p234 = scmp.lt.s32.totalorder %s20, 1
      %s235 = scalar_select %p234, %s20, 1
      %p236 = scmp.lt.s32.totalorder %s21, 0
      %s237 = scalar_select %p236, %s21, 0
      %s238 = sadd.s32 %s237, %s235
      %s239 = smul.addr %s238, 4
      %s240 = scalar_lea.vmem %s0, %s239
      %p241 = pneg %p57
      %p242 = pneg %p54
      %p243 = scmp.lt.s32.totalorder %s20, 1
      %s244 = scalar_select %p243, %s20, 1
      %p245 = scmp.lt.s32.totalorder %s22, 0
      %s246 = scalar_select %p245, %s22, 0
      %s247 = sadd.s32 %s246, %s244
      %s248 = smul.addr %s247, 4
      %s249 = scalar_lea.vmem %s1, %s248
      %p250 = pneg %p85
      %p251 = pneg %p82
      %p252 = scmp.lt.s32.totalorder %s20, 1
      %s253 = scalar_select %p252, %s20, 1
      %p254 = scmp.lt.s32.totalorder %s22, 0
      %s255 = scalar_select %p254, %s22, 0
      %s256 = sadd.s32 %s255, %s253
      %s257 = smul.addr %s256, 4
      %s258 = scalar_lea.vmem %s2, %s257
      %p259 = pneg %p113
      %p260 = pneg %p110
      %p261 = scmp.lt.s32.totalorder %s20, 1
      %s262 = scalar_select %p261, %s20, 1
      %p263 = scmp.lt.s32.totalorder %s22, 0
      %s264 = scalar_select %p263, %s22, 0
      %s265 = sadd.s32 %s264, %s262
      %s266 = scalar_lea.vmem %s3, %s265
      %p267 = pneg %p141
      %p268 = pneg %p138
      %p269 = pneg %p169
      %p270 = pneg %p166
      %p271 = scmp.lt.s32.totalorder %s20, 1
      %s272 = scalar_select %p271, %s20, 1
      %p273 = scmp.lt.s32.totalorder %s21, 0
      %s274 = scalar_select %p273, %s21, 0
      %s275 = sadd.s32 %s274, %s272
      %s276 = smul.addr %s275, 4
      %s277 = scalar_lea.vmem %s4, %s276
      %p278 = scmp.lt.s32.totalorder %s20, 1
      %s279 = scalar_select %p278, %s20, 1
      %p280 = scmp.lt.s32.totalorder %s21, 0
      %s281 = scalar_select %p280, %s21, 0
      %s282 = sadd.s32 %s281, %s279
      %s283 = smul.addr %s282, 4
      %s284 = scalar_lea.vmem %s0, %s283
      %p285 = scmp.lt.s32.totalorder %s20, 1
      %s286 = scalar_select %p285, %s20, 1
      %p287 = scmp.lt.s32.totalorder %s22, 0
      %s288 = scalar_select %p287, %s22, 0
      %s289 = sadd.s32 %s288, %s286
      %s290 = smul.addr %s289, 4
      %s291 = scalar_lea.vmem %s1, %s290
      %p292 = scmp.lt.s32.totalorder %s20, 1
      %s293 = scalar_select %p292, %s20, 1
      %p294 = scmp.lt.s32.totalorder %s22, 0
      %s295 = scalar_select %p294, %s22, 0
      %s296 = sadd.s32 %s295, %s293
      %s297 = smul.addr %s296, 4
      %s298 = scalar_lea.vmem %s2, %s297
      %p299 = scmp.lt.s32.totalorder %s20, 1
      %s300 = scalar_select %p299, %s20, 1
      %p301 = scmp.lt.s32.totalorder %s22, 0
      %s302 = scalar_select %p301, %s22, 0
      %s303 = sadd.s32 %s302, %s300
      %s304 = scalar_lea.vmem %s3, %s303
      %p305 = scmp.lt.s32.totalorder %s20, 1
      %s306 = scalar_select %p305, %s20, 1
      %p307 = scmp.lt.s32.totalorder %s21, 0
      %s308 = scalar_select %p307, %s21, 0
      %s309 = sadd.s32 %s308, %s306
      %s310 = smul.addr %s309, 4
      %s311 = scalar_lea.vmem %s4, %s310
      %p313 = scmp.eq.s32.totalorder %s22, 0
      // Predicated region
      $region37: #{transformer_forward.37} parent=35 // pred_check
        %p314 = pneg %p313
      $region38: #{transformer_forward.37} parent=35 // pred_check_branch
        %316 = sbr.rel (%p314) target = $region40
      $region39: #{transformer_forward.37} parent=35 // pred_region
        %vm317 = vcmask 7168
        %318 = vst.msk [vmem:[#allocation2] sm:$0xff] %vm317, -inf
        %319 = vst.msk [vmem:[#allocation2 + $0x8] sm:$0xff] %vm317, -inf
        %320 = vst.msk [vmem:[#allocation2 + $0x10] sm:$0xff] %vm317, -inf
        %321 = vst.msk [vmem:[#allocation2 + $0x18] sm:$0xff] %vm317, -inf
        %322 = vst.msk [vmem:[#allocation3] sm:$0xff] %vm317, 0.0
        %323 = vst.msk [vmem:[#allocation3 + $0x8] sm:$0xff] %vm317, 0.0
        %324 = vst.msk [vmem:[#allocation3 + $0x10] sm:$0xff] %vm317, 0.0
        %325 = vst.msk [vmem:[#allocation3 + $0x18] sm:$0xff] %vm317, 0.0
        %vm326 = vcmask 64512
        %327 = vst.msk [vmem:[#allocation4] sm:$0xff] %vm326, 0.0
        %328 = vst.msk [vmem:[#allocation4 + $0x8] sm:$0xff] %vm326, 0.0
        %329 = vst.msk [vmem:[#allocation4 + $0x10] sm:$0xff] %vm326, 0.0
        %330 = vst.msk [vmem:[#allocation4 + $0x18] sm:$0xff] %vm326, 0.0
      $region40: #{transformer_forward.37} parent=35 // pred_fallthru
        _
      %v331 = vld [vmem:[%s284] sm:$0xf]
      %v332 = vunpack.c.l.bf16 %v331
      %v333 = vmul.f32 %v332, 0.35355338
      %v334 = vpack.c.bf16 %v333, %v333
      %v335 = vld [vmem:[%s291] sm:$0xf]
      %v336 = vld [vmem:[%s298] sm:$0xf]
      %v337 = vld [vmem:[%s304] sm:$0x1]
      %v339 = vlaneseq
      %v340 = vshrl.u32 %v339, 7
      %v341 = vsub.s32 0, %v340
      %v342 = vrot.slane %v337, %v341
      %s344 = smul.u32 %s21, 8
      %s345 = smul.u32 %s22, 8
      %v346 = vlaneseq
      %v347 = vshrl.u32 %v346, 7
      %v348 = vstv %s344
      %v349 = vadd.s32 %v348, %v347
      %v350 = vlaneseq
      %v351 = vand.u32 %v350, 127
      %v352 = vstv %s345
      %v353 = vadd.s32 %v352, %v351
      %vm354 = vcmp.gt.s32.totalorder %v353, %v349
      %v355 = vsel %vm354, -1e+30, %v342
      %vm356 = vcmask 64512
      %v358 = vsel %vm356, %v334, 0
      %v361 = vsel %vm356, %v335, 0
      %363 = vmatprep.subr.bf16.mxu0 0
      %364 = vmatpush1.bf16.xpose.msra.mxu0 %v361
      %365 = vmatprep.subr.bf16.mxu0 0
      %366 = vmatpush1.bf16.xpose.msra.mxu0 0
      %367 = vmatprep.subr.bf16.mxu0 0
      %368 = vmatpush1.bf16.xpose.msra.mxu0 0
      %369 = vmatprep.subr.bf16.mxu0 0
      %370 = vmatpush1.bf16.xpose.msra.mxu0 0
      %371 = vmatprep.subr.bf16.mxu0 0
      %372 = vmatpush1.bf16.xpose.msra.mxu0 0
      %373 = vmatprep.subr.bf16.mxu0 0
      %374 = vmatpush1.bf16.xpose.msra.mxu0 0
      %375 = vmatprep.subr.bf16.mxu0 0
      %376 = vmatpush1.bf16.xpose.msra.mxu0 0
      %377 = vmatprep.subr.bf16.mxu0 0
      %378 = vmatpush1.bf16.xpose.msra.mxu0 0
      %379 = vmatprep.subr.bf16.mxu0 0
      %380 = vmatpush1.bf16.xpose.msra.mxu0 0
      %381 = vmatprep.subr.bf16.mxu0 0
      %382 = vmatpush1.bf16.xpose.msra.mxu0 0
      %383 = vmatprep.subr.bf16.mxu0 0
      %384 = vmatpush1.bf16.xpose.msra.mxu0 0
      %385 = vmatprep.subr.bf16.mxu0 0
      %386 = vmatpush1.bf16.xpose.msra.mxu0 0
      %387 = vmatprep.subr.bf16.mxu0 0
      %388 = vmatpush1.bf16.xpose.msra.mxu0 0
      %389 = vmatprep.subr.bf16.mxu0 0
      %390 = vmatpush1.bf16.xpose.msra.mxu0 0
      %391 = vmatprep.subr.bf16.mxu0 0
      %392 = vmatpush1.bf16.xpose.msra.mxu0 0
      %393 = vmatprep.subr.bf16.mxu0 0
      %394 = vmatpush1.bf16.xpose.msra.mxu0 0
      %395 = vmatprep.mubr.bf16.mxu0 0
      %396 = vmatmul.mubr.bf16.gmra.mrb[0].mxu0 %v358
      %v397 = vpop.f32.mrb[0].mxu0
      %v398 = vadd.f32 %v355, %v397
      %v399 = vpop.f32.mrb[0].mxu0
      %v400 = vpop.f32.mrb[0].mxu0
      %v401 = vpop.f32.mrb[0].mxu0
      %402 = vdwg.mxu0
      %v403 = vld [vmem:[#allocation2] sm:$0xff]
      %v404 = vsel %vm356, %v398, -inf
      %405 = vmax.xlane.f32.xlu0 %v404
      %v406 = vpop.xlane.xlu0 %405
      %v407 = vmax.f32 %v403, %v406
      %v408 = vsub.f32 %v403, %v407
      %v409 = vmul.f32 %v408, 1.442695
      %v410 = vpow.pop %v409
      %412 = vset.pattern.permute.xlu0 0
      %413 = vperm.xlu0 %412, %v407
      %v414 = vpop.permute.xlu0 %413
      %v416 = vsub.f32 %v398, %v414
      %v417 = vmul.f32 %v416, 1.442695
      %v418 = vpow.pop %v417
      %v419 = vld [vmem:[#allocation3] sm:$0xff]
      %v420 = vmul.f32 %v410, %v419
      %v421 = vsel %vm356, %v418, 0.0
      %422 = vadd.xlane.f32.xlu0 %v421
      %v423 = vpop.xlane.xlu0 %422
      %v424 = vadd.f32 %v420, %v423
      %vm425 = vcmask 7168
      %426 = vst.msk [vmem:[#allocation3] sm:$0xff] %vm425, %v424
      %v427 = vld [vmem:[#allocation4] sm:$0xff]
      %429 = vset.pattern.permute.xlu0 0
      %430 = vperm.xlu0 %429, %v410
      %v431 = vpop.permute.xlu0 %430
      %v433 = vmul.f32 %v431, %v427
      %v434 = vpack.c.bf16 %v418, %v418
      %v436 = vsel %vm356, %v434, 0
      %vm438 = vcmask 1043456
      %v440 = vsel %vm438, %v336, 0
      %442 = vmatprep.subr.bf16.mxu0 0
      %443 = vmatpush1.bf16.msra.mxu0 %v440
      %444 = vmatprep.subr.bf16.mxu0 0
      %445 = vmatpush1.bf16.msra.mxu0 0
      %446 = vmatprep.subr.bf16.mxu0 0
      %447 = vmatpush1.bf16.msra.mxu0 0
      %448 = vmatprep.subr.bf16.mxu0 0
      %449 = vmatpush1.bf16.msra.mxu0 0
      %450 = vmatprep.subr.bf16.mxu0 0
      %451 = vmatpush1.bf16.msra.mxu0 0
      %452 = vmatprep.subr.bf16.mxu0 0
      %453 = vmatpush1.bf16.msra.mxu0 0
      %454 = vmatprep.subr.bf16.mxu0 0
      %455 = vmatpush1.bf16.msra.mxu0 0
      %456 = vmatprep.subr.bf16.mxu0 0
      %457 = vmatpush1.bf16.msra.mxu0 0
      %458 = vmatprep.subr.bf16.mxu0 0
      %459 = vmatpush1.bf16.msra.mxu0 0
      %460 = vmatprep.subr.bf16.mxu0 0
      %461 = vmatpush1.bf16.msra.mxu0 0
      %462 = vmatprep.subr.bf16.mxu0 0
      %463 = vmatpush1.bf16.msra.mxu0 0
      %464 = vmatprep.subr.bf16.mxu0 0
      %465 = vmatpush1.bf16.msra.mxu0 0
      %466 = vmatprep.subr.bf16.mxu0 0
      %467 = vmatpush1.bf16.msra.mxu0 0
      %468 = vmatprep.subr.bf16.mxu0 0
      %469 = vmatpush1.bf16.msra.mxu0 0
      %470 = vmatprep.subr.bf16.mxu0 0
      %471 = vmatpush1.bf16.msra.mxu0 0
      %472 = vmatprep.subr.bf16.mxu0 0
      %473 = vmatpush1.bf16.msra.mxu0 0
      %474 = vmatprep.mubr.bf16.mxu0 0
      %475 = vmatmul.mubr.bf16.gmra.mrb[0].mxu0 %v436
      %v476 = vpop.f32.mrb[0].mxu0
      %v477 = vadd.f32 0.0, %v476
      %v478 = vpop.f32.mrb[0].mxu0
      %v479 = vpop.f32.mrb[0].mxu0
      %v480 = vpop.f32.mrb[0].mxu0
      %481 = vdwg.mxu0
      %v482 = vadd.f32 %v433, %v477
      %483 = vst.msk [vmem:[#allocation4] sm:$0xff] %vm356, %v482
      %484 = vst.msk [vmem:[#allocation2] sm:$0xff] %vm425, %v407
      %486 = vrot.lane.b32.xlu0 %v334, 120
      %v487 = vpop.permute.xlu0 %486
      %v489 = vunpack.c.l.b16 %v335
      %v490 = vpack.c.b16 %v489, %v489
      %491 = vrot.lane.b32.xlu0 %v490, 120
      %v492 = vpop.permute.xlu0 %491
      %v494 = vsel %vm356, %v487, 0
      %v497 = vsel %vm356, %v492, 0
      %499 = vmatprep.subr.bf16.mxu0 0
      %500 = vmatpush1.bf16.xpose.msra.mxu0 %v497
      %501 = vmatprep.subr.bf16.mxu0 0
      %502 = vmatpush1.bf16.xpose.msra.mxu0 0
      %503 = vmatprep.subr.bf16.mxu0 0
      %504 = vmatpush1.bf16.xpose.msra.mxu0 0
      %505 = vmatprep.subr.bf16.mxu0 0
      %506 = vmatpush1.bf16.xpose.msra.mxu0 0
      %507 = vmatprep.subr.bf16.mxu0 0
      %508 = vmatpush1.bf16.xpose.msra.mxu0 0
      %509 = vmatprep.subr.bf16.mxu0 0
      %510 = vmatpush1.bf16.xpose.msra.mxu0 0
      %511 = vmatprep.subr.bf16.mxu0 0
      %512 = vmatpush1.bf16.xpose.msra.mxu0 0
      %513 = vmatprep.subr.bf16.mxu0 0
      %514 = vmatpush1.bf16.xpose.msra.mxu0 0
      %515 = vmatprep.subr.bf16.mxu0 0
      %516 = vmatpush1.bf16.xpose.msra.mxu0 0
      %517 = vmatprep.subr.bf16.mxu0 0
      %518 = vmatpush1.bf16.xpose.msra.mxu0 0
      %519 = vmatprep.subr.bf16.mxu0 0
      %520 = vmatpush1.bf16.xpose.msra.mxu0 0
      %521 = vmatprep.subr.bf16.mxu0 0
      %522 = vmatpush1.bf16.xpose.msra.mxu0 0
      %523 = vmatprep.subr.bf16.mxu0 0
      %524 = vmatpush1.bf16.xpose.msra.mxu0 0
      %525 = vmatprep.subr.bf16.mxu0 0
      %526 = vmatpush1.bf16.xpose.msra.mxu0 0
      %527 = vmatprep.subr.bf16.mxu0 0
      %528 = vmatpush1.bf16.xpose.msra.mxu0 0
      %529 = vmatprep.subr.bf16.mxu0 0
      %530 = vmatpush1.bf16.xpose.msra.mxu0 0
      %531 = vmatprep.mubr.bf16.mxu0 0
      %532 = vmatmul.mubr.bf16.gmra.mrb[0].mxu0 %v494
      %v533 = vpop.f32.mrb[0].mxu0
      %v534 = vadd.f32 %v355, %v533
      %v535 = vpop.f32.mrb[0].mxu0
      %v536 = vpop.f32.mrb[0].mxu0
      %v537 = vpop.f32.mrb[0].mxu0
      %538 = vdwg.mxu0
      %s539 = scalar_lea.vmem [#allocation2], 8
      %v540 = vld [vmem:[%s539] sm:$0xff]
      %v541 = vsel %vm356, %v534, -inf
      %542 = vmax.xlane.f32.xlu0 %v541
      %v543 = vpop.xlane.xlu0 %542
      %v544 = vmax.f32 %v540, %v543
      %v545 = vsub.f32 %v540, %v544
      %v546 = vmul.f32 %v545, 1.442695
      %v547 = vpow.pop %v546
      %549 = vset.pattern.permute.xlu0 0
      %550 = vperm.xlu0 %549, %v544
      %v551 = vpop.permute.xlu0 %550
      %v553 = vsub.f32 %v534, %v551
      %v554 = vmul.f32 %v553, 1.442695
      %v555 = vpow.pop %v554
      %s556 = scalar_lea.vmem [#allocation3], 8
      %v557 = vld [vmem:[%s556] sm:$0xff]
      %v558 = vmul.f32 %v547, %v557
      %v559 = vsel %vm356, %v555, 0.0
      %560 = vadd.xlane.f32.xlu0 %v559
      %v561 = vpop.xlane.xlu0 %560
      %v562 = vadd.f32 %v558, %v561
      %563 = vst.msk [vmem:[%s556] sm:$0xff] %vm425, %v562
      %s564 = scalar_lea.vmem [#allocation4], 8
      %v565 = vld [vmem:[%s564] sm:$0xff]
      %567 = vset.pattern.permute.xlu0 0
      %568 = vperm.xlu0 %567, %v547
      %v569 = vpop.permute.xlu0 %568
      %v571 = vmul.f32 %v569, %v565
      %v572 = vpack.c.bf16 %v555, %v555
      %v574 = vunpack.c.l.b16 %v336
      %v575 = vpack.c.b16 %v574, %v574
      %576 = vrot.lane.b32.xlu0 %v575, 120
      %v577 = vpop.permute.xlu0 %576
      %v579 = vsel %vm356, %v572, 0
      %v582 = vsel %vm438, %v577, 0
      %584 = vmatprep.subr.bf16.mxu0 0
      %585 = vmatpush1.bf16.msra.mxu0 %v582
      %586 = vmatprep.subr.bf16.mxu0 0
      %587 = vmatpush1.bf16.msra.mxu0 0
      %588 = vmatprep.subr.bf16.mxu0 0
      %589 = vmatpush1.bf16.msra.mxu0 0
      %590 = vmatprep.subr.bf16.mxu0 0
      %591 = vmatpush1.bf16.msra.mxu0 0
      %592 = vmatprep.subr.bf16.mxu0 0
      %593 = vmatpush1.bf16.msra.mxu0 0
      %594 = vmatprep.subr.bf16.mxu0 0
      %595 = vmatpush1.bf16.msra.mxu0 0
      %596 = vmatprep.subr.bf16.mxu0 0
      %597 = vmatpush1.bf16.msra.mxu0 0
      %598 = vmatprep.subr.bf16.mxu0 0
      %599 = vmatpush1.bf16.msra.mxu0 0
      %600 = vmatprep.subr.bf16.mxu0 0
      %601 = vmatpush1.bf16.msra.mxu0 0
      %602 = vmatprep.subr.bf16.mxu0 0
      %603 = vmatpush1.bf16.msra.mxu0 0
      %604 = vmatprep.subr.bf16.mxu0 0
      %605 = vmatpush1.bf16.msra.mxu0 0
      %606 = vmatprep.subr.bf16.mxu0 0
      %607 = vmatpush1.bf16.msra.mxu0 0
      %608 = vmatprep.subr.bf16.mxu0 0
      %609 = vmatpush1.bf16.msra.mxu0 0
      %610 = vmatprep.subr.bf16.mxu0 0
      %611 = vmatpush1.bf16.msra.mxu0 0
      %612 = vmatprep.subr.bf16.mxu0 0
      %613 = vmatpush1.bf16.msra.mxu0 0
      %614 = vmatprep.subr.bf16.mxu0 0
      %615 = vmatpush1.bf16.msra.mxu0 0
      %616 = vmatprep.mubr.bf16.mxu0 0
      %617 = vmatmul.mubr.bf16.gmra.mrb[0].mxu0 %v579
      %v618 = vpop.f32.mrb[0].mxu0
      %v619 = vadd.f32 0.0, %v618
      %v620 = vpop.f32.mrb[0].mxu0
      %v621 = vpop.f32.mrb[0].mxu0
      %v622 = vpop.f32.mrb[0].mxu0
      %623 = vdwg.mxu0
      %v624 = vadd.f32 %v571, %v619
      %625 = vst.msk [vmem:[%s564] sm:$0xff] %vm356, %v624
      %626 = vst.msk [vmem:[%s539] sm:$0xff] %vm425, %v544
      %627 = vrot.lane.b32.xlu0 %v334, 112
      %v628 = vpop.permute.xlu0 %627
      %629 = vrot.lane.b32.xlu0 %v490, 112
      %v630 = vpop.permute.xlu0 %629
      %v632 = vsel %vm356, %v628, 0
      %v635 = vsel %vm356, %v630, 0
      %637 = vmatprep.subr.bf16.mxu0 0
      %638 = vmatpush1.bf16.xpose.msra.mxu0 %v635
      %639 = vmatprep.subr.bf16.mxu0 0
      %640 = vmatpush1.bf16.xpose.msra.mxu0 0
      %641 = vmatprep.subr.bf16.mxu0 0
      %642 = vmatpush1.bf16.xpose.msra.mxu0 0
      %643 = vmatprep.subr.bf16.mxu0 0
      %644 = vmatpush1.bf16.xpose.msra.mxu0 0
      %645 = vmatprep.subr.bf16.mxu0 0
      %646 = vmatpush1.bf16.xpose.msra.mxu0 0
      %647 = vmatprep.subr.bf16.mxu0 0
      %648 = vmatpush1.bf16.xpose.msra.mxu0 0
      %649 = vmatprep.subr.bf16.mxu0 0
      %650 = vmatpush1.bf16.xpose.msra.mxu0 0
      %651 = vmatprep.subr.bf16.mxu0 0
      %652 = vmatpush1.bf16.xpose.msra.mxu0 0
      %653 = vmatprep.subr.bf16.mxu0 0
      %654 = vmatpush1.bf16.xpose.msra.mxu0 0
      %655 = vmatprep.subr.bf16.mxu0 0
      %656 = vmatpush1.bf16.xpose.msra.mxu0 0
      %657 = vmatprep.subr.bf16.mxu0 0
      %658 = vmatpush1.bf16.xpose.msra.mxu0 0
      %659 = vmatprep.subr.bf16.mxu0 0
      %660 = vmatpush1.bf16.xpose.msra.mxu0 0
      %661 = vmatprep.subr.bf16.mxu0 0
      %662 = vmatpush1.bf16.xpose.msra.mxu0 0
      %663 = vmatprep.subr.bf16.mxu0 0
      %664 = vmatpush1.bf16.xpose.msra.mxu0 0
      %665 = vmatprep.subr.bf16.mxu0 0
      %666 = vmatpush1.bf16.xpose.msra.mxu0 0
      %667 = vmatprep.subr.bf16.mxu0 0
      %668 = vmatpush1.bf16.xpose.msra.mxu0 0
      %669 = vmatprep.mubr.bf16.mxu0 0
      %670 = vmatmul.mubr.bf16.gmra.mrb[0].mxu0 %v632
      %v671 = vpop.f32.mrb[0].mxu0
      %v672 = vadd.f32 %v355, %v671
      %v673 = vpop.f32.mrb[0].mxu0
      %v674 = vpop.f32.mrb[0].mxu0
      %v675 = vpop.f32.mrb[0].mxu0
      %676 = vdwg.mxu0
      %s677 = scalar_lea.vmem [#allocation2], 16
      %v678 = vld [vmem:[%s677] sm:$0xff]
      %v679 = vsel %vm356, %v672, -inf
      %680 = vmax.xlane.f32.xlu0 %v679
      %v681 = vpop.xlane.xlu0 %680
      %v682 = vmax.f32 %v678, %v681
      %v683 = vsub.f32 %v678, %v682
      %v684 = vmul.f32 %v683, 1.442695
      %v685 = vpow.pop %v684
      %687 = vset.pattern.permute.xlu0 0
      %688 = vperm.xlu0 %687, %v682
      %v689 = vpop.permute.xlu0 %688
      %v691 = vsub.f32 %v672, %v689
      %v692 = vmul.f32 %v691, 1.442695
      %v693 = vpow.pop %v692
      %s694 = scalar_lea.vmem [#allocation3], 16
      %v695 = vld [vmem:[%s694] sm:$0xff]
      %v696 = vmul.f32 %v685, %v695
      %v697 = vsel %vm356, %v693, 0.0
      %698 = vadd.xlane.f32.xlu0 %v697
      %v699 = vpop.xlane.xlu0 %698
      %v700 = vadd.f32 %v696, %v699
      %701 = vst.msk [vmem:[%s694] sm:$0xff] %vm425, %v700
      %s702 = scalar_lea.vmem [#allocation4], 16
      %v703 = vld [vmem:[%s702] sm:$0xff]
      %705 = vset.pattern.permute.xlu0 0
      %706 = vperm.xlu0 %705, %v685
      %v707 = vpop.permute.xlu0 %706
      %v709 = vmul.f32 %v707, %v703
      %v710 = vpack.c.bf16 %v693, %v693
      %711 = vrot.lane.b32.xlu0 %v575, 112
      %v712 = vpop.permute.xlu0 %711
      %v714 = vsel %vm356, %v710, 0
      %v717 = vsel %vm438, %v712, 0
      %719 = vmatprep.subr.bf16.mxu0 0
      %720 = vmatpush1.bf16.msra.mxu0 %v717
      %721 = vmatprep.subr.bf16.mxu0 0
      %722 = vmatpush1.bf16.msra.mxu0 0
      %723 = vmatprep.subr.bf16.mxu0 0
      %724 = vmatpush1.bf16.msra.mxu0 0
      %725 = vmatprep.subr.bf16.mxu0 0
      %726 = vmatpush1.bf16.msra.mxu0 0
      %727 = vmatprep.subr.bf16.mxu0 0
      %728 = vmatpush1.bf16.msra.mxu0 0
      %729 = vmatprep.subr.bf16.mxu0 0
      %730 = vmatpush1.bf16.msra.mxu0 0
      %731 = vmatprep.subr.bf16.mxu0 0
      %732 = vmatpush1.bf16.msra.mxu0 0
      %733 = vmatprep.subr.bf16.mxu0 0
      %734 = vmatpush1.bf16.msra.mxu0 0
      %735 = vmatprep.subr.bf16.mxu0 0
      %736 = vmatpush1.bf16.msra.mxu0 0
      %737 = vmatprep.subr.bf16.mxu0 0
      %738 = vmatpush1.bf16.msra.mxu0 0
      %739 = vmatprep.subr.bf16.mxu0 0
      %740 = vmatpush1.bf16.msra.mxu0 0
      %741 = vmatprep.subr.bf16.mxu0 0
      %742 = vmatpush1.bf16.msra.mxu0 0
      %743 = vmatprep.subr.bf16.mxu0 0
      %744 = vmatpush1.bf16.msra.mxu0 0
      %745 = vmatprep.subr.bf16.mxu0 0
      %746 = vmatpush1.bf16.msra.mxu0 0
      %747 = vmatprep.subr.bf16.mxu0 0
      %748 = vmatpush1.bf16.msra.mxu0 0
      %749 = vmatprep.subr.bf16.mxu0 0
      %750 = vmatpush1.bf16.msra.mxu0 0
      %751 = vmatprep.mubr.bf16.mxu0 0
      %752 = vmatmul.mubr.bf16.gmra.mrb[0].mxu0 %v714
      %v753 = vpop.f32.mrb[0].mxu0
      %v754 = vadd.f32 0.0, %v753
      %v755 = vpop.f32.mrb[0].mxu0
      %v756 = vpop.f32.mrb[0].mxu0
      %v757 = vpop.f32.mrb[0].mxu0
      %758 = vdwg.mxu0
      %v759 = vadd.f32 %v709, %v754
      %760 = vst.msk [vmem:[%s702] sm:$0xff] %vm356, %v759
      %761 = vst.msk [vmem:[%s677] sm:$0xff] %vm425, %v682
      %762 = vrot.lane.b32.xlu0 %v334, 104
      %v763 = vpop.permute.xlu0 %762
      %764 = vrot.lane.b32.xlu0 %v490, 104
      %v765 = vpop.permute.xlu0 %764
      %v767 = vsel %vm356, %v763, 0
      %v770 = vsel %vm356, %v765, 0
      %772 = vmatprep.subr.bf16.mxu0 0
      %773 = vmatpush1.bf16.xpose.msra.mxu0 %v770
      %774 = vmatprep.subr.bf16.mxu0 0
      %775 = vmatpush1.bf16.xpose.msra.mxu0 0
      %776 = vmatprep.subr.bf16.mxu0 0
      %777 = vmatpush1.bf16.xpose.msra.mxu0 0
      %778 = vmatprep.subr.bf16.mxu0 0
      %779 = vmatpush1.bf16.xpose.msra.mxu0 0
      %780 = vmatprep.subr.bf16.mxu0 0
      %781 = vmatpush1.bf16.xpose.msra.mxu0 0
      %782 = vmatprep.subr.bf16.mxu0 0
      %783 = vmatpush1.bf16.xpose.msra.mxu0 0
      %784 = vmatprep.subr.bf16.mxu0 0
      %785 = vmatpush1.bf16.xpose.msra.mxu0 0
      %786 = vmatprep.subr.bf16.mxu0 0
      %787 = vmatpush1.bf16.xpose.msra.mxu0 0
      %788 = vmatprep.subr.bf16.mxu0 0
      %789 = vmatpush1.bf16.xpose.msra.mxu0 0
      %790 = vmatprep.subr.bf16.mxu0 0
      %791 = vmatpush1.bf16.xpose.msra.mxu0 0
      %792 = vmatprep.subr.bf16.mxu0 0
      %793 = vmatpush1.bf16.xpose.msra.mxu0 0
      %794 = vmatprep.subr.bf16.mxu0 0
      %795 = vmatpush1.bf16.xpose.msra.mxu0 0
      %796 = vmatprep.subr.bf16.mxu0 0
      %797 = vmatpush1.bf16.xpose.msra.mxu0 0
      %798 = vmatprep.subr.bf16.mxu0 0
      %799 = vmatpush1.bf16.xpose.msra.mxu0 0
      %800 = vmatprep.subr.bf16.mxu0 0
      %801 = vmatpush1.bf16.xpose.msra.mxu0 0
      %802 = vmatprep.subr.bf16.mxu0 0
      %803 = vmatpush1.bf16.xpose.msra.mxu0 0
      %804 = vmatprep.mubr.bf16.mxu0 0
      %805 = vmatmul.mubr.bf16.gmra.mrb[0].mxu0 %v767
      %v806 = vpop.f32.mrb[0].mxu0
      %v807 = vadd.f32 %v355, %v806
      %v808 = vpop.f32.mrb[0].mxu0
      %v809 = vpop.f32.mrb[0].mxu0
      %v810 = vpop.f32.mrb[0].mxu0
      %811 = vdwg.mxu0
      %s812 = scalar_lea.vmem [#allocation2], 24
      %v813 = vld [vmem:[%s812] sm:$0xff]
      %v814 = vsel %vm356, %v807, -inf
      %815 = vmax.xlane.f32.xlu0 %v814
      %v816 = vpop.xlane.xlu0 %815
      %v817 = vmax.f32 %v813, %v816
      %v818 = vsub.f32 %v813, %v817
      %v819 = vmul.f32 %v818, 1.442695
      %v820 = vpow.pop %v819
      %822 = vset.pattern.permute.xlu0 0
      %823 = vperm.xlu0 %822, %v817
      %v824 = vpop.permute.xlu0 %823
      %v826 = vsub.f32 %v807, %v824
      %v827 = vmul.f32 %v826, 1.442695
      %v828 = vpow.pop %v827
      %s829 = scalar_lea.vmem [#allocation3], 24
      %v830 = vld [vmem:[%s829] sm:$0xff]
      %v831 = vmul.f32 %v820, %v830
      %v832 = vsel %vm356, %v828, 0.0
      %833 = vadd.xlane.f32.xlu0 %v832
      %v834 = vpop.xlane.xlu0 %833
      %v835 = vadd.f32 %v831, %v834
      %836 = vst.msk [vmem:[%s829] sm:$0xff] %vm425, %v835
      %s837 = scalar_lea.vmem [#allocation4], 24
      %v838 = vld [vmem:[%s837] sm:$0xff]
      %840 = vset.pattern.permute.xlu0 0
      %841 = vperm.xlu0 %840, %v820
      %v842 = vpop.permute.xlu0 %841
      %v844 = vmul.f32 %v842, %v838
      %v845 = vpack.c.bf16 %v828, %v828
      %846 = vrot.lane.b32.xlu0 %v575, 104
      %v847 = vpop.permute.xlu0 %846
      %v849 = vsel %vm356, %v845, 0
      %v852 = vsel %vm438, %v847, 0
      %854 = vmatprep.subr.bf16.mxu0 0
      %855 = vmatpush1.bf16.msra.mxu0 %v852
      %856 = vmatprep.subr.bf16.mxu0 0
      %857 = vmatpush1.bf16.msra.mxu0 0
      %858 = vmatprep.subr.bf16.mxu0 0
      %859 = vmatpush1.bf16.msra.mxu0 0
      %860 = vmatprep.subr.bf16.mxu0 0
      %861 = vmatpush1.bf16.msra.mxu0 0
      %862 = vmatprep.subr.bf16.mxu0 0
      %863 = vmatpush1.bf16.msra.mxu0 0
      %864 = vmatprep.subr.bf16.mxu0 0
      %865 = vmatpush1.bf16.msra.mxu0 0
      %866 = vmatprep.subr.bf16.mxu0 0
      %867 = vmatpush1.bf16.msra.mxu0 0
      %868 = vmatprep.subr.bf16.mxu0 0
      %869 = vmatpush1.bf16.msra.mxu0 0
      %870 = vmatprep.subr.bf16.mxu0 0
      %871 = vmatpush1.bf16.msra.mxu0 0
      %872 = vmatprep.subr.bf16.mxu0 0
      %873 = vmatpush1.bf16.msra.mxu0 0
      %874 = vmatprep.subr.bf16.mxu0 0
      %875 = vmatpush1.bf16.msra.mxu0 0
      %876 = vmatprep.subr.bf16.mxu0 0
      %877 = vmatpush1.bf16.msra.mxu0 0
      %878 = vmatprep.subr.bf16.mxu0 0
      %879 = vmatpush1.bf16.msra.mxu0 0
      %880 = vmatprep.subr.bf16.mxu0 0
      %881 = vmatpush1.bf16.msra.mxu0 0
      %882 = vmatprep.subr.bf16.mxu0 0
      %883 = vmatpush1.bf16.msra.mxu0 0
      %884 = vmatprep.subr.bf16.mxu0 0
      %885 = vmatpush1.bf16.msra.mxu0 0
      %886 = vmatprep.mubr.bf16.mxu0 0
      %887 = vmatmul.mubr.bf16.gmra.mrb[0].mxu0 %v849
      %v888 = vpop.f32.mrb[0].mxu0
      %v889 = vadd.f32 0.0, %v888
      %v890 = vpop.f32.mrb[0].mxu0
      %v891 = vpop.f32.mrb[0].mxu0
      %v892 = vpop.f32.mrb[0].mxu0
      %893 = vdwg.mxu0
      %v894 = vadd.f32 %v844, %v889
      %895 = vst.msk [vmem:[%s837] sm:$0xff] %vm356, %v894
      %896 = vst.msk [vmem:[%s812] sm:$0xff] %vm425, %v817
      // Predicated region
      $region41: #{transformer_forward.37} parent=35 // pred_check
        %p897 = pneg %p313
      $region42: #{transformer_forward.37} parent=35 // pred_check_branch
        %899 = sbr.rel (%p897) target = $region44
      $region43: #{transformer_forward.37} parent=35 // pred_region
        %v900 = vld [vmem:[#allocation3] sm:$0xff]
        %v901 = vrcp.pop %v900
        %v902 = vld [vmem:[#allocation4] sm:$0xff]
        %904 = vset.pattern.permute.xlu0 0
        %905 = vperm.xlu0 %904, %v901
        %v906 = vpop.permute.xlu0 %905
        %v908 = vmul.f32 %v902, %v906
        %v909 = vpack.c.bf16 %v908, %v908
        %vm910 = vcmask 60416
        %911 = vst.msk [vmem:[%s311] sm:$0xf] %vm910, %v909
        %v912 = vld [vmem:[%s556] sm:$0xff]
        %v913 = vrcp.pop %v912
        %v914 = vld [vmem:[%s564] sm:$0xff]
        %916 = vset.pattern.permute.xlu0 0
        %917 = vperm.xlu0 %916, %v913
        %v918 = vpop.permute.xlu0 %917
        %v920 = vmul.f32 %v914, %v918
        %v921 = vpack.c.bf16 %v920, %v920
        %v923 = vunpack.c.l.b16 %v921
        %v924 = vpack.c.b16 %v923, %v923
        %925 = vrot.lane.b32.xlu0 %v924, 8
        %v926 = vpop.permute.xlu0 %925
        %vm928 = vcmask 126016
        %929 = vst.msk [vmem:[%s311] sm:$0xf] %vm928, %v926
        %v930 = vld [vmem:[%s694] sm:$0xff]
        %v931 = vrcp.pop %v930
        %v932 = vld [vmem:[%s702] sm:$0xff]
        %934 = vset.pattern.permute.xlu0 0
        %935 = vperm.xlu0 %934, %v931
        %v936 = vpop.permute.xlu0 %935
        %v938 = vmul.f32 %v932, %v936
        %v939 = vpack.c.bf16 %v938, %v938
        %v941 = vunpack.c.l.b16 %v939
        %v942 = vpack.c.b16 %v941, %v941
        %943 = vrot.lane.b32.xlu0 %v942, 16
        %v944 = vpop.permute.xlu0 %943
        %vm946 = vcmask 191616
        %947 = vst.msk [vmem:[%s311] sm:$0xf] %vm946, %v944
        %v948 = vld [vmem:[%s829] sm:$0xff]
        %v949 = vrcp.pop %v948
        %v950 = vld [vmem:[%s837] sm:$0xff]
        %952 = vset.pattern.permute.xlu0 0
        %953 = vperm.xlu0 %952, %v949
        %v954 = vpop.permute.xlu0 %953
        %v956 = vmul.f32 %v950, %v954
        %v957 = vpack.c.bf16 %v956, %v956
        %v959 = vunpack.c.l.b16 %v957
        %v960 = vpack.c.b16 %v959, %v959
        %961 = vrot.lane.b32.xlu0 %v960, 24
        %v962 = vpop.permute.xlu0 %961
        %vm964 = vcmask 257216
        %965 = vst.msk [vmem:[%s311] sm:$0xf] %vm964, %v962
      $region44: #{transformer_forward.37} parent=35 // pred_fallthru
        _
      %p966 = scmp.lt.s32.totalorder %s20, 1
      %s967 = scalar_select %p966, %s20, 1
      %p968 = scmp.lt.s32.totalorder %s21, 0
      %s969 = scalar_select %p968, %s21, 0
      %s970 = sadd.s32 %s969, %s967
      %s971 = smul.addr %s970, 4
      %s972 = scalar_lea.vmem %s4, %s971
      // Predicated region
      $region45: #{transformer_forward.37} parent=35 // pred_check
        %p973 = pneg %p166
      $region46: #{transformer_forward.37} parent=35 // pred_check_branch
        %975 = sbr.rel (%p973) target = $region48
      $region47: #{transformer_forward.37} parent=35 // pred_region
        _
      $region48: #{transformer_forward.37} parent=35 // pred_fallthru
        _
    $region36: #{transformer_forward.37} parent=5 // pred_fallthru
      _
    %p976 = scmp.le.s32.totalorder 2, %s10
    // Predicated region
    $region49: #{transformer_forward.37} parent=5 // pred_check
      %p977 = pneg %p976
    $region50: #{transformer_forward.37} parent=5 // pred_check_branch
      %979 = sbr.rel (%p977) target = $region52
    $region51: #{transformer_forward.37} parent=5 // pred_region
      %s980 = ssub.s32 %s10, 2
      // Predicated region
      $region53: #{transformer_forward.37} parent=51 // pred_check
        %p981 = pneg %p172
      $region54: #{transformer_forward.37} parent=51 // pred_check_branch
        %983 = sbr.rel (%p981) target = $region56
      $region55: #{transformer_forward.37} parent=51 // pred_region
        %p984 = scmp.lt.s32.totalorder %s23, 1
        %s985 = scalar_select %p984, %s23, 1
        %p986 = scmp.lt.s32.totalorder %s24, 0
        %s987 = scalar_select %p986, %s24, 0
        %s988 = sadd.s32 %s987, %s985
        %s989 = smul.addr %s988, 4
        %s990 = scalar_lea.vmem %s4, %s989
      $region56: #{transformer_forward.37} parent=51 // pred_fallthru
        _
    $region52: #{transformer_forward.37} parent=5 // pred_fallthru
      _
  $region6: #{transformer_forward.37} parent=0 // loop_footer
    %s14 = sadd.s32 1, %s10
  $region7: #{transformer_forward.37} parent=0 // loop_footer_branch
    %9 = sbr.rel target = $region3
  $region8: #{transformer_forward.37} parent=0 // loop_exit
    _

</llo_original>
